<compile_context>
chip_gen: v7x
topology: tpu7x:2x2x1
jax: 0.10.0
libtpu: 0.0.40
codegen_flags: <defaults>
</compile_context>

<pallas_src>
import functools

import jax
import jax.numpy as jnp
from jax import lax
from jax.experimental import pallas as pl
from jax.experimental.pallas import tpu as pltpu

_BIG = 3.0e38            # padded-column sentinel distance (set in the wrapper)
_MIB = 1024 * 1024


def _pbe_kernel(sqy_ref, y_ref, o_ref, *, k: int, log_mean: bool,
                idx_bits: int):
    """sqy_ref: [1, N] reference norms (padded tail = _BIG);
    y_ref: [N, D] all reference points (resident, single-buffered);
    o_ref: [TM, 1] per-row reward."""
    tm = o_ref.shape[0]
    n = y_ref.shape[0]

    row_start = pl.multiple_of(pl.program_id(0) * tm, tm)
    x = y_ref[pl.ds(row_start, tm), :]          # [TM, D] query tile (free slice)
    y = y_ref[...]                              # [N, D]

    # --- pairwise squared distances on the MXU -----------------------------
    # d2[i, j] = ||x_i||^2 + ||y_j||^2 - 2 <x_i, y_j>
    sqx = jnp.sum(x * x, axis=-1, keepdims=True)                       # [TM, 1]
    g = lax.dot_general(x, y, (((1,), (1,)), ((), ())),
                        preferred_element_type=jnp.float32)            # [TM, N]
    # clamp to [0, _BIG]: kills negatives from f32 cancellation and keeps the
    # packed keys finite (no NaN bit patterns) even for padded columns.
    d2 = jnp.clip(sqx + sqy_ref[...] - 2.0 * g, 0.0, _BIG)             # [TM, N]

    # --- pack the column index into the low mantissa bits -------------------
    # For non-negative f32, value order == bit-pattern order, so one f32
    # lane-min over the packed keys yields the (truncated) distance AND the
    # first-occurrence column index; keys are unique per row, so the knockout
    # is a single equality select.  Truncation <= 2^(idx_bits-23) relative.
    hi_mask = jnp.int32(-(1 << idx_bits))                 # == ~((1<<bits)-1)
    col = lax.broadcasted_iota(jnp.int32, (1, n), 1)                   # [1, N]
    rowi = lax.broadcasted_iota(jnp.int32, (tm, 1), 0) + row_start     # [TM, 1]
    key = pltpu.bitcast((pltpu.bitcast(d2, jnp.int32) & hi_mask) | col,
                        jnp.float32)                                   # [TM, N]
    sentinel = jnp.float32(jnp.finfo(jnp.float32).max)
    key = jnp.where(col == rowi, sentinel, key)           # mask self distance

    # --- iterative k-min extraction (one reduction + one select per iter) ---
    def body(_, carry):
        kk, acc = carry
        mk = jnp.min(kk, axis=-1, keepdims=True)                       # [TM, 1]
        kk = jnp.where(kk == mk, sentinel, kk)            # knock out the winner
        val = pltpu.bitcast(pltpu.bitcast(mk, jnp.int32) & hi_mask,
                            jnp.float32)                  # strip index bits
        return kk, acc + jnp.sqrt(val)

    _, acc = lax.fori_loop(0, k, body,
                           (key, jnp.zeros((tm, 1), jnp.float32)),
                           unroll=True)
    r_mean = acc * jnp.float32(1.0 / k)
    o_ref[...] = jnp.log(1.0 + r_mean) if log_mean else r_mean


def _default_vmem_limit():
    # Raise the scoped-VMEM cap above the 16/32 MiB defaults while keeping
    # headroom below physical capacity (128 MiB v5e/v6e, 64 MiB/TC v7x).
    try:
        cap = pltpu.get_tpu_info().vmem_capacity_bytes
        return int(min(100 * _MIB, (cap * 3) // 4))
    except Exception:
        return 64 * _MIB


def pbe_forward(obs, act=None, *, k=10, sa_ent=False, style='log_mean',
                block_m=128):
    """JAX/Pallas equivalent of PBE.forward({'obs': obs, 'act': act}).

    block_m: rows per grid step.  128 is a good default everywhere; on v6e
    (128 MiB VMEM) use 256 for large N/block_m, keep 128 on v7x (64 MiB/TC).
    """
    if style not in ('log_mean', 'mean'):
        raise Exception(f'estimation style {style} is not supported')

    x = obs
    if x.ndim == 1:
        x = x[:, None]
    if sa_ent:
        x = jnp.concatenate([x, act], axis=-1)
    x = x.astype(jnp.float32)
    # Distances are translation-invariant; centering shrinks ||x||^2 and hence
    # the f32 cancellation of the norm-expansion form.
    x = x - jnp.mean(x, axis=0, keepdims=True)
    n, d = x.shape
    assert n >= k + 1, "need at least k+1 particles"

    # tile sizing: multiple of 8 sublanes, no bigger than the (padded) N.
    block_m = max(8, ((min(block_m, n) + 7) // 8) * 8)
    n_pad = pl.cdiv(n, block_m) * block_m

    # Hoisted reference-point norms; padded tail = _BIG so padded columns get
    # a huge d2 with no in-kernel (col >= n_valid) masking.
    sq = jnp.sum(x * x, axis=-1)
    sq_col = jnp.pad(sq, (0, n_pad - n), constant_values=_BIG)[None, :]
    if n_pad != n:
        x = jnp.pad(x, ((0, n_pad - n), (0, 0)))

    # Bits needed to embed a column index in the d2 mantissa.
    idx_bits = max(1, (n_pad - 1).bit_length())

    kern = functools.partial(_pbe_kernel, k=k,
                             log_mean=(style == 'log_mean'), idx_bits=idx_bits)
    out = pl.pallas_call(
        kern,
        out_shape=jax.ShapeDtypeStruct((n_pad, 1), jnp.float32),
        grid_spec=pltpu.PrefetchScalarGridSpec(
            num_scalar_prefetch=0,
            grid=(n_pad // block_m,),
            in_specs=[
                # all reference norms (resident, constant index -> 1 buffer)
                pl.BlockSpec((1, n_pad), lambda i: (0, 0),
                             pipeline_mode=pl.Buffered(1)),
                # all reference points (resident; query tile sliced in-kernel)
                pl.BlockSpec((n_pad, d), lambda i: (0, 0),
                             pipeline_mode=pl.Buffered(1)),
            ],
            out_specs=pl.BlockSpec((block_m, 1), lambda i: (i, 0)),
        ),
        compiler_params=pltpu.CompilerParams(
            dimension_semantics=("parallel",),
            vmem_limit_bytes=_default_vmem_limit()),
    )(sq_col, x)
    return out[:n, 0]


def pbe_reference(obs, *, k=10, style='log_mean'):
    x = obs.astype(jnp.float32)
    d2 = jnp.sum((x[:, None, :] - x[None, :, :]) ** 2, axis=-1)
    r = jnp.sqrt(jnp.sort(d2, axis=1)[:, 1:k + 1])
    m = r.mean(-1)
    return jnp.log(1.0 + m) if style == 'log_mean' else m


if __name__ == "__main__":
    key = jax.random.PRNGKey(0)
    N, D, K = 256, 32, 10
    obs = jax.random.normal(key, (N, D), dtype=jnp.float32)

    rew = pbe_forward(obs, k=K, sa_ent=False, style='log_mean', block_m=128)
    rew = jax.block_until_ready(rew)

    ref = pbe_reference(obs, k=K, style='log_mean')
    assert rew.shape == (N,)
    assert jnp.allclose(rew, ref, rtol=1e-3, atol=1e-3), (
        f"max abs err {jnp.max(jnp.abs(rew - ref))}")

    print("KERNEL_OK")
</pallas_src>

<mosaic_0001>
module attributes {stable_mosaic.version = 11 : i64} {
  func.func @_pbe_kernel(%arg0: i32, %arg1: memref<1x256xf32, #tpu.memory_space<vmem>>, %arg2: memref<256x32xf32, #tpu.memory_space<vmem>>, %arg3: memref<128x1xf32, #tpu.memory_space<vmem>>) attributes {dimension_semantics = [#tpu.dimension_semantics<parallel>], iteration_bounds = array<i64: 2>, scalar_prefetch = 0 : i64, scratch_operands = 0 : i64, tpu.core_type = #tpu.core_type<tc>, window_params = [{pipeline_mode = #tpu.pipeline_mode<synchronous>, transform_indices = @transform_0, window_bounds = array<i64: 1, 256>}, {pipeline_mode = #tpu.pipeline_mode<synchronous>, transform_indices = @transform_1, window_bounds = array<i64: 256, 32>}, {transform_indices = @transform_2, window_bounds = array<i64: 128, 1>}]} {
    %c128_i32 = arith.constant 128 : i32
    %0 = arith.muli %arg0, %c128_i32 : i32
    %1 = tpu.assume_multiple %0, 128 : i32
    %2 = arith.index_cast %1 : i32 to index
    %c0 = arith.constant 0 : index
    %3 = vector.load %arg2[%2, %c0] : memref<256x32xf32, #tpu.memory_space<vmem>>, vector<128x32xf32>
    %c0_0 = arith.constant 0 : index
    %c0_1 = arith.constant 0 : index
    %4 = vector.load %arg2[%c0_0, %c0_1] : memref<256x32xf32, #tpu.memory_space<vmem>>, vector<256x32xf32>
    %5 = arith.mulf %3, %3 : vector<128x32xf32>
    %cst = arith.constant dense<0.000000e+00> : vector<128xf32>
    %6 = vector.multi_reduction <add>, %5, %cst [1] : vector<128x32xf32> to vector<128xf32>
    %7 = vector.shape_cast %6 : vector<128xf32> to vector<128x1xf32>
    %cst_2 = arith.constant dense<0.000000e+00> : vector<128x256xf32>
    %8 = tpu.matmul %3, %4, %cst_2 {dimension_numbers = #tpu.dot_dimension_numbers<[1], [1], [0], [0], [0, 0, 1, 0], [], []>} : vector<128x32xf32>, vector<256x32xf32>, vector<128x256xf32> -> vector<128x256xf32>
    %c0_3 = arith.constant 0 : index
    %c0_4 = arith.constant 0 : index
    %9 = vector.load %arg1[%c0_3, %c0_4] : memref<1x256xf32, #tpu.memory_space<vmem>>, vector<1x256xf32>
    %10 = vector.broadcast %7 : vector<128x1xf32> to vector<128x256xf32>
    %11 = vector.broadcast %9 : vector<1x256xf32> to vector<128x256xf32>
    %12 = arith.addf %10, %11 : vector<128x256xf32>
    %cst_5 = arith.constant 2.000000e+00 : f32
    %13 = vector.broadcast %cst_5 : f32 to vector<128x256xf32>
    %14 = arith.mulf %13, %8 : vector<128x256xf32>
    %15 = arith.subf %12, %14 : vector<128x256xf32>
    %cst_6 = arith.constant 0.000000e+00 : f32
    %cst_7 = arith.constant 3.000000e+38 : f32
    %16 = vector.broadcast %cst_6 : f32 to vector<128x256xf32>
    %17 = arith.maximumf %16, %15 : vector<128x256xf32>
    %18 = vector.broadcast %cst_7 : f32 to vector<128x256xf32>
    %19 = arith.minimumf %18, %17 : vector<128x256xf32>
    %20 = tpu.iota {dimensions = array<i32: 1>} : vector<1x256xi32>
    %21 = tpu.iota {dimensions = array<i32: 0>} : vector<128x1xi32>
    %22 = vector.broadcast %1 : i32 to vector<128x1xi32>
    %23 = arith.addi %21, %22 : vector<128x1xi32>
    %24 = tpu.bitcast %19 : vector<128x256xf32> -> vector<128x256xi32>
    %c-256_i32 = arith.constant -256 : i32
    %25 = vector.broadcast %c-256_i32 : i32 to vector<128x256xi32>
    %26 = arith.andi %24, %25 : vector<128x256xi32>
    %27 = vector.broadcast %20 : vector<1x256xi32> to vector<128x256xi32>
    %28 = arith.ori %26, %27 : vector<128x256xi32>
    %29 = tpu.bitcast %28 : vector<128x256xi32> -> vector<128x256xf32>
    %30 = vector.broadcast %20 : vector<1x256xi32> to vector<128x256xi32>
    %31 = vector.broadcast %23 : vector<128x1xi32> to vector<128x256xi32>
    %32 = arith.cmpi eq, %30, %31 : vector<128x256xi32>
    %cst_8 = arith.constant 3.40282347E+38 : f32
    %33 = vector.broadcast %cst_8 : f32 to vector<128x256xf32>
    %34 = arith.select %32, %33, %29 : vector<128x256xi1>, vector<128x256xf32>
    %cst_9 = arith.constant 0.000000e+00 : f32
    %35 = vector.broadcast %cst_9 : f32 to vector<128x1xf32>
    %cst_10 = arith.constant 3.40282347E+38 : f32
    %c-256_i32_11 = arith.constant -256 : i32
    %c0_i32 = arith.constant 0 : i32
    %cst_12 = arith.constant dense<0x7F800000> : vector<128xf32>
    %36 = vector.multi_reduction <minimumf>, %34, %cst_12 [1] : vector<128x256xf32> to vector<128xf32>
    %37 = vector.shape_cast %36 : vector<128xf32> to vector<128x1xf32>
    %38 = vector.broadcast %37 : vector<128x1xf32> to vector<128x256xf32>
    %39 = arith.cmpf oeq, %34, %38 : vector<128x256xf32>
    %40 = vector.broadcast %cst_10 : f32 to vector<128x256xf32>
    %41 = arith.select %39, %40, %34 : vector<128x256xi1>, vector<128x256xf32>
    %42 = tpu.bitcast %37 : vector<128x1xf32> -> vector<128x1xi32>
    %43 = vector.broadcast %c-256_i32_11 : i32 to vector<128x1xi32>
    %44 = arith.andi %42, %43 : vector<128x1xi32>
    %45 = tpu.bitcast %44 : vector<128x1xi32> -> vector<128x1xf32>
    %46 = math.sqrt %45 : vector<128x1xf32>
    %47 = arith.addf %35, %46 : vector<128x1xf32>
    %c1_i32 = arith.constant 1 : i32
    %cst_13 = arith.constant dense<0x7F800000> : vector<128xf32>
    %48 = vector.multi_reduction <minimumf>, %41, %cst_13 [1] : vector<128x256xf32> to vector<128xf32>
    %49 = vector.shape_cast %48 : vector<128xf32> to vector<128x1xf32>
    %50 = vector.broadcast %49 : vector<128x1xf32> to vector<128x256xf32>
    %51 = arith.cmpf oeq, %41, %50 : vector<128x256xf32>
    %52 = vector.broadcast %cst_10 : f32 to vector<128x256xf32>
    %53 = arith.select %51, %52, %41 : vector<128x256xi1>, vector<128x256xf32>
    %54 = tpu.bitcast %49 : vector<128x1xf32> -> vector<128x1xi32>
    %55 = vector.broadcast %c-256_i32_11 : i32 to vector<128x1xi32>
    %56 = arith.andi %54, %55 : vector<128x1xi32>
    %57 = tpu.bitcast %56 : vector<128x1xi32> -> vector<128x1xf32>
    %58 = math.sqrt %57 : vector<128x1xf32>
    %59 = arith.addf %47, %58 : vector<128x1xf32>
    %c2_i32 = arith.constant 2 : i32
    %cst_14 = arith.constant dense<0x7F800000> : vector<128xf32>
    %60 = vector.multi_reduction <minimumf>, %53, %cst_14 [1] : vector<128x256xf32> to vector<128xf32>
    %61 = vector.shape_cast %60 : vector<128xf32> to vector<128x1xf32>
    %62 = vector.broadcast %61 : vector<128x1xf32> to vector<128x256xf32>
    %63 = arith.cmpf oeq, %53, %62 : vector<128x256xf32>
    %64 = vector.broadcast %cst_10 : f32 to vector<128x256xf32>
    %65 = arith.select %63, %64, %53 : vector<128x256xi1>, vector<128x256xf32>
    %66 = tpu.bitcast %61 : vector<128x1xf32> -> vector<128x1xi32>
    %67 = vector.broadcast %c-256_i32_11 : i32 to vector<128x1xi32>
    %68 = arith.andi %66, %67 : vector<128x1xi32>
    %69 = tpu.bitcast %68 : vector<128x1xi32> -> vector<128x1xf32>
    %70 = math.sqrt %69 : vector<128x1xf32>
    %71 = arith.addf %59, %70 : vector<128x1xf32>
    %c3_i32 = arith.constant 3 : i32
    %cst_15 = arith.constant dense<0x7F800000> : vector<128xf32>
    %72 = vector.multi_reduction <minimumf>, %65, %cst_15 [1] : vector<128x256xf32> to vector<128xf32>
    %73 = vector.shape_cast %72 : vector<128xf32> to vector<128x1xf32>
    %74 = vector.broadcast %73 : vector<128x1xf32> to vector<128x256xf32>
    %75 = arith.cmpf oeq, %65, %74 : vector<128x256xf32>
    %76 = vector.broadcast %cst_10 : f32 to vector<128x256xf32>
    %77 = arith.select %75, %76, %65 : vector<128x256xi1>, vector<128x256xf32>
    %78 = tpu.bitcast %73 : vector<128x1xf32> -> vector<128x1xi32>
    %79 = vector.broadcast %c-256_i32_11 : i32 to vector<128x1xi32>
    %80 = arith.andi %78, %79 : vector<128x1xi32>
    %81 = tpu.bitcast %80 : vector<128x1xi32> -> vector<128x1xf32>
    %82 = math.sqrt %81 : vector<128x1xf32>
    %83 = arith.addf %71, %82 : vector<128x1xf32>
    %c4_i32 = arith.constant 4 : i32
    %cst_16 = arith.constant dense<0x7F800000> : vector<128xf32>
    %84 = vector.multi_reduction <minimumf>, %77, %cst_16 [1] : vector<128x256xf32> to vector<128xf32>
    %85 = vector.shape_cast %84 : vector<128xf32> to vector<128x1xf32>
    %86 = vector.broadcast %85 : vector<128x1xf32> to vector<128x256xf32>
    %87 = arith.cmpf oeq, %77, %86 : vector<128x256xf32>
    %88 = vector.broadcast %cst_10 : f32 to vector<128x256xf32>
    %89 = arith.select %87, %88, %77 : vector<128x256xi1>, vector<128x256xf32>
    %90 = tpu.bitcast %85 : vector<128x1xf32> -> vector<128x1xi32>
    %91 = vector.broadcast %c-256_i32_11 : i32 to vector<128x1xi32>
    %92 = arith.andi %90, %91 : vector<128x1xi32>
    %93 = tpu.bitcast %92 : vector<128x1xi32> -> vector<128x1xf32>
    %94 = math.sqrt %93 : vector<128x1xf32>
    %95 = arith.addf %83, %94 : vector<128x1xf32>
    %c5_i32 = arith.constant 5 : i32
    %cst_17 = arith.constant dense<0x7F800000> : vector<128xf32>
    %96 = vector.multi_reduction <minimumf>, %89, %cst_17 [1] : vector<128x256xf32> to vector<128xf32>
    %97 = vector.shape_cast %96 : vector<128xf32> to vector<128x1xf32>
    %98 = vector.broadcast %97 : vector<128x1xf32> to vector<128x256xf32>
    %99 = arith.cmpf oeq, %89, %98 : vector<128x256xf32>
    %100 = vector.broadcast %cst_10 : f32 to vector<128x256xf32>
    %101 = arith.select %99, %100, %89 : vector<128x256xi1>, vector<128x256xf32>
    %102 = tpu.bitcast %97 : vector<128x1xf32> -> vector<128x1xi32>
    %103 = vector.broadcast %c-256_i32_11 : i32 to vector<128x1xi32>
    %104 = arith.andi %102, %103 : vector<128x1xi32>
    %105 = tpu.bitcast %104 : vector<128x1xi32> -> vector<128x1xf32>
    %106 = math.sqrt %105 : vector<128x1xf32>
    %107 = arith.addf %95, %106 : vector<128x1xf32>
    %c6_i32 = arith.constant 6 : i32
    %cst_18 = arith.constant dense<0x7F800000> : vector<128xf32>
    %108 = vector.multi_reduction <minimumf>, %101, %cst_18 [1] : vector<128x256xf32> to vector<128xf32>
    %109 = vector.shape_cast %108 : vector<128xf32> to vector<128x1xf32>
    %110 = vector.broadcast %109 : vector<128x1xf32> to vector<128x256xf32>
    %111 = arith.cmpf oeq, %101, %110 : vector<128x256xf32>
    %112 = vector.broadcast %cst_10 : f32 to vector<128x256xf32>
    %113 = arith.select %111, %112, %101 : vector<128x256xi1>, vector<128x256xf32>
    %114 = tpu.bitcast %109 : vector<128x1xf32> -> vector<128x1xi32>
    %115 = vector.broadcast %c-256_i32_11 : i32 to vector<128x1xi32>
    %116 = arith.andi %114, %115 : vector<128x1xi32>
    %117 = tpu.bitcast %116 : vector<128x1xi32> -> vector<128x1xf32>
    %118 = math.sqrt %117 : vector<128x1xf32>
    %119 = arith.addf %107, %118 : vector<128x1xf32>
    %c7_i32 = arith.constant 7 : i32
    %cst_19 = arith.constant dense<0x7F800000> : vector<128xf32>
    %120 = vector.multi_reduction <minimumf>, %113, %cst_19 [1] : vector<128x256xf32> to vector<128xf32>
    %121 = vector.shape_cast %120 : vector<128xf32> to vector<128x1xf32>
    %122 = vector.broadcast %121 : vector<128x1xf32> to vector<128x256xf32>
    %123 = arith.cmpf oeq, %113, %122 : vector<128x256xf32>
    %124 = vector.broadcast %cst_10 : f32 to vector<128x256xf32>
    %125 = arith.select %123, %124, %113 : vector<128x256xi1>, vector<128x256xf32>
    %126 = tpu.bitcast %121 : vector<128x1xf32> -> vector<128x1xi32>
    %127 = vector.broadcast %c-256_i32_11 : i32 to vector<128x1xi32>
    %128 = arith.andi %126, %127 : vector<128x1xi32>
    %129 = tpu.bitcast %128 : vector<128x1xi32> -> vector<128x1xf32>
    %130 = math.sqrt %129 : vector<128x1xf32>
    %131 = arith.addf %119, %130 : vector<128x1xf32>
    %c8_i32 = arith.constant 8 : i32
    %cst_20 = arith.constant dense<0x7F800000> : vector<128xf32>
    %132 = vector.multi_reduction <minimumf>, %125, %cst_20 [1] : vector<128x256xf32> to vector<128xf32>
    %133 = vector.shape_cast %132 : vector<128xf32> to vector<128x1xf32>
    %134 = vector.broadcast %133 : vector<128x1xf32> to vector<128x256xf32>
    %135 = arith.cmpf oeq, %125, %134 : vector<128x256xf32>
    %136 = vector.broadcast %cst_10 : f32 to vector<128x256xf32>
    %137 = arith.select %135, %136, %125 : vector<128x256xi1>, vector<128x256xf32>
    %138 = tpu.bitcast %133 : vector<128x1xf32> -> vector<128x1xi32>
    %139 = vector.broadcast %c-256_i32_11 : i32 to vector<128x1xi32>
    %140 = arith.andi %138, %139 : vector<128x1xi32>
    %141 = tpu.bitcast %140 : vector<128x1xi32> -> vector<128x1xf32>
    %142 = math.sqrt %141 : vector<128x1xf32>
    %143 = arith.addf %131, %142 : vector<128x1xf32>
    %c9_i32 = arith.constant 9 : i32
    %cst_21 = arith.constant dense<0x7F800000> : vector<128xf32>
    %144 = vector.multi_reduction <minimumf>, %137, %cst_21 [1] : vector<128x256xf32> to vector<128xf32>
    %145 = vector.shape_cast %144 : vector<128xf32> to vector<128x1xf32>
    %146 = vector.broadcast %145 : vector<128x1xf32> to vector<128x256xf32>
    %147 = arith.cmpf oeq, %137, %146 : vector<128x256xf32>
    %148 = vector.broadcast %cst_10 : f32 to vector<128x256xf32>
    %149 = arith.select %147, %148, %137 : vector<128x256xi1>, vector<128x256xf32>
    %150 = tpu.bitcast %145 : vector<128x1xf32> -> vector<128x1xi32>
    %151 = vector.broadcast %c-256_i32_11 : i32 to vector<128x1xi32>
    %152 = arith.andi %150, %151 : vector<128x1xi32>
    %153 = tpu.bitcast %152 : vector<128x1xi32> -> vector<128x1xf32>
    %154 = math.sqrt %153 : vector<128x1xf32>
    %155 = arith.addf %143, %154 : vector<128x1xf32>
    %cst_22 = arith.constant 1.000000e-01 : f32
    %156 = vector.broadcast %cst_22 : f32 to vector<128x1xf32>
    %157 = arith.mulf %155, %156 : vector<128x1xf32>
    %cst_23 = arith.constant 1.000000e+00 : f32
    %158 = vector.broadcast %cst_23 : f32 to vector<128x1xf32>
    %159 = arith.addf %158, %157 : vector<128x1xf32>
    %160 = math.log %159 : vector<128x1xf32>
    %c0_24 = arith.constant 0 : index
    %c0_25 = arith.constant 0 : index
    %161 = vector.load %arg3[%c0_24, %c0_25] : memref<128x1xf32, #tpu.memory_space<vmem>>, vector<128x1xf32>
    tpu.vector_store %arg3[%c0_24, %c0_25], %160 {strides = array<i32>} : memref<128x1xf32, #tpu.memory_space<vmem>>, vector<128x1xf32>,
    return
  }
  func.func @transform_0(%arg0: i32) -> (i32, i32) {
    %c0_i32 = arith.constant 0 : i32
    %c0_i32_0 = arith.constant 0 : i32
    %c0_i32_1 = arith.constant 0 : i32
    return %c0_i32, %c0_i32_0 : i32, i32
  }
  func.func @transform_1(%arg0: i32) -> (i32, i32) {
    %c0_i32 = arith.constant 0 : i32
    %c0_i32_0 = arith.constant 0 : i32
    %c0_i32_1 = arith.constant 0 : i32
    return %c0_i32, %c0_i32_0 : i32, i32
  }
  func.func @transform_2(%arg0: i32) -> (i32, i32) {
    %c0_i32 = arith.constant 0 : i32
    %c0_i32_0 = arith.constant 0 : i32
    return %arg0, %c0_i32 : i32, i32
  }
}

</mosaic_0001>

<llo_original>
// kernel: tpu_custom_call.1
$region0: #{tpu_custom_call.1}
  #allocation0 [shape = 'u32[]', space=smem, size = 0x4, offset = 0x4, fixed_abs, tag = 'smem constant byte address 0x4 - core index']
  #allocation1 [shape = 'u32[144,128]{1,0:T(1,128)}', space=vmem, size = 0x12000, scoped, tag = 'internal scratch']
  %s0 = inlined_call_operand.hbm [shape: f32[1,256], index: 0, kind: input, shape index: {}]
  %s1 = inlined_call_operand.hbm [shape: f32[256,32], index: 1, kind: input, shape index: {}]
  %s2 = inlined_call_operand.hbm [shape: f32[256,1], index: 2, kind: output, shape index: {}]
  %s3 = sld [smem:[#allocation0]]
  $region49: #{tpu_custom_call.1} parent=0
    _
  %s5 = ssub.s32 1, %s3
  %s6 = scalar_select 0, %s5, %s3
  $region1: #{tpu_custom_call.1} parent=0
    #allocation2 [shape = 'u8[1024]{0}', space=vmem, size = 0x400, scoped, tag = 'input window, operand 0, single buffered']
    #allocation3 [shape = 's32[2]{0}', space=sflag, size = 0x8, scoped, tag = 'scoped memory for tpu_custom_call.1']
    #allocation4 [shape = 's32[2]{0}', space=sflag, size = 0x8, scoped, tag = 'scoped memory for tpu_custom_call.1']
    #allocation5 [shape = 'u8[131072]{0}', space=vmem, size = 0x20000, scoped, tag = 'input window, operand 1, single buffered']
    #allocation6 [shape = 's32[1]{0}', space=sflag, size = 0x4, scoped, tag = 'scoped memory for tpu_custom_call.1']
    #allocation7 [shape = 'u8[131072]{0}', space=vmem, size = 0x20000, scoped, tag = 'output window, operand 0']
    %7 = vsyncpa [#allocation3], 0
    %8 = vsyncpa [#allocation6], 0
    %9 = vsyncpa [#allocation4], 0
    %s10 = scalar_lea.sflag [#allocation4], 1
    %11 = vsyncpa %s10, 0
    loop: start=0, step=1, limit=4
    $region2: #{tpu_custom_call.1} parent=1 // loop_pre_header
      _
    $region3: #{tpu_custom_call.1} parent=1 // loop_header
      %s13 = sphi 0, %s17
      %p14 = scmp.ge.s32.totalorder %s13, 4
      %s21 = sphi 0, %s21
      %s23 = sphi 0, %s21
      %s24 = sphi 0, %s23
      %s38 = sphi 0, %s24
      %s42 = sphi 0, %s42
      %s44 = sphi 0, %s42
      %s45 = sphi 0, %s44
      %s59 = sphi 0, %s45
      %s65 = sphi 0, %s67
      %s68 = sphi 0, %s65
      %s69 = sphi 0, %s68
      %s85 = sphi 0, %s69
    $region4: #{tpu_custom_call.1} parent=1 // loop_header_branch
      %16 = sbr.rel (%p14) target = $region8
    $region5: #{tpu_custom_call.1} parent=1 // loop_body
      %s18 = ssub.s32 %s13, 1
      %s19 = ssub.s32 %s13, 2
      %s20 = sadd.s32 %s13, 1
      %s22 = sadd.s32 %s21, 1
      %p25 = scmp.eq.s32.totalorder %s13, 1
      %p26 = scmp.ne.s32.totalorder %s21, %s23
      %p27 = scmp.eq.s32.totalorder %s13, 0
      %p28 = por %p26, %p27
      %p29 = scmp.ne.s32.totalorder %s21, %s23
      %p30 = scmp.eq.s32.totalorder %s18, 1
      %p31 = por %p29, %p30
      %p32 = scmp.ne.s32.totalorder %s23, %s24
      %p33 = scmp.eq.s32.totalorder %s18, 0
      %p34 = por %p32, %p33
      %p35 = scmp.ne.s32.totalorder %s23, %s24
      %p36 = scmp.eq.s32.totalorder %s19, 1
      %p37 = por %p35, %p36
      %p39 = scmp.ne.s32.totalorder %s24, %s38
      %p40 = scmp.eq.s32.totalorder %s19, 0
      %p41 = por %p39, %p40
      %s43 = sadd.s32 %s42, 1
      %p46 = scmp.eq.s32.totalorder %s13, 1
      %p47 = scmp.ne.s32.totalorder %s42, %s44
      %p48 = scmp.eq.s32.totalorder %s13, 0
      %p49 = por %p47, %p48
      %p50 = scmp.ne.s32.totalorder %s42, %s44
      %p51 = scmp.eq.s32.totalorder %s18, 1
      %p52 = por %p50, %p51
      %p53 = scmp.ne.s32.totalorder %s44, %s45
      %p54 = scmp.eq.s32.totalorder %s18, 0
      %p55 = por %p53, %p54
      %p56 = scmp.ne.s32.totalorder %s44, %s45
      %p57 = scmp.eq.s32.totalorder %s19, 1
      %p58 = por %p56, %p57
      %p60 = scmp.ne.s32.totalorder %s45, %s59
      %p61 = scmp.eq.s32.totalorder %s19, 0
      %p62 = por %p60, %p61
      %s63 = ssub.s32 %s13, %s20
      %p64 = scmp.eq.s32.totalorder %s63, 0
      %s66 = sadd.s32 %s65, 1
      %s67 = scalar_select %p64, %s65, %s66
      %p70 = pneg %p64
      %p71 = scmp.eq.s32.totalorder %s13, 1
      %p72 = por %p70, %p71
      %p73 = scmp.ne.s32.totalorder %s65, %s68
      %p74 = scmp.eq.s32.totalorder %s13, 0
      %p75 = por %p73, %p74
      %p76 = scmp.ne.s32.totalorder %s65, %s68
      %p77 = scmp.eq.s32.totalorder %s18, 1
      %p78 = por %p76, %p77
      %p79 = scmp.ne.s32.totalorder %s68, %s69
      %p80 = scmp.eq.s32.totalorder %s18, 0
      %p81 = por %p79, %p80
      %p82 = scmp.ne.s32.totalorder %s68, %s69
      %p83 = scmp.eq.s32.totalorder %s19, 1
      %p84 = por %p82, %p83
      %p86 = scmp.ne.s32.totalorder %s69, %s85
      %p87 = scmp.eq.s32.totalorder %s19, 0
      %p88 = por %p86, %p87
      %p89 = scmp.le.s32.totalorder 1, %s13
      %p90 = scmp.lt.s32.totalorder %s13, 3
      %p91 = pnand %p89, %p90
      %p92 = pneg %p91
      // Predicated region
      $region9: #{tpu_custom_call.1} parent=5 // pred_check
        _
      $region10: #{tpu_custom_call.1} parent=5 // pred_check_branch
        %94 = sbr.rel (%p91) target = $region12
      $region11: #{tpu_custom_call.1} parent=5 // pred_region
        %s95 = ssub.s32 %s13, 1
        // Predicated region
        $region13: #{tpu_custom_call.1} parent=11 // pred_check
          %p96 = pneg %p34
        $region14: #{tpu_custom_call.1} parent=11 // pred_check_branch
          %98 = sbr.rel (%p96) target = $region16
        $region15: #{tpu_custom_call.1} parent=11 // pred_region
          %s100 = ssub.s32 32, 32
          %101 = vsyncadd [#allocation3], %s100
          %s103 = sshll.u32 [#allocation2], 4
          %s104 = int_to_ptr.vmem [resolvable:$true] %s103
          %106 = dma.hbm_to_vmem [thread:$0]  %s0, 32, %s104, [#allocation3]
        $region16: #{tpu_custom_call.1} parent=11 // pred_fallthru
          _
        // Predicated region
        $region17: #{tpu_custom_call.1} parent=11 // pred_check
          %p107 = pneg %p55
        $region18: #{tpu_custom_call.1} parent=11 // pred_check_branch
          %109 = sbr.rel (%p107) target = $region20
        $region19: #{tpu_custom_call.1} parent=11 // pred_region
          %s111 = ssub.s32 4096, 4096
          %112 = vsyncadd [#allocation6], %s111
          %s113 = sshll.u32 [#allocation5], 4
          %s114 = int_to_ptr.vmem [resolvable:$true] %s113
          %119 = dma.hbm_to_vmem [thread:$0]  %s1, 4096, %s114, [#allocation6], 128, 128, 8
        $region20: #{tpu_custom_call.1} parent=11 // pred_fallthru
          _
      $region12: #{tpu_custom_call.1} parent=5 // pred_fallthru
        _
      %p120 = scmp.lt.s32.totalorder %s13, 2
      // Predicated region
      $region21: #{tpu_custom_call.1} parent=5 // pred_check
        %p121 = pneg %p120
      $region22: #{tpu_custom_call.1} parent=5 // pred_check_branch
        %123 = sbr.rel (%p121) target = $region24
      $region23: #{tpu_custom_call.1} parent=5 // pred_region
        _
      $region24: #{tpu_custom_call.1} parent=5 // pred_fallthru
        _
      %p124 = scmp.le.s32.totalorder 1, %s13
      %p125 = scmp.lt.s32.totalorder %s13, 3
      %p126 = pnand %p124, %p125
      %p127 = pneg %p126
      // Predicated region
      $region25: #{tpu_custom_call.1} parent=5 // pred_check
        _
      $region26: #{tpu_custom_call.1} parent=5 // pred_check_branch
        %129 = sbr.rel (%p126) target = $region28
      $region27: #{tpu_custom_call.1} parent=5 // pred_region
        %s130 = ssub.s32 %s13, 1
        // Predicated region
        $region29: #{tpu_custom_call.1} parent=27 // pred_check
          %p131 = pneg %p34
        $region30: #{tpu_custom_call.1} parent=27 // pred_check_branch
          %133 = sbr.rel (%p131) target = $region32
        $region31: #{tpu_custom_call.1} parent=27 // pred_region
          %134 = dma.done [#allocation3], 32
        $region32: #{tpu_custom_call.1} parent=27 // pred_fallthru
          _
        // Predicated region
        $region33: #{tpu_custom_call.1} parent=27 // pred_check
          %p135 = pneg %p55
        $region34: #{tpu_custom_call.1} parent=27 // pred_check_branch
          %137 = sbr.rel (%p135) target = $region36
        $region35: #{tpu_custom_call.1} parent=27 // pred_region
          %138 = dma.done [#allocation6], 4096
        $region36: #{tpu_custom_call.1} parent=27 // pred_fallthru
          _
        %p139 = pneg %p34
        %p140 = pneg %p31
        %p141 = pneg %p55
        %p142 = pneg %p52
        %p143 = pneg %p81
        %p144 = pneg %p78
        %s145 = sand.u32 %s68, 1
        %s146 = scalar_lea.sflag [#allocation4], %s145
        %s147 = sand.u32 %s68, 1
        %s148 = smul.addr %s147, 128
        %s149 = scalar_lea.vmem [#allocation7], %s148
        %s150 = smul.u32 16, %s18
        %s151 = smul.u32 %s18, 128
        %s152 = scalar_lea.vmem [#allocation5], %s151
        %v153 = vld [vmem:[%s152] sm:$0xff]
        %v154 = vld [vmem:[%s152 + $0x8] sm:$0xff]
        %v155 = vld [vmem:[%s152 + $0x10] sm:$0xff]
        %v156 = vld [vmem:[%s152 + $0x18] sm:$0xff]
        %v157 = vld [vmem:[%s152 + $0x20] sm:$0xff]
        %v158 = vld [vmem:[%s152 + $0x28] sm:$0xff]
        %v159 = vld [vmem:[%s152 + $0x30] sm:$0xff]
        %v160 = vld [vmem:[%s152 + $0x38] sm:$0xff]
        %v161 = vld [vmem:[%s152 + $0x40] sm:$0xff]
        %v162 = vld [vmem:[%s152 + $0x48] sm:$0xff]
        %v163 = vld [vmem:[%s152 + $0x50] sm:$0xff]
        %v164 = vld [vmem:[%s152 + $0x58] sm:$0xff]
        %v165 = vld [vmem:[%s152 + $0x60] sm:$0xff]
        %v166 = vld [vmem:[%s152 + $0x68] sm:$0xff]
        %v167 = vld [vmem:[%s152 + $0x70] sm:$0xff]
        %v168 = vld [vmem:[%s152 + $0x78] sm:$0xff]
        %v169 = vld [vmem:[#allocation5] sm:$0xff]
        %v170 = vld [vmem:[#allocation5 + $0x8] sm:$0xff]
        %v171 = vld [vmem:[#allocation5 + $0x10] sm:$0xff]
        %v172 = vld [vmem:[#allocation5 + $0x18] sm:$0xff]
        %v173 = vld [vmem:[#allocation5 + $0x20] sm:$0xff]
        %v174 = vld [vmem:[#allocation5 + $0x28] sm:$0xff]
        %v175 = vld [vmem:[#allocation5 + $0x30] sm:$0xff]
        %v176 = vld [vmem:[#allocation5 + $0x38] sm:$0xff]
        %v177 = vld [vmem:[#allocation5 + $0x40] sm:$0xff]
        %v178 = vld [vmem:[#allocation5 + $0x48] sm:$0xff]
        %v179 = vld [vmem:[#allocation5 + $0x50] sm:$0xff]
        %v180 = vld [vmem:[#allocation5 + $0x58] sm:$0xff]
        %v181 = vld [vmem:[#allocation5 + $0x60] sm:$0xff]
        %v182 = vld [vmem:[#allocation5 + $0x68] sm:$0xff]
        %v183 = vld [vmem:[#allocation5 + $0x70] sm:$0xff]
        %v184 = vld [vmem:[#allocation5 + $0x78] sm:$0xff]
        %v185 = vld [vmem:[#allocation5 + $0x80] sm:$0xff]
        %v186 = vld [vmem:[#allocation5 + $0x88] sm:$0xff]
        %v187 = vld [vmem:[#allocation5 + $0x90] sm:$0xff]
        %v188 = vld [vmem:[#allocation5 + $0x98] sm:$0xff]
        %v189 = vld [vmem:[#allocation5 + $0xa0] sm:$0xff]
        %v190 = vld [vmem:[#allocation5 + $0xa8] sm:$0xff]
        %v191 = vld [vmem:[#allocation5 + $0xb0] sm:$0xff]
        %v192 = vld [vmem:[#allocation5 + $0xb8] sm:$0xff]
        %v193 = vld [vmem:[#allocation5 + $0xc0] sm:$0xff]
        %v194 = vld [vmem:[#allocation5 + $0xc8] sm:$0xff]
        %v195 = vld [vmem:[#allocation5 + $0xd0] sm:$0xff]
        %v196 = vld [vmem:[#allocation5 + $0xd8] sm:$0xff]
        %v197 = vld [vmem:[#allocation5 + $0xe0] sm:$0xff]
        %v198 = vld [vmem:[#allocation5 + $0xe8] sm:$0xff]
        %v199 = vld [vmem:[#allocation5 + $0xf0] sm:$0xff]
        %v200 = vld [vmem:[#allocation5 + $0xf8] sm:$0xff]
        %v201 = vmul.f32 %v153, %v153
        %v202 = vmul.f32 %v154, %v154
        %v203 = vmul.f32 %v155, %v155
        %v204 = vmul.f32 %v156, %v156
        %v205 = vmul.f32 %v157, %v157
        %v206 = vmul.f32 %v158, %v158
        %v207 = vmul.f32 %v159, %v159
        %v208 = vmul.f32 %v160, %v160
        %v209 = vmul.f32 %v161, %v161
        %v210 = vmul.f32 %v162, %v162
        %v211 = vmul.f32 %v163, %v163
        %v212 = vmul.f32 %v164, %v164
        %v213 = vmul.f32 %v165, %v165
        %v214 = vmul.f32 %v166, %v166
        %v215 = vmul.f32 %v167, %v167
        %v216 = vmul.f32 %v168, %v168
        %vm217 = vcmask 261120
        %v218 = vsel %vm217, %v201, 0.0
        %219 = vadd.xlane.f32.xlu0 %v218
        %v220 = vpop.xlane.xlu0 %219
        %v221 = vsel %vm217, %v202, 0.0
        %222 = vadd.xlane.f32.xlu0 %v221
        %v223 = vpop.xlane.xlu0 %222
        %v224 = vsel %vm217, %v203, 0.0
        %225 = vadd.xlane.f32.xlu0 %v224
        %v226 = vpop.xlane.xlu0 %225
        %v227 = vsel %vm217, %v204, 0.0
        %228 = vadd.xlane.f32.xlu0 %v227
        %v229 = vpop.xlane.xlu0 %228
        %v230 = vsel %vm217, %v205, 0.0
        %231 = vadd.xlane.f32.xlu0 %v230
        %v232 = vpop.xlane.xlu0 %231
        %v233 = vsel %vm217, %v206, 0.0
        %234 = vadd.xlane.f32.xlu0 %v233
        %v235 = vpop.xlane.xlu0 %234
        %v236 = vsel %vm217, %v207, 0.0
        %237 = vadd.xlane.f32.xlu0 %v236
        %v238 = vpop.xlane.xlu0 %237
        %v239 = vsel %vm217, %v208, 0.0
        %240 = vadd.xlane.f32.xlu0 %v239
        %v241 = vpop.xlane.xlu0 %240
        %v242 = vsel %vm217, %v209, 0.0
        %243 = vadd.xlane.f32.xlu0 %v242
        %v244 = vpop.xlane.xlu0 %243
        %v245 = vsel %vm217, %v210, 0.0
        %246 = vadd.xlane.f32.xlu0 %v245
        %v247 = vpop.xlane.xlu0 %246
        %v248 = vsel %vm217, %v211, 0.0
        %249 = vadd.xlane.f32.xlu0 %v248
        %v250 = vpop.xlane.xlu0 %249
        %v251 = vsel %vm217, %v212, 0.0
        %252 = vadd.xlane.f32.xlu0 %v251
        %v253 = vpop.xlane.xlu0 %252
        %v254 = vsel %vm217, %v213, 0.0
        %255 = vadd.xlane.f32.xlu0 %v254
        %v256 = vpop.xlane.xlu0 %255
        %v257 = vsel %vm217, %v214, 0.0
        %258 = vadd.xlane.f32.xlu0 %v257
        %v259 = vpop.xlane.xlu0 %258
        %v260 = vsel %vm217, %v215, 0.0
        %261 = vadd.xlane.f32.xlu0 %v260
        %v262 = vpop.xlane.xlu0 %261
        %v263 = vsel %vm217, %v216, 0.0
        %264 = vadd.xlane.f32.xlu0 %v263
        %v265 = vpop.xlane.xlu0 %264
        %v267 = vsel %vm217, %v153, 0
        %v270 = vsel %vm217, %v154, 0
        %v273 = vsel %vm217, %v155, 0
        %v276 = vsel %vm217, %v156, 0
        %v279 = vsel %vm217, %v157, 0
        %v282 = vsel %vm217, %v158, 0
        %v285 = vsel %vm217, %v159, 0
        %v288 = vsel %vm217, %v160, 0
        %v291 = vsel %vm217, %v161, 0
        %v294 = vsel %vm217, %v162, 0
        %v297 = vsel %vm217, %v163, 0
        %v300 = vsel %vm217, %v164, 0
        %v303 = vsel %vm217, %v165, 0
        %v306 = vsel %vm217, %v166, 0
        %v309 = vsel %vm217, %v167, 0
        %v312 = vsel %vm217, %v168, 0
        %v315 = vsel %vm217, %v169, 0
        %v318 = vsel %vm217, %v170, 0
        %v321 = vsel %vm217, %v171, 0
        %v324 = vsel %vm217, %v172, 0
        %v327 = vsel %vm217, %v173, 0
        %v330 = vsel %vm217, %v174, 0
        %v333 = vsel %vm217, %v175, 0
        %v336 = vsel %vm217, %v176, 0
        %v339 = vsel %vm217, %v177, 0
        %v342 = vsel %vm217, %v178, 0
        %v345 = vsel %vm217, %v179, 0
        %v348 = vsel %vm217, %v180, 0
        %v351 = vsel %vm217, %v181, 0
        %v354 = vsel %vm217, %v182, 0
        %v357 = vsel %vm217, %v183, 0
        %v360 = vsel %vm217, %v184, 0
        %v363 = vsel %vm217, %v185, 0
        %v366 = vsel %vm217, %v186, 0
        %v369 = vsel %vm217, %v187, 0
        %v372 = vsel %vm217, %v188, 0
        %v375 = vsel %vm217, %v189, 0
        %v378 = vsel %vm217, %v190, 0
        %v381 = vsel %vm217, %v191, 0
        %v384 = vsel %vm217, %v192, 0
        %v387 = vsel %vm217, %v193, 0
        %v390 = vsel %vm217, %v194, 0
        %v393 = vsel %vm217, %v195, 0
        %v396 = vsel %vm217, %v196, 0
        %v399 = vsel %vm217, %v197, 0
        %v402 = vsel %vm217, %v198, 0
        %v405 = vsel %vm217, %v199, 0
        %v408 = vsel %vm217, %v200, 0
        %410 = vmatprep.subr.mxu0 0.0
        %411 = vmatpush1.xpose.msra.mxu0 %v315
        %412 = vmatprep.subr.mxu0 0.0
        %413 = vmatpush1.xpose.msra.mxu0 %v318
        %414 = vmatprep.subr.mxu0 0.0
        %415 = vmatpush1.xpose.msra.mxu0 %v321
        %416 = vmatprep.subr.mxu0 0.0
        %417 = vmatpush1.xpose.msra.mxu0 %v324
        %418 = vmatprep.subr.mxu0 0.0
        %419 = vmatpush1.xpose.msra.mxu0 %v327
        %420 = vmatprep.subr.mxu0 0.0
        %421 = vmatpush1.xpose.msra.mxu0 %v330
        %422 = vmatprep.subr.mxu0 0.0
        %423 = vmatpush1.xpose.msra.mxu0 %v333
        %424 = vmatprep.subr.mxu0 0.0
        %425 = vmatpush1.xpose.msra.mxu0 %v336
        %426 = vmatprep.subr.mxu0 0.0
        %427 = vmatpush1.xpose.msra.mxu0 %v339
        %428 = vmatprep.subr.mxu0 0.0
        %429 = vmatpush1.xpose.msra.mxu0 %v342
        %430 = vmatprep.subr.mxu0 0.0
        %431 = vmatpush1.xpose.msra.mxu0 %v345
        %432 = vmatprep.subr.mxu0 0.0
        %433 = vmatpush1.xpose.msra.mxu0 %v348
        %434 = vmatprep.subr.mxu0 0.0
        %435 = vmatpush1.xpose.msra.mxu0 %v351
        %436 = vmatprep.subr.mxu0 0.0
        %437 = vmatpush1.xpose.msra.mxu0 %v354
        %438 = vmatprep.subr.mxu0 0.0
        %439 = vmatpush1.xpose.msra.mxu0 %v357
        %440 = vmatprep.subr.mxu0 0.0
        %441 = vmatpush1.xpose.msra.mxu0 %v360
        %442 = vmatprep.subr.mxu0 0.0
        %443 = vmatpush1.xpose.msra.mxu0 %v363
        %444 = vmatprep.subr.mxu0 0.0
        %445 = vmatpush1.xpose.msra.mxu0 %v366
        %446 = vmatprep.subr.mxu0 0.0
        %447 = vmatpush1.xpose.msra.mxu0 %v369
        %448 = vmatprep.subr.mxu0 0.0
        %449 = vmatpush1.xpose.msra.mxu0 %v372
        %450 = vmatprep.subr.mxu0 0.0
        %451 = vmatpush1.xpose.msra.mxu0 %v375
        %452 = vmatprep.subr.mxu0 0.0
        %453 = vmatpush1.xpose.msra.mxu0 %v378
        %454 = vmatprep.subr.mxu0 0.0
        %455 = vmatpush1.xpose.msra.mxu0 %v381
        %456 = vmatprep.subr.mxu0 0.0
        %457 = vmatpush1.xpose.msra.mxu0 %v384
        %458 = vmatprep.subr.mxu0 0.0
        %459 = vmatpush1.xpose.msra.mxu0 %v387
        %460 = vmatprep.subr.mxu0 0.0
        %461 = vmatpush1.xpose.msra.mxu0 %v390
        %462 = vmatprep.subr.mxu0 0.0
        %463 = vmatpush1.xpose.msra.mxu0 %v393
        %464 = vmatprep.subr.mxu0 0.0
        %465 = vmatpush1.xpose.msra.mxu0 %v396
        %466 = vmatprep.subr.mxu0 0.0
        %467 = vmatpush1.xpose.msra.mxu0 %v399
        %468 = vmatprep.subr.mxu0 0.0
        %469 = vmatpush1.xpose.msra.mxu0 %v402
        %470 = vmatprep.subr.mxu0 0.0
        %471 = vmatpush1.xpose.msra.mxu0 %v405
        %472 = vmatprep.subr.mxu0 0.0
        %473 = vmatpush1.xpose.msra.mxu0 %v408
        %474 = vmatprep.mubr.f32.mxu0 0.0
        %475 = vmatmul.mubr.f32.gmra.mrb[0].mxu0 %v267
        %v476 = vpop.f32.mrb[0].mxu0
        %v477 = vadd.f32 0.0, %v476
        %v478 = vpop.f32.mrb[0].mxu0
        %v479 = vadd.f32 0.0, %v478
        %480 = vmatprep.mubr.f32.mxu0 0.0
        %481 = vmatmul.mubr.f32.gmra.mrb[0].mxu0 %v270
        %v482 = vpop.f32.mrb[0].mxu0
        %v483 = vadd.f32 0.0, %v482
        %v484 = vpop.f32.mrb[0].mxu0
        %v485 = vadd.f32 0.0, %v484
        %486 = vmatprep.mubr.f32.mxu0 0.0
        %487 = vmatmul.mubr.f32.gmra.mrb[0].mxu0 %v273
        %v488 = vpop.f32.mrb[0].mxu0
        %v489 = vadd.f32 0.0, %v488
        %v490 = vpop.f32.mrb[0].mxu0
        %v491 = vadd.f32 0.0, %v490
        %492 = vmatprep.mubr.f32.mxu0 0.0
        %493 = vmatmul.mubr.f32.gmra.mrb[0].mxu0 %v276
        %v494 = vpop.f32.mrb[0].mxu0
        %v495 = vadd.f32 0.0, %v494
        %v496 = vpop.f32.mrb[0].mxu0
        %v497 = vadd.f32 0.0, %v496
        %498 = vmatprep.mubr.f32.mxu0 0.0
        %499 = vmatmul.mubr.f32.gmra.mrb[0].mxu0 %v279
        %v500 = vpop.f32.mrb[0].mxu0
        %v501 = vadd.f32 0.0, %v500
        %v502 = vpop.f32.mrb[0].mxu0
        %v503 = vadd.f32 0.0, %v502
        %504 = vmatprep.mubr.f32.mxu0 0.0
        %505 = vmatmul.mubr.f32.gmra.mrb[0].mxu0 %v282
        %v506 = vpop.f32.mrb[0].mxu0
        %v507 = vadd.f32 0.0, %v506
        %v508 = vpop.f32.mrb[0].mxu0
        %v509 = vadd.f32 0.0, %v508
        %510 = vmatprep.mubr.f32.mxu0 0.0
        %511 = vmatmul.mubr.f32.gmra.mrb[0].mxu0 %v285
        %v512 = vpop.f32.mrb[0].mxu0
        %v513 = vadd.f32 0.0, %v512
        %v514 = vpop.f32.mrb[0].mxu0
        %v515 = vadd.f32 0.0, %v514
        %516 = vmatprep.mubr.f32.mxu0 0.0
        %517 = vmatmul.mubr.f32.gmra.mrb[0].mxu0 %v288
        %v518 = vpop.f32.mrb[0].mxu0
        %v519 = vadd.f32 0.0, %v518
        %v520 = vpop.f32.mrb[0].mxu0
        %v521 = vadd.f32 0.0, %v520
        %522 = vmatprep.mubr.f32.mxu0 0.0
        %523 = vmatmul.mubr.f32.gmra.mrb[0].mxu0 %v291
        %v524 = vpop.f32.mrb[0].mxu0
        %v525 = vadd.f32 0.0, %v524
        %v526 = vpop.f32.mrb[0].mxu0
        %v527 = vadd.f32 0.0, %v526
        %528 = vmatprep.mubr.f32.mxu0 0.0
        %529 = vmatmul.mubr.f32.gmra.mrb[0].mxu0 %v294
        %v530 = vpop.f32.mrb[0].mxu0
        %v531 = vadd.f32 0.0, %v530
        %v532 = vpop.f32.mrb[0].mxu0
        %v533 = vadd.f32 0.0, %v532
        %534 = vmatprep.mubr.f32.mxu0 0.0
        %535 = vmatmul.mubr.f32.gmra.mrb[0].mxu0 %v297
        %v536 = vpop.f32.mrb[0].mxu0
        %v537 = vadd.f32 0.0, %v536
        %v538 = vpop.f32.mrb[0].mxu0
        %v539 = vadd.f32 0.0, %v538
        %540 = vmatprep.mubr.f32.mxu0 0.0
        %541 = vmatmul.mubr.f32.gmra.mrb[0].mxu0 %v300
        %v542 = vpop.f32.mrb[0].mxu0
        %v543 = vadd.f32 0.0, %v542
        %v544 = vpop.f32.mrb[0].mxu0
        %v545 = vadd.f32 0.0, %v544
        %546 = vmatprep.mubr.f32.mxu0 0.0
        %547 = vmatmul.mubr.f32.gmra.mrb[0].mxu0 %v303
        %v548 = vpop.f32.mrb[0].mxu0
        %v549 = vadd.f32 0.0, %v548
        %v550 = vpop.f32.mrb[0].mxu0
        %v551 = vadd.f32 0.0, %v550
        %552 = vmatprep.mubr.f32.mxu0 0.0
        %553 = vmatmul.mubr.f32.gmra.mrb[0].mxu0 %v306
        %v554 = vpop.f32.mrb[0].mxu0
        %v555 = vadd.f32 0.0, %v554
        %v556 = vpop.f32.mrb[0].mxu0
        %v557 = vadd.f32 0.0, %v556
        %558 = vmatprep.mubr.f32.mxu0 0.0
        %559 = vmatmul.mubr.f32.gmra.mrb[0].mxu0 %v309
        %v560 = vpop.f32.mrb[0].mxu0
        %v561 = vadd.f32 0.0, %v560
        %v562 = vpop.f32.mrb[0].mxu0
        %v563 = vadd.f32 0.0, %v562
        %564 = vmatprep.mubr.f32.mxu0 0.0
        %565 = vmatmul.mubr.f32.gmra.mrb[0].mxu0 %v312
        %v566 = vpop.f32.mrb[0].mxu0
        %v567 = vadd.f32 0.0, %v566
        %v568 = vpop.f32.mrb[0].mxu0
        %v569 = vadd.f32 0.0, %v568
        %570 = vdwg.mxu0
        %v571 = vld [vmem:[#allocation2] sm:$0x3]
        %v573 = vlaneseq
        %v574 = vshrl.u32 %v573, 7
        %v575 = vsub.s32 0, %v574
        %v576 = vrot.slane %v571, %v575
        %v577 = vlaneseq
        %v578 = vshrl.u32 %v577, 7
        %v579 = vsub.s32 1, %v578
        %v580 = vrot.slane %v571, %v579
        %v583 = vadd.f32 %v220, %v576
        %v584 = vadd.f32 %v220, %v580
        %v585 = vadd.f32 %v223, %v576
        %v586 = vadd.f32 %v223, %v580
        %v587 = vadd.f32 %v226, %v576
        %v588 = vadd.f32 %v226, %v580
        %v589 = vadd.f32 %v229, %v576
        %v590 = vadd.f32 %v229, %v580
        %v591 = vadd.f32 %v232, %v576
        %v592 = vadd.f32 %v232, %v580
        %v593 = vadd.f32 %v235, %v576
        %v594 = vadd.f32 %v235, %v580
        %v595 = vadd.f32 %v238, %v576
        %v596 = vadd.f32 %v238, %v580
        %v597 = vadd.f32 %v241, %v576
        %v598 = vadd.f32 %v241, %v580
        %v599 = vadd.f32 %v244, %v576
        %v600 = vadd.f32 %v244, %v580
        %v601 = vadd.f32 %v247, %v576
        %v602 = vadd.f32 %v247, %v580
        %v603 = vadd.f32 %v250, %v576
        %v604 = vadd.f32 %v250, %v580
        %v605 = vadd.f32 %v253, %v576
        %v606 = vadd.f32 %v253, %v580
        %v607 = vadd.f32 %v256, %v576
        %v608 = vadd.f32 %v256, %v580
        %v609 = vadd.f32 %v259, %v576
        %v610 = vadd.f32 %v259, %v580
        %v611 = vadd.f32 %v262, %v576
        %v612 = vadd.f32 %v262, %v580
        %v613 = vadd.f32 %v265, %v576
        %v614 = vadd.f32 %v265, %v580
        %v615 = vmul.f32 %v477, 2.0
        %v616 = vmul.f32 %v479, 2.0
        %v617 = vmul.f32 %v483, 2.0
        %v618 = vmul.f32 %v485, 2.0
        %v619 = vmul.f32 %v489, 2.0
        %v620 = vmul.f32 %v491, 2.0
        %v621 = vmul.f32 %v495, 2.0
        %v622 = vmul.f32 %v497, 2.0
        %v623 = vmul.f32 %v501, 2.0
        %v624 = vmul.f32 %v503, 2.0
        %v625 = vmul.f32 %v507, 2.0
        %v626 = vmul.f32 %v509, 2.0
        %v627 = vmul.f32 %v513, 2.0
        %v628 = vmul.f32 %v515, 2.0
        %v629 = vmul.f32 %v519, 2.0
        %v630 = vmul.f32 %v521, 2.0
        %v631 = vmul.f32 %v525, 2.0
        %v632 = vmul.f32 %v527, 2.0
        %v633 = vmul.f32 %v531, 2.0
        %v634 = vmul.f32 %v533, 2.0
        %v635 = vmul.f32 %v537, 2.0
        %v636 = vmul.f32 %v539, 2.0
        %v637 = vmul.f32 %v543, 2.0
        %v638 = vmul.f32 %v545, 2.0
        %v639 = vmul.f32 %v549, 2.0
        %v640 = vmul.f32 %v551, 2.0
        %v641 = vmul.f32 %v555, 2.0
        %v642 = vmul.f32 %v557, 2.0
        %v643 = vmul.f32 %v561, 2.0
        %v644 = vmul.f32 %v563, 2.0
        %v645 = vmul.f32 %v567, 2.0
        %v646 = vmul.f32 %v569, 2.0
        %v647 = vsub.f32 %v583, %v615
        %v648 = vsub.f32 %v584, %v616
        %v649 = vsub.f32 %v585, %v617
        %v650 = vsub.f32 %v586, %v618
        %v651 = vsub.f32 %v587, %v619
        %v652 = vsub.f32 %v588, %v620
        %v653 = vsub.f32 %v589, %v621
        %v654 = vsub.f32 %v590, %v622
        %v655 = vsub.f32 %v591, %v623
        %v656 = vsub.f32 %v592, %v624
        %v657 = vsub.f32 %v593, %v625
        %v658 = vsub.f32 %v594, %v626
        %v659 = vsub.f32 %v595, %v627
        %v660 = vsub.f32 %v596, %v628
        %v661 = vsub.f32 %v597, %v629
        %v662 = vsub.f32 %v598, %v630
        %v663 = vsub.f32 %v599, %v631
        %v664 = vsub.f32 %v600, %v632
        %v665 = vsub.f32 %v601, %v633
        %v666 = vsub.f32 %v602, %v634
        %v667 = vsub.f32 %v603, %v635
        %v668 = vsub.f32 %v604, %v636
        %v669 = vsub.f32 %v605, %v637
        %v670 = vsub.f32 %v606, %v638
        %v671 = vsub.f32 %v607, %v639
        %v672 = vsub.f32 %v608, %v640
        %v673 = vsub.f32 %v609, %v641
        %v674 = vsub.f32 %v610, %v642
        %v675 = vsub.f32 %v611, %v643
        %v676 = vsub.f32 %v612, %v644
        %v677 = vsub.f32 %v613, %v645
        %v678 = vsub.f32 %v614, %v646
        %v679 = vmax.f32 %v647, 0.0
        %v680 = vmax.f32 %v648, 0.0
        %v681 = vmax.f32 %v649, 0.0
        %v682 = vmax.f32 %v650, 0.0
        %v683 = vmax.f32 %v651, 0.0
        %v684 = vmax.f32 %v652, 0.0
        %v685 = vmax.f32 %v653, 0.0
        %v686 = vmax.f32 %v654, 0.0
        %v687 = vmax.f32 %v655, 0.0
        %v688 = vmax.f32 %v656, 0.0
        %v689 = vmax.f32 %v657, 0.0
        %v690 = vmax.f32 %v658, 0.0
        %v691 = vmax.f32 %v659, 0.0
        %v692 = vmax.f32 %v660, 0.0
        %v693 = vmax.f32 %v661, 0.0
        %v694 = vmax.f32 %v662, 0.0
        %v695 = vmax.f32 %v663, 0.0
        %v696 = vmax.f32 %v664, 0.0
        %v697 = vmax.f32 %v665, 0.0
        %v698 = vmax.f32 %v666, 0.0
        %v699 = vmax.f32 %v667, 0.0
        %v700 = vmax.f32 %v668, 0.0
        %v701 = vmax.f32 %v669, 0.0
        %v702 = vmax.f32 %v670, 0.0
        %v703 = vmax.f32 %v671, 0.0
        %v704 = vmax.f32 %v672, 0.0
        %v705 = vmax.f32 %v673, 0.0
        %v706 = vmax.f32 %v674, 0.0
        %v707 = vmax.f32 %v675, 0.0
        %v708 = vmax.f32 %v676, 0.0
        %v709 = vmax.f32 %v677, 0.0
        %v710 = vmax.f32 %v678, 0.0
        %v711 = vmin.f32 %v679, 3e+38
        %v712 = vmin.f32 %v680, 3e+38
        %v713 = vmin.f32 %v681, 3e+38
        %v714 = vmin.f32 %v682, 3e+38
        %v715 = vmin.f32 %v683, 3e+38
        %v716 = vmin.f32 %v684, 3e+38
        %v717 = vmin.f32 %v685, 3e+38
        %v718 = vmin.f32 %v686, 3e+38
        %v719 = vmin.f32 %v687, 3e+38
        %v720 = vmin.f32 %v688, 3e+38
        %v721 = vmin.f32 %v689, 3e+38
        %v722 = vmin.f32 %v690, 3e+38
        %v723 = vmin.f32 %v691, 3e+38
        %v724 = vmin.f32 %v692, 3e+38
        %v725 = vmin.f32 %v693, 3e+38
        %v726 = vmin.f32 %v694, 3e+38
        %v727 = vmin.f32 %v695, 3e+38
        %v728 = vmin.f32 %v696, 3e+38
        %v729 = vmin.f32 %v697, 3e+38
        %v730 = vmin.f32 %v698, 3e+38
        %v731 = vmin.f32 %v699, 3e+38
        %v732 = vmin.f32 %v700, 3e+38
        %v733 = vmin.f32 %v701, 3e+38
        %v734 = vmin.f32 %v702, 3e+38
        %v735 = vmin.f32 %v703, 3e+38
        %v736 = vmin.f32 %v704, 3e+38
        %v737 = vmin.f32 %v705, 3e+38
        %v738 = vmin.f32 %v706, 3e+38
        %v739 = vmin.f32 %v707, 3e+38
        %v740 = vmin.f32 %v708, 3e+38
        %v741 = vmin.f32 %v709, 3e+38
        %v742 = vmin.f32 %v710, 3e+38
        %v743 = vlaneseq
        %v744 = vand.u32 %v743, 127
        %v745 = vadd.s32 %v744, 128
        %v746 = vlaneseq
        %v747 = vshrl.u32 %v746, 7
        %v748 = vadd.s32 %v747, 8
        %v749 = vadd.s32 %v747, 16
        %v750 = vadd.s32 %v747, 24
        %v751 = vadd.s32 %v747, 32
        %v752 = vadd.s32 %v747, 40
        %v753 = vadd.s32 %v747, 48
        %v754 = vadd.s32 %v747, 56
        %v755 = vadd.s32 %v747, 64
        %v756 = vadd.s32 %v747, 72
        %v757 = vadd.s32 %v747, 80
        %v758 = vadd.s32 %v747, 88
        %v759 = vadd.s32 %v747, 96
        %v760 = vadd.s32 %v747, 104
        %v761 = vadd.s32 %v747, 112
        %v762 = vadd.s32 %v747, 120
        %v763 = vstv %s151
        %v764 = vadd.s32 %v747, %v763
        %v765 = vadd.s32 %v748, %v763
        %v766 = vadd.s32 %v749, %v763
        %v767 = vadd.s32 %v750, %v763
        %v768 = vadd.s32 %v751, %v763
        %v769 = vadd.s32 %v752, %v763
        %v770 = vadd.s32 %v753, %v763
        %v771 = vadd.s32 %v754, %v763
        %v772 = vadd.s32 %v755, %v763
        %v773 = vadd.s32 %v756, %v763
        %v774 = vadd.s32 %v757, %v763
        %v775 = vadd.s32 %v758, %v763
        %v776 = vadd.s32 %v759, %v763
        %v777 = vadd.s32 %v760, %v763
        %v778 = vadd.s32 %v761, %v763
        %v779 = vadd.s32 %v762, %v763
        %v812 = vand.u32 %v711, 4294967040
        %v813 = vand.u32 %v712, 4294967040
        %v814 = vand.u32 %v713, 4294967040
        %v815 = vand.u32 %v714, 4294967040
        %v816 = vand.u32 %v715, 4294967040
        %v817 = vand.u32 %v716, 4294967040
        %v818 = vand.u32 %v717, 4294967040
        %v819 = vand.u32 %v718, 4294967040
        %v820 = vand.u32 %v719, 4294967040
        %v821 = vand.u32 %v720, 4294967040
        %v822 = vand.u32 %v721, 4294967040
        %v823 = vand.u32 %v722, 4294967040
        %v824 = vand.u32 %v723, 4294967040
        %v825 = vand.u32 %v724, 4294967040
        %v826 = vand.u32 %v725, 4294967040
        %v827 = vand.u32 %v726, 4294967040
        %v828 = vand.u32 %v727, 4294967040
        %v829 = vand.u32 %v728, 4294967040
        %v830 = vand.u32 %v729, 4294967040
        %v831 = vand.u32 %v730, 4294967040
        %v832 = vand.u32 %v731, 4294967040
        %v833 = vand.u32 %v732, 4294967040
        %v834 = vand.u32 %v733, 4294967040
        %v835 = vand.u32 %v734, 4294967040
        %v836 = vand.u32 %v735, 4294967040
        %v837 = vand.u32 %v736, 4294967040
        %v838 = vand.u32 %v737, 4294967040
        %v839 = vand.u32 %v738, 4294967040
        %v840 = vand.u32 %v739, 4294967040
        %v841 = vand.u32 %v740, 4294967040
        %v842 = vand.u32 %v741, 4294967040
        %v843 = vand.u32 %v742, 4294967040
        %v844 = vor.u32 %v812, %v744
        %v845 = vor.u32 %v813, %v745
        %v846 = vor.u32 %v814, %v744
        %v847 = vor.u32 %v815, %v745
        %v848 = vor.u32 %v816, %v744
        %v849 = vor.u32 %v817, %v745
        %v850 = vor.u32 %v818, %v744
        %v851 = vor.u32 %v819, %v745
        %v852 = vor.u32 %v820, %v744
        %v853 = vor.u32 %v821, %v745
        %v854 = vor.u32 %v822, %v744
        %v855 = vor.u32 %v823, %v745
        %v856 = vor.u32 %v824, %v744
        %v857 = vor.u32 %v825, %v745
        %v858 = vor.u32 %v826, %v744
        %v859 = vor.u32 %v827, %v745
        %v860 = vor.u32 %v828, %v744
        %v861 = vor.u32 %v829, %v745
        %v862 = vor.u32 %v830, %v744
        %v863 = vor.u32 %v831, %v745
        %v864 = vor.u32 %v832, %v744
        %v865 = vor.u32 %v833, %v745
        %v866 = vor.u32 %v834, %v744
        %v867 = vor.u32 %v835, %v745
        %v868 = vor.u32 %v836, %v744
        %v869 = vor.u32 %v837, %v745
        %v870 = vor.u32 %v838, %v744
        %v871 = vor.u32 %v839, %v745
        %v872 = vor.u32 %v840, %v744
        %v873 = vor.u32 %v841, %v745
        %v874 = vor.u32 %v842, %v744
        %v875 = vor.u32 %v843, %v745
        %vm908 = vcmp.eq.s32.totalorder %v744, %v764
        %vm909 = vcmp.eq.s32.totalorder %v745, %v764
        %vm910 = vcmp.eq.s32.totalorder %v744, %v765
        %vm911 = vcmp.eq.s32.totalorder %v745, %v765
        %vm912 = vcmp.eq.s32.totalorder %v744, %v766
        %vm913 = vcmp.eq.s32.totalorder %v745, %v766
        %vm914 = vcmp.eq.s32.totalorder %v744, %v767
        %vm915 = vcmp.eq.s32.totalorder %v745, %v767
        %vm916 = vcmp.eq.s32.totalorder %v744, %v768
        %vm917 = vcmp.eq.s32.totalorder %v745, %v768
        %vm918 = vcmp.eq.s32.totalorder %v744, %v769
        %vm919 = vcmp.eq.s32.totalorder %v745, %v769
        %vm920 = vcmp.eq.s32.totalorder %v744, %v770
        %vm921 = vcmp.eq.s32.totalorder %v745, %v770
        %vm922 = vcmp.eq.s32.totalorder %v744, %v771
        %vm923 = vcmp.eq.s32.totalorder %v745, %v771
        %vm924 = vcmp.eq.s32.totalorder %v744, %v772
        %vm925 = vcmp.eq.s32.totalorder %v745, %v772
        %vm926 = vcmp.eq.s32.totalorder %v744, %v773
        %vm927 = vcmp.eq.s32.totalorder %v745, %v773
        %vm928 = vcmp.eq.s32.totalorder %v744, %v774
        %vm929 = vcmp.eq.s32.totalorder %v745, %v774
        %vm930 = vcmp.eq.s32.totalorder %v744, %v775
        %vm931 = vcmp.eq.s32.totalorder %v745, %v775
        %vm932 = vcmp.eq.s32.totalorder %v744, %v776
        %vm933 = vcmp.eq.s32.totalorder %v745, %v776
        %vm934 = vcmp.eq.s32.totalorder %v744, %v777
        %vm935 = vcmp.eq.s32.totalorder %v745, %v777
        %vm936 = vcmp.eq.s32.totalorder %v744, %v778
        %vm937 = vcmp.eq.s32.totalorder %v745, %v778
        %vm938 = vcmp.eq.s32.totalorder %v744, %v779
        %vm939 = vcmp.eq.s32.totalorder %v745, %v779
        %v940 = vsel %vm908, 3.4028235e+38, %v844
        %v941 = vsel %vm909, 3.4028235e+38, %v845
        %v942 = vsel %vm910, 3.4028235e+38, %v846
        %v943 = vsel %vm911, 3.4028235e+38, %v847
        %v944 = vsel %vm912, 3.4028235e+38, %v848
        %v945 = vsel %vm913, 3.4028235e+38, %v849
        %v946 = vsel %vm914, 3.4028235e+38, %v850
        %v947 = vsel %vm915, 3.4028235e+38, %v851
        %v948 = vsel %vm916, 3.4028235e+38, %v852
        %v949 = vsel %vm917, 3.4028235e+38, %v853
        %v950 = vsel %vm918, 3.4028235e+38, %v854
        %v951 = vsel %vm919, 3.4028235e+38, %v855
        %v952 = vsel %vm920, 3.4028235e+38, %v856
        %v953 = vsel %vm921, 3.4028235e+38, %v857
        %v954 = vsel %vm922, 3.4028235e+38, %v858
        %v955 = vsel %vm923, 3.4028235e+38, %v859
        %v956 = vsel %vm924, 3.4028235e+38, %v860
        %v957 = vsel %vm925, 3.4028235e+38, %v861
        %v958 = vsel %vm926, 3.4028235e+38, %v862
        %v959 = vsel %vm927, 3.4028235e+38, %v863
        %v960 = vsel %vm928, 3.4028235e+38, %v864
        %v961 = vsel %vm929, 3.4028235e+38, %v865
        %v962 = vsel %vm930, 3.4028235e+38, %v866
        %v963 = vsel %vm931, 3.4028235e+38, %v867
        %v964 = vsel %vm932, 3.4028235e+38, %v868
        %v965 = vsel %vm933, 3.4028235e+38, %v869
        %v966 = vsel %vm934, 3.4028235e+38, %v870
        %v967 = vsel %vm935, 3.4028235e+38, %v871
        %v968 = vsel %vm936, 3.4028235e+38, %v872
        %v969 = vsel %vm937, 3.4028235e+38, %v873
        %v970 = vsel %vm938, 3.4028235e+38, %v874
        %v971 = vsel %vm939, 3.4028235e+38, %v875
        %v972 = vmin.f32 %v940, %v941
        %973 = vmin.xlane.f32.xlu0 %v972
        %v974 = vpop.xlane.xlu0 %973
        %v975 = vmin.f32 %v942, %v943
        %976 = vmin.xlane.f32.xlu0 %v975
        %v977 = vpop.xlane.xlu0 %976
        %v978 = vmin.f32 %v944, %v945
        %979 = vmin.xlane.f32.xlu0 %v978
        %v980 = vpop.xlane.xlu0 %979
        %v981 = vmin.f32 %v946, %v947
        %982 = vmin.xlane.f32.xlu0 %v981
        %v983 = vpop.xlane.xlu0 %982
        %v984 = vmin.f32 %v948, %v949
        %985 = vmin.xlane.f32.xlu0 %v984
        %v986 = vpop.xlane.xlu0 %985
        %v987 = vmin.f32 %v950, %v951
        %988 = vmin.xlane.f32.xlu0 %v987
        %v989 = vpop.xlane.xlu0 %988
        %v990 = vmin.f32 %v952, %v953
        %991 = vmin.xlane.f32.xlu0 %v990
        %v992 = vpop.xlane.xlu0 %991
        %v993 = vmin.f32 %v954, %v955
        %994 = vmin.xlane.f32.xlu0 %v993
        %v995 = vpop.xlane.xlu0 %994
        %v996 = vmin.f32 %v956, %v957
        %997 = vmin.xlane.f32.xlu0 %v996
        %v998 = vpop.xlane.xlu0 %997
        %v999 = vmin.f32 %v958, %v959
        %1000 = vmin.xlane.f32.xlu0 %v999
        %v1001 = vpop.xlane.xlu0 %1000
        %v1002 = vmin.f32 %v960, %v961
        %1003 = vmin.xlane.f32.xlu0 %v1002
        %v1004 = vpop.xlane.xlu0 %1003
        %v1005 = vmin.f32 %v962, %v963
        %1006 = vmin.xlane.f32.xlu0 %v1005
        %v1007 = vpop.xlane.xlu0 %1006
        %v1008 = vmin.f32 %v964, %v965
        %1009 = vmin.xlane.f32.xlu0 %v1008
        %v1010 = vpop.xlane.xlu0 %1009
        %v1011 = vmin.f32 %v966, %v967
        %1012 = vmin.xlane.f32.xlu0 %v1011
        %v1013 = vpop.xlane.xlu0 %1012
        %v1014 = vmin.f32 %v968, %v969
        %1015 = vmin.xlane.f32.xlu0 %v1014
        %v1016 = vpop.xlane.xlu0 %1015
        %v1017 = vmin.f32 %v970, %v971
        %1018 = vmin.xlane.f32.xlu0 %v1017
        %v1019 = vpop.xlane.xlu0 %1018
        %vm1020 = vcmp.eq.f32.partialorder %v940, %v974
        %vm1021 = vcmp.eq.f32.partialorder %v941, %v974
        %vm1022 = vcmp.eq.f32.partialorder %v942, %v977
        %vm1023 = vcmp.eq.f32.partialorder %v943, %v977
        %vm1024 = vcmp.eq.f32.partialorder %v944, %v980
        %vm1025 = vcmp.eq.f32.partialorder %v945, %v980
        %vm1026 = vcmp.eq.f32.partialorder %v946, %v983
        %vm1027 = vcmp.eq.f32.partialorder %v947, %v983
        %vm1028 = vcmp.eq.f32.partialorder %v948, %v986
        %vm1029 = vcmp.eq.f32.partialorder %v949, %v986
        %vm1030 = vcmp.eq.f32.partialorder %v950, %v989
        %vm1031 = vcmp.eq.f32.partialorder %v951, %v989
        %vm1032 = vcmp.eq.f32.partialorder %v952, %v992
        %vm1033 = vcmp.eq.f32.partialorder %v953, %v992
        %vm1034 = vcmp.eq.f32.partialorder %v954, %v995
        %vm1035 = vcmp.eq.f32.partialorder %v955, %v995
        %vm1036 = vcmp.eq.f32.partialorder %v956, %v998
        %vm1037 = vcmp.eq.f32.partialorder %v957, %v998
        %vm1038 = vcmp.eq.f32.partialorder %v958, %v1001
        %vm1039 = vcmp.eq.f32.partialorder %v959, %v1001
        %vm1040 = vcmp.eq.f32.partialorder %v960, %v1004
        %vm1041 = vcmp.eq.f32.partialorder %v961, %v1004
        %vm1042 = vcmp.eq.f32.partialorder %v962, %v1007
        %vm1043 = vcmp.eq.f32.partialorder %v963, %v1007
        %vm1044 = vcmp.eq.f32.partialorder %v964, %v1010
        %vm1045 = vcmp.eq.f32.partialorder %v965, %v1010
        %vm1046 = vcmp.eq.f32.partialorder %v966, %v1013
        %vm1047 = vcmp.eq.f32.partialorder %v967, %v1013
        %vm1048 = vcmp.eq.f32.partialorder %v968, %v1016
        %vm1049 = vcmp.eq.f32.partialorder %v969, %v1016
        %vm1050 = vcmp.eq.f32.partialorder %v970, %v1019
        %vm1051 = vcmp.eq.f32.partialorder %v971, %v1019
        %v1052 = vsel %vm1020, 3.4028235e+38, %v940
        %v1053 = vsel %vm1021, 3.4028235e+38, %v941
        %v1054 = vsel %vm1022, 3.4028235e+38, %v942
        %v1055 = vsel %vm1023, 3.4028235e+38, %v943
        %v1056 = vsel %vm1024, 3.4028235e+38, %v944
        %v1057 = vsel %vm1025, 3.4028235e+38, %v945
        %v1058 = vsel %vm1026, 3.4028235e+38, %v946
        %v1059 = vsel %vm1027, 3.4028235e+38, %v947
        %v1060 = vsel %vm1028, 3.4028235e+38, %v948
        %v1061 = vsel %vm1029, 3.4028235e+38, %v949
        %v1062 = vsel %vm1030, 3.4028235e+38, %v950
        %v1063 = vsel %vm1031, 3.4028235e+38, %v951
        %v1064 = vsel %vm1032, 3.4028235e+38, %v952
        %v1065 = vsel %vm1033, 3.4028235e+38, %v953
        %v1066 = vsel %vm1034, 3.4028235e+38, %v954
        %v1067 = vsel %vm1035, 3.4028235e+38, %v955
        %v1068 = vsel %vm1036, 3.4028235e+38, %v956
        %v1069 = vsel %vm1037, 3.4028235e+38, %v957
        %v1070 = vsel %vm1038, 3.4028235e+38, %v958
        %v1071 = vsel %vm1039, 3.4028235e+38, %v959
        %v1072 = vsel %vm1040, 3.4028235e+38, %v960
        %v1073 = vsel %vm1041, 3.4028235e+38, %v961
        %v1074 = vsel %vm1042, 3.4028235e+38, %v962
        %v1075 = vsel %vm1043, 3.4028235e+38, %v963
        %v1076 = vsel %vm1044, 3.4028235e+38, %v964
        %v1077 = vsel %vm1045, 3.4028235e+38, %v965
        %v1078 = vsel %vm1046, 3.4028235e+38, %v966
        %v1079 = vsel %vm1047, 3.4028235e+38, %v967
        %v1080 = vsel %vm1048, 3.4028235e+38, %v968
        %v1081 = vsel %vm1049, 3.4028235e+38, %v969
        %v1082 = vsel %vm1050, 3.4028235e+38, %v970
        %v1083 = vsel %vm1051, 3.4028235e+38, %v971
        %v1100 = vand.u32 %v974, 4294967040
        %v1101 = vand.u32 %v977, 4294967040
        %v1102 = vand.u32 %v980, 4294967040
        %v1103 = vand.u32 %v983, 4294967040
        %v1104 = vand.u32 %v986, 4294967040
        %v1105 = vand.u32 %v989, 4294967040
        %v1106 = vand.u32 %v992, 4294967040
        %v1107 = vand.u32 %v995, 4294967040
        %v1108 = vand.u32 %v998, 4294967040
        %v1109 = vand.u32 %v1001, 4294967040
        %v1110 = vand.u32 %v1004, 4294967040
        %v1111 = vand.u32 %v1007, 4294967040
        %v1112 = vand.u32 %v1010, 4294967040
        %v1113 = vand.u32 %v1013, 4294967040
        %v1114 = vand.u32 %v1016, 4294967040
        %v1115 = vand.u32 %v1019, 4294967040
        %v1132 = vrsqrt.pop %v1100
        %v1133 = vmul.f32 %v1100, %v1132
        %vm1134 = vcmp.eq.f32.partialorder %v1100, inf
        %v1135 = vsel %vm1134, %v1100, %v1133
        %vm1136 = vcmp.eq.f32.partialorder %v1100, 0.0
        %v1137 = vand.u32 %v1100, 2147483648
        %v1138 = vsel %vm1136, %v1137, %v1135
        %v1139 = vrsqrt.pop %v1101
        %v1140 = vmul.f32 %v1101, %v1139
        %vm1141 = vcmp.eq.f32.partialorder %v1101, inf
        %v1142 = vsel %vm1141, %v1101, %v1140
        %vm1143 = vcmp.eq.f32.partialorder %v1101, 0.0
        %v1144 = vand.u32 %v1101, 2147483648
        %v1145 = vsel %vm1143, %v1144, %v1142
        %v1146 = vrsqrt.pop %v1102
        %v1147 = vmul.f32 %v1102, %v1146
        %vm1148 = vcmp.eq.f32.partialorder %v1102, inf
        %v1149 = vsel %vm1148, %v1102, %v1147
        %vm1150 = vcmp.eq.f32.partialorder %v1102, 0.0
        %v1151 = vand.u32 %v1102, 2147483648
        %v1152 = vsel %vm1150, %v1151, %v1149
        %v1153 = vrsqrt.pop %v1103
        %v1154 = vmul.f32 %v1103, %v1153
        %vm1155 = vcmp.eq.f32.partialorder %v1103, inf
        %v1156 = vsel %vm1155, %v1103, %v1154
        %vm1157 = vcmp.eq.f32.partialorder %v1103, 0.0
        %v1158 = vand.u32 %v1103, 2147483648
        %v1159 = vsel %vm1157, %v1158, %v1156
        %v1160 = vrsqrt.pop %v1104
        %v1161 = vmul.f32 %v1104, %v1160
        %vm1162 = vcmp.eq.f32.partialorder %v1104, inf
        %v1163 = vsel %vm1162, %v1104, %v1161
        %vm1164 = vcmp.eq.f32.partialorder %v1104, 0.0
        %v1165 = vand.u32 %v1104, 2147483648
        %v1166 = vsel %vm1164, %v1165, %v1163
        %v1167 = vrsqrt.pop %v1105
        %v1168 = vmul.f32 %v1105, %v1167
        %vm1169 = vcmp.eq.f32.partialorder %v1105, inf
        %v1170 = vsel %vm1169, %v1105, %v1168
        %vm1171 = vcmp.eq.f32.partialorder %v1105, 0.0
        %v1172 = vand.u32 %v1105, 2147483648
        %v1173 = vsel %vm1171, %v1172, %v1170
        %v1174 = vrsqrt.pop %v1106
        %v1175 = vmul.f32 %v1106, %v1174
        %vm1176 = vcmp.eq.f32.partialorder %v1106, inf
        %v1177 = vsel %vm1176, %v1106, %v1175
        %vm1178 = vcmp.eq.f32.partialorder %v1106, 0.0
        %v1179 = vand.u32 %v1106, 2147483648
        %v1180 = vsel %vm1178, %v1179, %v1177
        %v1181 = vrsqrt.pop %v1107
        %v1182 = vmul.f32 %v1107, %v1181
        %vm1183 = vcmp.eq.f32.partialorder %v1107, inf
        %v1184 = vsel %vm1183, %v1107, %v1182
        %vm1185 = vcmp.eq.f32.partialorder %v1107, 0.0
        %v1186 = vand.u32 %v1107, 2147483648
        %v1187 = vsel %vm1185, %v1186, %v1184
        %v1188 = vrsqrt.pop %v1108
        %v1189 = vmul.f32 %v1108, %v1188
        %vm1190 = vcmp.eq.f32.partialorder %v1108, inf
        %v1191 = vsel %vm1190, %v1108, %v1189
        %vm1192 = vcmp.eq.f32.partialorder %v1108, 0.0
        %v1193 = vand.u32 %v1108, 2147483648
        %v1194 = vsel %vm1192, %v1193, %v1191
        %v1195 = vrsqrt.pop %v1109
        %v1196 = vmul.f32 %v1109, %v1195
        %vm1197 = vcmp.eq.f32.partialorder %v1109, inf
        %v1198 = vsel %vm1197, %v1109, %v1196
        %vm1199 = vcmp.eq.f32.partialorder %v1109, 0.0
        %v1200 = vand.u32 %v1109, 2147483648
        %v1201 = vsel %vm1199, %v1200, %v1198
        %v1202 = vrsqrt.pop %v1110
        %v1203 = vmul.f32 %v1110, %v1202
        %vm1204 = vcmp.eq.f32.partialorder %v1110, inf
        %v1205 = vsel %vm1204, %v1110, %v1203
        %vm1206 = vcmp.eq.f32.partialorder %v1110, 0.0
        %v1207 = vand.u32 %v1110, 2147483648
        %v1208 = vsel %vm1206, %v1207, %v1205
        %v1209 = vrsqrt.pop %v1111
        %v1210 = vmul.f32 %v1111, %v1209
        %vm1211 = vcmp.eq.f32.partialorder %v1111, inf
        %v1212 = vsel %vm1211, %v1111, %v1210
        %vm1213 = vcmp.eq.f32.partialorder %v1111, 0.0
        %v1214 = vand.u32 %v1111, 2147483648
        %v1215 = vsel %vm1213, %v1214, %v1212
        %v1216 = vrsqrt.pop %v1112
        %v1217 = vmul.f32 %v1112, %v1216
        %vm1218 = vcmp.eq.f32.partialorder %v1112, inf
        %v1219 = vsel %vm1218, %v1112, %v1217
        %vm1220 = vcmp.eq.f32.partialorder %v1112, 0.0
        %v1221 = vand.u32 %v1112, 2147483648
        %v1222 = vsel %vm1220, %v1221, %v1219
        %v1223 = vrsqrt.pop %v1113
        %v1224 = vmul.f32 %v1113, %v1223
        %vm1225 = vcmp.eq.f32.partialorder %v1113, inf
        %v1226 = vsel %vm1225, %v1113, %v1224
        %vm1227 = vcmp.eq.f32.partialorder %v1113, 0.0
        %v1228 = vand.u32 %v1113, 2147483648
        %v1229 = vsel %vm1227, %v1228, %v1226
        %v1230 = vrsqrt.pop %v1114
        %v1231 = vmul.f32 %v1114, %v1230
        %vm1232 = vcmp.eq.f32.partialorder %v1114, inf
        %v1233 = vsel %vm1232, %v1114, %v1231
        %vm1234 = vcmp.eq.f32.partialorder %v1114, 0.0
        %v1235 = vand.u32 %v1114, 2147483648
        %v1236 = vsel %vm1234, %v1235, %v1233
        %v1237 = vrsqrt.pop %v1115
        %v1238 = vmul.f32 %v1115, %v1237
        %vm1239 = vcmp.eq.f32.partialorder %v1115, inf
        %v1240 = vsel %vm1239, %v1115, %v1238
        %vm1241 = vcmp.eq.f32.partialorder %v1115, 0.0
        %v1242 = vand.u32 %v1115, 2147483648
        %v1243 = vsel %vm1241, %v1242, %v1240
        %v1244 = vadd.f32 %v1138, 0.0
        %v1245 = vadd.f32 %v1145, 0.0
        %v1246 = vadd.f32 %v1152, 0.0
        %v1247 = vadd.f32 %v1159, 0.0
        %v1248 = vadd.f32 %v1166, 0.0
        %v1249 = vadd.f32 %v1173, 0.0
        %v1250 = vadd.f32 %v1180, 0.0
        %v1251 = vadd.f32 %v1187, 0.0
        %v1252 = vadd.f32 %v1194, 0.0
        %v1253 = vadd.f32 %v1201, 0.0
        %v1254 = vadd.f32 %v1208, 0.0
        %v1255 = vadd.f32 %v1215, 0.0
        %v1256 = vadd.f32 %v1222, 0.0
        %v1257 = vadd.f32 %v1229, 0.0
        %v1258 = vadd.f32 %v1236, 0.0
        %v1259 = vadd.f32 %v1243, 0.0
        %v1260 = vmin.f32 %v1052, %v1053
        %1261 = vmin.xlane.f32.xlu0 %v1260
        %v1262 = vpop.xlane.xlu0 %1261
        %v1263 = vmin.f32 %v1054, %v1055
        %1264 = vmin.xlane.f32.xlu0 %v1263
        %v1265 = vpop.xlane.xlu0 %1264
        %v1266 = vmin.f32 %v1056, %v1057
        %1267 = vmin.xlane.f32.xlu0 %v1266
        %v1268 = vpop.xlane.xlu0 %1267
        %v1269 = vmin.f32 %v1058, %v1059
        %1270 = vmin.xlane.f32.xlu0 %v1269
        %v1271 = vpop.xlane.xlu0 %1270
        %v1272 = vmin.f32 %v1060, %v1061
        %1273 = vmin.xlane.f32.xlu0 %v1272
        %v1274 = vpop.xlane.xlu0 %1273
        %v1275 = vmin.f32 %v1062, %v1063
        %1276 = vmin.xlane.f32.xlu0 %v1275
        %v1277 = vpop.xlane.xlu0 %1276
        %v1278 = vmin.f32 %v1064, %v1065
        %1279 = vmin.xlane.f32.xlu0 %v1278
        %v1280 = vpop.xlane.xlu0 %1279
        %v1281 = vmin.f32 %v1066, %v1067
        %1282 = vmin.xlane.f32.xlu0 %v1281
        %v1283 = vpop.xlane.xlu0 %1282
        %v1284 = vmin.f32 %v1068, %v1069
        %1285 = vmin.xlane.f32.xlu0 %v1284
        %v1286 = vpop.xlane.xlu0 %1285
        %v1287 = vmin.f32 %v1070, %v1071
        %1288 = vmin.xlane.f32.xlu0 %v1287
        %v1289 = vpop.xlane.xlu0 %1288
        %v1290 = vmin.f32 %v1072, %v1073
        %1291 = vmin.xlane.f32.xlu0 %v1290
        %v1292 = vpop.xlane.xlu0 %1291
        %v1293 = vmin.f32 %v1074, %v1075
        %1294 = vmin.xlane.f32.xlu0 %v1293
        %v1295 = vpop.xlane.xlu0 %1294
        %v1296 = vmin.f32 %v1076, %v1077
        %1297 = vmin.xlane.f32.xlu0 %v1296
        %v1298 = vpop.xlane.xlu0 %1297
        %v1299 = vmin.f32 %v1078, %v1079
        %1300 = vmin.xlane.f32.xlu0 %v1299
        %v1301 = vpop.xlane.xlu0 %1300
        %v1302 = vmin.f32 %v1080, %v1081
        %1303 = vmin.xlane.f32.xlu0 %v1302
        %v1304 = vpop.xlane.xlu0 %1303
        %v1305 = vmin.f32 %v1082, %v1083
        %1306 = vmin.xlane.f32.xlu0 %v1305
        %v1307 = vpop.xlane.xlu0 %1306
        %vm1308 = vcmp.eq.f32.partialorder %v1052, %v1262
        %vm1309 = vcmp.eq.f32.partialorder %v1053, %v1262
        %vm1310 = vcmp.eq.f32.partialorder %v1054, %v1265
        %vm1311 = vcmp.eq.f32.partialorder %v1055, %v1265
        %vm1312 = vcmp.eq.f32.partialorder %v1056, %v1268
        %vm1313 = vcmp.eq.f32.partialorder %v1057, %v1268
        %vm1314 = vcmp.eq.f32.partialorder %v1058, %v1271
        %vm1315 = vcmp.eq.f32.partialorder %v1059, %v1271
        %vm1316 = vcmp.eq.f32.partialorder %v1060, %v1274
        %vm1317 = vcmp.eq.f32.partialorder %v1061, %v1274
        %vm1318 = vcmp.eq.f32.partialorder %v1062, %v1277
        %vm1319 = vcmp.eq.f32.partialorder %v1063, %v1277
        %vm1320 = vcmp.eq.f32.partialorder %v1064, %v1280
        %vm1321 = vcmp.eq.f32.partialorder %v1065, %v1280
        %vm1322 = vcmp.eq.f32.partialorder %v1066, %v1283
        %vm1323 = vcmp.eq.f32.partialorder %v1067, %v1283
        %vm1324 = vcmp.eq.f32.partialorder %v1068, %v1286
        %vm1325 = vcmp.eq.f32.partialorder %v1069, %v1286
        %vm1326 = vcmp.eq.f32.partialorder %v1070, %v1289
        %vm1327 = vcmp.eq.f32.partialorder %v1071, %v1289
        %vm1328 = vcmp.eq.f32.partialorder %v1072, %v1292
        %vm1329 = vcmp.eq.f32.partialorder %v1073, %v1292
        %vm1330 = vcmp.eq.f32.partialorder %v1074, %v1295
        %vm1331 = vcmp.eq.f32.partialorder %v1075, %v1295
        %vm1332 = vcmp.eq.f32.partialorder %v1076, %v1298
        %vm1333 = vcmp.eq.f32.partialorder %v1077, %v1298
        %vm1334 = vcmp.eq.f32.partialorder %v1078, %v1301
        %vm1335 = vcmp.eq.f32.partialorder %v1079, %v1301
        %vm1336 = vcmp.eq.f32.partialorder %v1080, %v1304
        %vm1337 = vcmp.eq.f32.partialorder %v1081, %v1304
        %vm1338 = vcmp.eq.f32.partialorder %v1082, %v1307
        %vm1339 = vcmp.eq.f32.partialorder %v1083, %v1307
        %v1340 = vsel %vm1308, 3.4028235e+38, %v1052
        %v1341 = vsel %vm1309, 3.4028235e+38, %v1053
        %v1342 = vsel %vm1310, 3.4028235e+38, %v1054
        %v1343 = vsel %vm1311, 3.4028235e+38, %v1055
        %v1344 = vsel %vm1312, 3.4028235e+38, %v1056
        %v1345 = vsel %vm1313, 3.4028235e+38, %v1057
        %v1346 = vsel %vm1314, 3.4028235e+38, %v1058
        %v1347 = vsel %vm1315, 3.4028235e+38, %v1059
        %v1348 = vsel %vm1316, 3.4028235e+38, %v1060
        %v1349 = vsel %vm1317, 3.4028235e+38, %v1061
        %v1350 = vsel %vm1318, 3.4028235e+38, %v1062
        %v1351 = vsel %vm1319, 3.4028235e+38, %v1063
        %v1352 = vsel %vm1320, 3.4028235e+38, %v1064
        %v1353 = vsel %vm1321, 3.4028235e+38, %v1065
        %v1354 = vsel %vm1322, 3.4028235e+38, %v1066
        %v1355 = vsel %vm1323, 3.4028235e+38, %v1067
        %v1356 = vsel %vm1324, 3.4028235e+38, %v1068
        %v1357 = vsel %vm1325, 3.4028235e+38, %v1069
        %v1358 = vsel %vm1326, 3.4028235e+38, %v1070
        %v1359 = vsel %vm1327, 3.4028235e+38, %v1071
        %v1360 = vsel %vm1328, 3.4028235e+38, %v1072
        %v1361 = vsel %vm1329, 3.4028235e+38, %v1073
        %v1362 = vsel %vm1330, 3.4028235e+38, %v1074
        %v1363 = vsel %vm1331, 3.4028235e+38, %v1075
        %v1364 = vsel %vm1332, 3.4028235e+38, %v1076
        %v1365 = vsel %vm1333, 3.4028235e+38, %v1077
        %v1366 = vsel %vm1334, 3.4028235e+38, %v1078
        %v1367 = vsel %vm1335, 3.4028235e+38, %v1079
        %v1368 = vsel %vm1336, 3.4028235e+38, %v1080
        %v1369 = vsel %vm1337, 3.4028235e+38, %v1081
        %v1370 = vsel %vm1338, 3.4028235e+38, %v1082
        %v1371 = vsel %vm1339, 3.4028235e+38, %v1083
        %v1388 = vand.u32 %v1262, 4294967040
        %v1389 = vand.u32 %v1265, 4294967040
        %v1390 = vand.u32 %v1268, 4294967040
        %v1391 = vand.u32 %v1271, 4294967040
        %v1392 = vand.u32 %v1274, 4294967040
        %v1393 = vand.u32 %v1277, 4294967040
        %v1394 = vand.u32 %v1280, 4294967040
        %v1395 = vand.u32 %v1283, 4294967040
        %v1396 = vand.u32 %v1286, 4294967040
        %v1397 = vand.u32 %v1289, 4294967040
        %v1398 = vand.u32 %v1292, 4294967040
        %v1399 = vand.u32 %v1295, 4294967040
        %v1400 = vand.u32 %v1298, 4294967040
        %v1401 = vand.u32 %v1301, 4294967040
        %v1402 = vand.u32 %v1304, 4294967040
        %v1403 = vand.u32 %v1307, 4294967040
        %v1420 = vrsqrt.pop %v1388
        %v1421 = vmul.f32 %v1388, %v1420
        %vm1422 = vcmp.eq.f32.partialorder %v1388, inf
        %v1423 = vsel %vm1422, %v1388, %v1421
        %vm1424 = vcmp.eq.f32.partialorder %v1388, 0.0
        %v1425 = vand.u32 %v1388, 2147483648
        %v1426 = vsel %vm1424, %v1425, %v1423
        %v1427 = vrsqrt.pop %v1389
        %v1428 = vmul.f32 %v1389, %v1427
        %vm1429 = vcmp.eq.f32.partialorder %v1389, inf
        %v1430 = vsel %vm1429, %v1389, %v1428
        %vm1431 = vcmp.eq.f32.partialorder %v1389, 0.0
        %v1432 = vand.u32 %v1389, 2147483648
        %v1433 = vsel %vm1431, %v1432, %v1430
        %v1434 = vrsqrt.pop %v1390
        %v1435 = vmul.f32 %v1390, %v1434
        %vm1436 = vcmp.eq.f32.partialorder %v1390, inf
        %v1437 = vsel %vm1436, %v1390, %v1435
        %vm1438 = vcmp.eq.f32.partialorder %v1390, 0.0
        %v1439 = vand.u32 %v1390, 2147483648
        %v1440 = vsel %vm1438, %v1439, %v1437
        %v1441 = vrsqrt.pop %v1391
        %v1442 = vmul.f32 %v1391, %v1441
        %vm1443 = vcmp.eq.f32.partialorder %v1391, inf
        %v1444 = vsel %vm1443, %v1391, %v1442
        %vm1445 = vcmp.eq.f32.partialorder %v1391, 0.0
        %v1446 = vand.u32 %v1391, 2147483648
        %v1447 = vsel %vm1445, %v1446, %v1444
        %v1448 = vrsqrt.pop %v1392
        %v1449 = vmul.f32 %v1392, %v1448
        %vm1450 = vcmp.eq.f32.partialorder %v1392, inf
        %v1451 = vsel %vm1450, %v1392, %v1449
        %vm1452 = vcmp.eq.f32.partialorder %v1392, 0.0
        %v1453 = vand.u32 %v1392, 2147483648
        %v1454 = vsel %vm1452, %v1453, %v1451
        %v1455 = vrsqrt.pop %v1393
        %v1456 = vmul.f32 %v1393, %v1455
        %vm1457 = vcmp.eq.f32.partialorder %v1393, inf
        %v1458 = vsel %vm1457, %v1393, %v1456
        %vm1459 = vcmp.eq.f32.partialorder %v1393, 0.0
        %v1460 = vand.u32 %v1393, 2147483648
        %v1461 = vsel %vm1459, %v1460, %v1458
        %v1462 = vrsqrt.pop %v1394
        %v1463 = vmul.f32 %v1394, %v1462
        %vm1464 = vcmp.eq.f32.partialorder %v1394, inf
        %v1465 = vsel %vm1464, %v1394, %v1463
        %vm1466 = vcmp.eq.f32.partialorder %v1394, 0.0
        %v1467 = vand.u32 %v1394, 2147483648
        %v1468 = vsel %vm1466, %v1467, %v1465
        %v1469 = vrsqrt.pop %v1395
        %v1470 = vmul.f32 %v1395, %v1469
        %vm1471 = vcmp.eq.f32.partialorder %v1395, inf
        %v1472 = vsel %vm1471, %v1395, %v1470
        %vm1473 = vcmp.eq.f32.partialorder %v1395, 0.0
        %v1474 = vand.u32 %v1395, 2147483648
        %v1475 = vsel %vm1473, %v1474, %v1472
        %v1476 = vrsqrt.pop %v1396
        %v1477 = vmul.f32 %v1396, %v1476
        %vm1478 = vcmp.eq.f32.partialorder %v1396, inf
        %v1479 = vsel %vm1478, %v1396, %v1477
        %vm1480 = vcmp.eq.f32.partialorder %v1396, 0.0
        %v1481 = vand.u32 %v1396, 2147483648
        %v1482 = vsel %vm1480, %v1481, %v1479
        %v1483 = vrsqrt.pop %v1397
        %v1484 = vmul.f32 %v1397, %v1483
        %vm1485 = vcmp.eq.f32.partialorder %v1397, inf
        %v1486 = vsel %vm1485, %v1397, %v1484
        %vm1487 = vcmp.eq.f32.partialorder %v1397, 0.0
        %v1488 = vand.u32 %v1397, 2147483648
        %v1489 = vsel %vm1487, %v1488, %v1486
        %v1490 = vrsqrt.pop %v1398
        %v1491 = vmul.f32 %v1398, %v1490
        %vm1492 = vcmp.eq.f32.partialorder %v1398, inf
        %v1493 = vsel %vm1492, %v1398, %v1491
        %vm1494 = vcmp.eq.f32.partialorder %v1398, 0.0
        %v1495 = vand.u32 %v1398, 2147483648
        %v1496 = vsel %vm1494, %v1495, %v1493
        %v1497 = vrsqrt.pop %v1399
        %v1498 = vmul.f32 %v1399, %v1497
        %vm1499 = vcmp.eq.f32.partialorder %v1399, inf
        %v1500 = vsel %vm1499, %v1399, %v1498
        %vm1501 = vcmp.eq.f32.partialorder %v1399, 0.0
        %v1502 = vand.u32 %v1399, 2147483648
        %v1503 = vsel %vm1501, %v1502, %v1500
        %v1504 = vrsqrt.pop %v1400
        %v1505 = vmul.f32 %v1400, %v1504
        %vm1506 = vcmp.eq.f32.partialorder %v1400, inf
        %v1507 = vsel %vm1506, %v1400, %v1505
        %vm1508 = vcmp.eq.f32.partialorder %v1400, 0.0
        %v1509 = vand.u32 %v1400, 2147483648
        %v1510 = vsel %vm1508, %v1509, %v1507
        %v1511 = vrsqrt.pop %v1401
        %v1512 = vmul.f32 %v1401, %v1511
        %vm1513 = vcmp.eq.f32.partialorder %v1401, inf
        %v1514 = vsel %vm1513, %v1401, %v1512
        %vm1515 = vcmp.eq.f32.partialorder %v1401, 0.0
        %v1516 = vand.u32 %v1401, 2147483648
        %v1517 = vsel %vm1515, %v1516, %v1514
        %v1518 = vrsqrt.pop %v1402
        %v1519 = vmul.f32 %v1402, %v1518
        %vm1520 = vcmp.eq.f32.partialorder %v1402, inf
        %v1521 = vsel %vm1520, %v1402, %v1519
        %vm1522 = vcmp.eq.f32.partialorder %v1402, 0.0
        %v1523 = vand.u32 %v1402, 2147483648
        %v1524 = vsel %vm1522, %v1523, %v1521
        %v1525 = vrsqrt.pop %v1403
        %v1526 = vmul.f32 %v1403, %v1525
        %vm1527 = vcmp.eq.f32.partialorder %v1403, inf
        %v1528 = vsel %vm1527, %v1403, %v1526
        %vm1529 = vcmp.eq.f32.partialorder %v1403, 0.0
        %v1530 = vand.u32 %v1403, 2147483648
        %v1531 = vsel %vm1529, %v1530, %v1528
        %v1532 = vadd.f32 %v1244, %v1426
        %v1533 = vadd.f32 %v1245, %v1433
        %v1534 = vadd.f32 %v1246, %v1440
        %v1535 = vadd.f32 %v1247, %v1447
        %v1536 = vadd.f32 %v1248, %v1454
        %v1537 = vadd.f32 %v1249, %v1461
        %v1538 = vadd.f32 %v1250, %v1468
        %v1539 = vadd.f32 %v1251, %v1475
        %v1540 = vadd.f32 %v1252, %v1482
        %v1541 = vadd.f32 %v1253, %v1489
        %v1542 = vadd.f32 %v1254, %v1496
        %v1543 = vadd.f32 %v1255, %v1503
        %v1544 = vadd.f32 %v1256, %v1510
        %v1545 = vadd.f32 %v1257, %v1517
        %v1546 = vadd.f32 %v1258, %v1524
        %v1547 = vadd.f32 %v1259, %v1531
        %v1548 = vmin.f32 %v1340, %v1341
        %1549 = vmin.xlane.f32.xlu0 %v1548
        %v1550 = vpop.xlane.xlu0 %1549
        %v1551 = vmin.f32 %v1342, %v1343
        %1552 = vmin.xlane.f32.xlu0 %v1551
        %v1553 = vpop.xlane.xlu0 %1552
        %v1554 = vmin.f32 %v1344, %v1345
        %1555 = vmin.xlane.f32.xlu0 %v1554
        %v1556 = vpop.xlane.xlu0 %1555
        %v1557 = vmin.f32 %v1346, %v1347
        %1558 = vmin.xlane.f32.xlu0 %v1557
        %v1559 = vpop.xlane.xlu0 %1558
        %v1560 = vmin.f32 %v1348, %v1349
        %1561 = vmin.xlane.f32.xlu0 %v1560
        %v1562 = vpop.xlane.xlu0 %1561
        %v1563 = vmin.f32 %v1350, %v1351
        %1564 = vmin.xlane.f32.xlu0 %v1563
        %v1565 = vpop.xlane.xlu0 %1564
        %v1566 = vmin.f32 %v1352, %v1353
        %1567 = vmin.xlane.f32.xlu0 %v1566
        %v1568 = vpop.xlane.xlu0 %1567
        %v1569 = vmin.f32 %v1354, %v1355
        %1570 = vmin.xlane.f32.xlu0 %v1569
        %v1571 = vpop.xlane.xlu0 %1570
        %v1572 = vmin.f32 %v1356, %v1357
        %1573 = vmin.xlane.f32.xlu0 %v1572
        %v1574 = vpop.xlane.xlu0 %1573
        %v1575 = vmin.f32 %v1358, %v1359
        %1576 = vmin.xlane.f32.xlu0 %v1575
        %v1577 = vpop.xlane.xlu0 %1576
        %v1578 = vmin.f32 %v1360, %v1361
        %1579 = vmin.xlane.f32.xlu0 %v1578
        %v1580 = vpop.xlane.xlu0 %1579
        %v1581 = vmin.f32 %v1362, %v1363
        %1582 = vmin.xlane.f32.xlu0 %v1581
        %v1583 = vpop.xlane.xlu0 %1582
        %v1584 = vmin.f32 %v1364, %v1365
        %1585 = vmin.xlane.f32.xlu0 %v1584
        %v1586 = vpop.xlane.xlu0 %1585
        %v1587 = vmin.f32 %v1366, %v1367
        %1588 = vmin.xlane.f32.xlu0 %v1587
        %v1589 = vpop.xlane.xlu0 %1588
        %v1590 = vmin.f32 %v1368, %v1369
        %1591 = vmin.xlane.f32.xlu0 %v1590
        %v1592 = vpop.xlane.xlu0 %1591
        %v1593 = vmin.f32 %v1370, %v1371
        %1594 = vmin.xlane.f32.xlu0 %v1593
        %v1595 = vpop.xlane.xlu0 %1594
        %vm1596 = vcmp.eq.f32.partialorder %v1340, %v1550
        %vm1597 = vcmp.eq.f32.partialorder %v1341, %v1550
        %vm1598 = vcmp.eq.f32.partialorder %v1342, %v1553
        %vm1599 = vcmp.eq.f32.partialorder %v1343, %v1553
        %vm1600 = vcmp.eq.f32.partialorder %v1344, %v1556
        %vm1601 = vcmp.eq.f32.partialorder %v1345, %v1556
        %vm1602 = vcmp.eq.f32.partialorder %v1346, %v1559
        %vm1603 = vcmp.eq.f32.partialorder %v1347, %v1559
        %vm1604 = vcmp.eq.f32.partialorder %v1348, %v1562
        %vm1605 = vcmp.eq.f32.partialorder %v1349, %v1562
        %vm1606 = vcmp.eq.f32.partialorder %v1350, %v1565
        %vm1607 = vcmp.eq.f32.partialorder %v1351, %v1565
        %vm1608 = vcmp.eq.f32.partialorder %v1352, %v1568
        %vm1609 = vcmp.eq.f32.partialorder %v1353, %v1568
        %vm1610 = vcmp.eq.f32.partialorder %v1354, %v1571
        %vm1611 = vcmp.eq.f32.partialorder %v1355, %v1571
        %vm1612 = vcmp.eq.f32.partialorder %v1356, %v1574
        %vm1613 = vcmp.eq.f32.partialorder %v1357, %v1574
        %vm1614 = vcmp.eq.f32.partialorder %v1358, %v1577
        %vm1615 = vcmp.eq.f32.partialorder %v1359, %v1577
        %vm1616 = vcmp.eq.f32.partialorder %v1360, %v1580
        %vm1617 = vcmp.eq.f32.partialorder %v1361, %v1580
        %vm1618 = vcmp.eq.f32.partialorder %v1362, %v1583
        %vm1619 = vcmp.eq.f32.partialorder %v1363, %v1583
        %vm1620 = vcmp.eq.f32.partialorder %v1364, %v1586
        %vm1621 = vcmp.eq.f32.partialorder %v1365, %v1586
        %vm1622 = vcmp.eq.f32.partialorder %v1366, %v1589
        %vm1623 = vcmp.eq.f32.partialorder %v1367, %v1589
        %vm1624 = vcmp.eq.f32.partialorder %v1368, %v1592
        %vm1625 = vcmp.eq.f32.partialorder %v1369, %v1592
        %vm1626 = vcmp.eq.f32.partialorder %v1370, %v1595
        %vm1627 = vcmp.eq.f32.partialorder %v1371, %v1595
        %v1628 = vsel %vm1596, 3.4028235e+38, %v1340
        %v1629 = vsel %vm1597, 3.4028235e+38, %v1341
        %v1630 = vsel %vm1598, 3.4028235e+38, %v1342
        %v1631 = vsel %vm1599, 3.4028235e+38, %v1343
        %v1632 = vsel %vm1600, 3.4028235e+38, %v1344
        %v1633 = vsel %vm1601, 3.4028235e+38, %v1345
        %v1634 = vsel %vm1602, 3.4028235e+38, %v1346
        %v1635 = vsel %vm1603, 3.4028235e+38, %v1347
        %v1636 = vsel %vm1604, 3.4028235e+38, %v1348
        %v1637 = vsel %vm1605, 3.4028235e+38, %v1349
        %v1638 = vsel %vm1606, 3.4028235e+38, %v1350
        %v1639 = vsel %vm1607, 3.4028235e+38, %v1351
        %v1640 = vsel %vm1608, 3.4028235e+38, %v1352
        %v1641 = vsel %vm1609, 3.4028235e+38, %v1353
        %v1642 = vsel %vm1610, 3.4028235e+38, %v1354
        %v1643 = vsel %vm1611, 3.4028235e+38, %v1355
        %v1644 = vsel %vm1612, 3.4028235e+38, %v1356
        %v1645 = vsel %vm1613, 3.4028235e+38, %v1357
        %v1646 = vsel %vm1614, 3.4028235e+38, %v1358
        %v1647 = vsel %vm1615, 3.4028235e+38, %v1359
        %v1648 = vsel %vm1616, 3.4028235e+38, %v1360
        %v1649 = vsel %vm1617, 3.4028235e+38, %v1361
        %v1650 = vsel %vm1618, 3.4028235e+38, %v1362
        %v1651 = vsel %vm1619, 3.4028235e+38, %v1363
        %v1652 = vsel %vm1620, 3.4028235e+38, %v1364
        %v1653 = vsel %vm1621, 3.4028235e+38, %v1365
        %v1654 = vsel %vm1622, 3.4028235e+38, %v1366
        %v1655 = vsel %vm1623, 3.4028235e+38, %v1367
        %v1656 = vsel %vm1624, 3.4028235e+38, %v1368
        %v1657 = vsel %vm1625, 3.4028235e+38, %v1369
        %v1658 = vsel %vm1626, 3.4028235e+38, %v1370
        %v1659 = vsel %vm1627, 3.4028235e+38, %v1371
        %v1676 = vand.u32 %v1550, 4294967040
        %v1677 = vand.u32 %v1553, 4294967040
        %v1678 = vand.u32 %v1556, 4294967040
        %v1679 = vand.u32 %v1559, 4294967040
        %v1680 = vand.u32 %v1562, 4294967040
        %v1681 = vand.u32 %v1565, 4294967040
        %v1682 = vand.u32 %v1568, 4294967040
        %v1683 = vand.u32 %v1571, 4294967040
        %v1684 = vand.u32 %v1574, 4294967040
        %v1685 = vand.u32 %v1577, 4294967040
        %v1686 = vand.u32 %v1580, 4294967040
        %v1687 = vand.u32 %v1583, 4294967040
        %v1688 = vand.u32 %v1586, 4294967040
        %v1689 = vand.u32 %v1589, 4294967040
        %v1690 = vand.u32 %v1592, 4294967040
        %v1691 = vand.u32 %v1595, 4294967040
        %v1708 = vrsqrt.pop %v1676
        %v1709 = vmul.f32 %v1676, %v1708
        %vm1710 = vcmp.eq.f32.partialorder %v1676, inf
        %v1711 = vsel %vm1710, %v1676, %v1709
        %vm1712 = vcmp.eq.f32.partialorder %v1676, 0.0
        %v1713 = vand.u32 %v1676, 2147483648
        %v1714 = vsel %vm1712, %v1713, %v1711
        %v1715 = vrsqrt.pop %v1677
        %v1716 = vmul.f32 %v1677, %v1715
        %vm1717 = vcmp.eq.f32.partialorder %v1677, inf
        %v1718 = vsel %vm1717, %v1677, %v1716
        %vm1719 = vcmp.eq.f32.partialorder %v1677, 0.0
        %v1720 = vand.u32 %v1677, 2147483648
        %v1721 = vsel %vm1719, %v1720, %v1718
        %v1722 = vrsqrt.pop %v1678
        %v1723 = vmul.f32 %v1678, %v1722
        %vm1724 = vcmp.eq.f32.partialorder %v1678, inf
        %v1725 = vsel %vm1724, %v1678, %v1723
        %vm1726 = vcmp.eq.f32.partialorder %v1678, 0.0
        %v1727 = vand.u32 %v1678, 2147483648
        %v1728 = vsel %vm1726, %v1727, %v1725
        %v1729 = vrsqrt.pop %v1679
        %v1730 = vmul.f32 %v1679, %v1729
        %vm1731 = vcmp.eq.f32.partialorder %v1679, inf
        %v1732 = vsel %vm1731, %v1679, %v1730
        %vm1733 = vcmp.eq.f32.partialorder %v1679, 0.0
        %v1734 = vand.u32 %v1679, 2147483648
        %v1735 = vsel %vm1733, %v1734, %v1732
        %v1736 = vrsqrt.pop %v1680
        %v1737 = vmul.f32 %v1680, %v1736
        %vm1738 = vcmp.eq.f32.partialorder %v1680, inf
        %v1739 = vsel %vm1738, %v1680, %v1737
        %vm1740 = vcmp.eq.f32.partialorder %v1680, 0.0
        %v1741 = vand.u32 %v1680, 2147483648
        %v1742 = vsel %vm1740, %v1741, %v1739
        %v1743 = vrsqrt.pop %v1681
        %v1744 = vmul.f32 %v1681, %v1743
        %vm1745 = vcmp.eq.f32.partialorder %v1681, inf
        %v1746 = vsel %vm1745, %v1681, %v1744
        %vm1747 = vcmp.eq.f32.partialorder %v1681, 0.0
        %v1748 = vand.u32 %v1681, 2147483648
        %v1749 = vsel %vm1747, %v1748, %v1746
        %v1750 = vrsqrt.pop %v1682
        %v1751 = vmul.f32 %v1682, %v1750
        %vm1752 = vcmp.eq.f32.partialorder %v1682, inf
        %v1753 = vsel %vm1752, %v1682, %v1751
        %vm1754 = vcmp.eq.f32.partialorder %v1682, 0.0
        %v1755 = vand.u32 %v1682, 2147483648
        %v1756 = vsel %vm1754, %v1755, %v1753
        %v1757 = vrsqrt.pop %v1683
        %v1758 = vmul.f32 %v1683, %v1757
        %vm1759 = vcmp.eq.f32.partialorder %v1683, inf
        %v1760 = vsel %vm1759, %v1683, %v1758
        %vm1761 = vcmp.eq.f32.partialorder %v1683, 0.0
        %v1762 = vand.u32 %v1683, 2147483648
        %v1763 = vsel %vm1761, %v1762, %v1760
        %v1764 = vrsqrt.pop %v1684
        %v1765 = vmul.f32 %v1684, %v1764
        %vm1766 = vcmp.eq.f32.partialorder %v1684, inf
        %v1767 = vsel %vm1766, %v1684, %v1765
        %vm1768 = vcmp.eq.f32.partialorder %v1684, 0.0
        %v1769 = vand.u32 %v1684, 2147483648
        %v1770 = vsel %vm1768, %v1769, %v1767
        %v1771 = vrsqrt.pop %v1685
        %v1772 = vmul.f32 %v1685, %v1771
        %vm1773 = vcmp.eq.f32.partialorder %v1685, inf
        %v1774 = vsel %vm1773, %v1685, %v1772
        %vm1775 = vcmp.eq.f32.partialorder %v1685, 0.0
        %v1776 = vand.u32 %v1685, 2147483648
        %v1777 = vsel %vm1775, %v1776, %v1774
        %v1778 = vrsqrt.pop %v1686
        %v1779 = vmul.f32 %v1686, %v1778
        %vm1780 = vcmp.eq.f32.partialorder %v1686, inf
        %v1781 = vsel %vm1780, %v1686, %v1779
        %vm1782 = vcmp.eq.f32.partialorder %v1686, 0.0
        %v1783 = vand.u32 %v1686, 2147483648
        %v1784 = vsel %vm1782, %v1783, %v1781
        %v1785 = vrsqrt.pop %v1687
        %v1786 = vmul.f32 %v1687, %v1785
        %vm1787 = vcmp.eq.f32.partialorder %v1687, inf
        %v1788 = vsel %vm1787, %v1687, %v1786
        %vm1789 = vcmp.eq.f32.partialorder %v1687, 0.0
        %v1790 = vand.u32 %v1687, 2147483648
        %v1791 = vsel %vm1789, %v1790, %v1788
        %v1792 = vrsqrt.pop %v1688
        %v1793 = vmul.f32 %v1688, %v1792
        %vm1794 = vcmp.eq.f32.partialorder %v1688, inf
        %v1795 = vsel %vm1794, %v1688, %v1793
        %vm1796 = vcmp.eq.f32.partialorder %v1688, 0.0
        %v1797 = vand.u32 %v1688, 2147483648
        %v1798 = vsel %vm1796, %v1797, %v1795
        %v1799 = vrsqrt.pop %v1689
        %v1800 = vmul.f32 %v1689, %v1799
        %vm1801 = vcmp.eq.f32.partialorder %v1689, inf
        %v1802 = vsel %vm1801, %v1689, %v1800
        %vm1803 = vcmp.eq.f32.partialorder %v1689, 0.0
        %v1804 = vand.u32 %v1689, 2147483648
        %v1805 = vsel %vm1803, %v1804, %v1802
        %v1806 = vrsqrt.pop %v1690
        %v1807 = vmul.f32 %v1690, %v1806
        %vm1808 = vcmp.eq.f32.partialorder %v1690, inf
        %v1809 = vsel %vm1808, %v1690, %v1807
        %vm1810 = vcmp.eq.f32.partialorder %v1690, 0.0
        %v1811 = vand.u32 %v1690, 2147483648
        %v1812 = vsel %vm1810, %v1811, %v1809
        %v1813 = vrsqrt.pop %v1691
        %v1814 = vmul.f32 %v1691, %v1813
        %vm1815 = vcmp.eq.f32.partialorder %v1691, inf
        %v1816 = vsel %vm1815, %v1691, %v1814
        %vm1817 = vcmp.eq.f32.partialorder %v1691, 0.0
        %v1818 = vand.u32 %v1691, 2147483648
        %v1819 = vsel %vm1817, %v1818, %v1816
        %v1820 = vadd.f32 %v1532, %v1714
        %v1821 = vadd.f32 %v1533, %v1721
        %v1822 = vadd.f32 %v1534, %v1728
        %v1823 = vadd.f32 %v1535, %v1735
        %v1824 = vadd.f32 %v1536, %v1742
        %v1825 = vadd.f32 %v1537, %v1749
        %v1826 = vadd.f32 %v1538, %v1756
        %v1827 = vadd.f32 %v1539, %v1763
        %v1828 = vadd.f32 %v1540, %v1770
        %v1829 = vadd.f32 %v1541, %v1777
        %v1830 = vadd.f32 %v1542, %v1784
        %v1831 = vadd.f32 %v1543, %v1791
        %v1832 = vadd.f32 %v1544, %v1798
        %v1833 = vadd.f32 %v1545, %v1805
        %v1834 = vadd.f32 %v1546, %v1812
        %v1835 = vadd.f32 %v1547, %v1819
        %v1836 = vmin.f32 %v1628, %v1629
        %1837 = vmin.xlane.f32.xlu0 %v1836
        %v1838 = vpop.xlane.xlu0 %1837
        %v1839 = vmin.f32 %v1630, %v1631
        %1840 = vmin.xlane.f32.xlu0 %v1839
        %v1841 = vpop.xlane.xlu0 %1840
        %v1842 = vmin.f32 %v1632, %v1633
        %1843 = vmin.xlane.f32.xlu0 %v1842
        %v1844 = vpop.xlane.xlu0 %1843
        %v1845 = vmin.f32 %v1634, %v1635
        %1846 = vmin.xlane.f32.xlu0 %v1845
        %v1847 = vpop.xlane.xlu0 %1846
        %v1848 = vmin.f32 %v1636, %v1637
        %1849 = vmin.xlane.f32.xlu0 %v1848
        %v1850 = vpop.xlane.xlu0 %1849
        %v1851 = vmin.f32 %v1638, %v1639
        %1852 = vmin.xlane.f32.xlu0 %v1851
        %v1853 = vpop.xlane.xlu0 %1852
        %v1854 = vmin.f32 %v1640, %v1641
        %1855 = vmin.xlane.f32.xlu0 %v1854
        %v1856 = vpop.xlane.xlu0 %1855
        %v1857 = vmin.f32 %v1642, %v1643
        %1858 = vmin.xlane.f32.xlu0 %v1857
        %v1859 = vpop.xlane.xlu0 %1858
        %v1860 = vmin.f32 %v1644, %v1645
        %1861 = vmin.xlane.f32.xlu0 %v1860
        %v1862 = vpop.xlane.xlu0 %1861
        %v1863 = vmin.f32 %v1646, %v1647
        %1864 = vmin.xlane.f32.xlu0 %v1863
        %v1865 = vpop.xlane.xlu0 %1864
        %v1866 = vmin.f32 %v1648, %v1649
        %1867 = vmin.xlane.f32.xlu0 %v1866
        %v1868 = vpop.xlane.xlu0 %1867
        %v1869 = vmin.f32 %v1650, %v1651
        %1870 = vmin.xlane.f32.xlu0 %v1869
        %v1871 = vpop.xlane.xlu0 %1870
        %v1872 = vmin.f32 %v1652, %v1653
        %1873 = vmin.xlane.f32.xlu0 %v1872
        %v1874 = vpop.xlane.xlu0 %1873
        %v1875 = vmin.f32 %v1654, %v1655
        %1876 = vmin.xlane.f32.xlu0 %v1875
        %v1877 = vpop.xlane.xlu0 %1876
        %v1878 = vmin.f32 %v1656, %v1657
        %1879 = vmin.xlane.f32.xlu0 %v1878
        %v1880 = vpop.xlane.xlu0 %1879
        %v1881 = vmin.f32 %v1658, %v1659
        %1882 = vmin.xlane.f32.xlu0 %v1881
        %v1883 = vpop.xlane.xlu0 %1882
        %vm1884 = vcmp.eq.f32.partialorder %v1628, %v1838
        %vm1885 = vcmp.eq.f32.partialorder %v1629, %v1838
        %vm1886 = vcmp.eq.f32.partialorder %v1630, %v1841
        %vm1887 = vcmp.eq.f32.partialorder %v1631, %v1841
        %vm1888 = vcmp.eq.f32.partialorder %v1632, %v1844
        %vm1889 = vcmp.eq.f32.partialorder %v1633, %v1844
        %vm1890 = vcmp.eq.f32.partialorder %v1634, %v1847
        %vm1891 = vcmp.eq.f32.partialorder %v1635, %v1847
        %vm1892 = vcmp.eq.f32.partialorder %v1636, %v1850
        %vm1893 = vcmp.eq.f32.partialorder %v1637, %v1850
        %vm1894 = vcmp.eq.f32.partialorder %v1638, %v1853
        %vm1895 = vcmp.eq.f32.partialorder %v1639, %v1853
        %vm1896 = vcmp.eq.f32.partialorder %v1640, %v1856
        %vm1897 = vcmp.eq.f32.partialorder %v1641, %v1856
        %vm1898 = vcmp.eq.f32.partialorder %v1642, %v1859
        %vm1899 = vcmp.eq.f32.partialorder %v1643, %v1859
        %vm1900 = vcmp.eq.f32.partialorder %v1644, %v1862
        %vm1901 = vcmp.eq.f32.partialorder %v1645, %v1862
        %vm1902 = vcmp.eq.f32.partialorder %v1646, %v1865
        %vm1903 = vcmp.eq.f32.partialorder %v1647, %v1865
        %vm1904 = vcmp.eq.f32.partialorder %v1648, %v1868
        %vm1905 = vcmp.eq.f32.partialorder %v1649, %v1868
        %vm1906 = vcmp.eq.f32.partialorder %v1650, %v1871
        %vm1907 = vcmp.eq.f32.partialorder %v1651, %v1871
        %vm1908 = vcmp.eq.f32.partialorder %v1652, %v1874
        %vm1909 = vcmp.eq.f32.partialorder %v1653, %v1874
        %vm1910 = vcmp.eq.f32.partialorder %v1654, %v1877
        %vm1911 = vcmp.eq.f32.partialorder %v1655, %v1877
        %vm1912 = vcmp.eq.f32.partialorder %v1656, %v1880
        %vm1913 = vcmp.eq.f32.partialorder %v1657, %v1880
        %vm1914 = vcmp.eq.f32.partialorder %v1658, %v1883
        %vm1915 = vcmp.eq.f32.partialorder %v1659, %v1883
        %v1916 = vsel %vm1884, 3.4028235e+38, %v1628
        %v1917 = vsel %vm1885, 3.4028235e+38, %v1629
        %v1918 = vsel %vm1886, 3.4028235e+38, %v1630
        %v1919 = vsel %vm1887, 3.4028235e+38, %v1631
        %v1920 = vsel %vm1888, 3.4028235e+38, %v1632
        %v1921 = vsel %vm1889, 3.4028235e+38, %v1633
        %v1922 = vsel %vm1890, 3.4028235e+38, %v1634
        %v1923 = vsel %vm1891, 3.4028235e+38, %v1635
        %v1924 = vsel %vm1892, 3.4028235e+38, %v1636
        %v1925 = vsel %vm1893, 3.4028235e+38, %v1637
        %v1926 = vsel %vm1894, 3.4028235e+38, %v1638
        %v1927 = vsel %vm1895, 3.4028235e+38, %v1639
        %v1928 = vsel %vm1896, 3.4028235e+38, %v1640
        %v1929 = vsel %vm1897, 3.4028235e+38, %v1641
        %v1930 = vsel %vm1898, 3.4028235e+38, %v1642
        %v1931 = vsel %vm1899, 3.4028235e+38, %v1643
        %v1932 = vsel %vm1900, 3.4028235e+38, %v1644
        %v1933 = vsel %vm1901, 3.4028235e+38, %v1645
        %v1934 = vsel %vm1902, 3.4028235e+38, %v1646
        %v1935 = vsel %vm1903, 3.4028235e+38, %v1647
        %v1936 = vsel %vm1904, 3.4028235e+38, %v1648
        %v1937 = vsel %vm1905, 3.4028235e+38, %v1649
        %v1938 = vsel %vm1906, 3.4028235e+38, %v1650
        %v1939 = vsel %vm1907, 3.4028235e+38, %v1651
        %v1940 = vsel %vm1908, 3.4028235e+38, %v1652
        %v1941 = vsel %vm1909, 3.4028235e+38, %v1653
        %v1942 = vsel %vm1910, 3.4028235e+38, %v1654
        %v1943 = vsel %vm1911, 3.4028235e+38, %v1655
        %v1944 = vsel %vm1912, 3.4028235e+38, %v1656
        %v1945 = vsel %vm1913, 3.4028235e+38, %v1657
        %v1946 = vsel %vm1914, 3.4028235e+38, %v1658
        %v1947 = vsel %vm1915, 3.4028235e+38, %v1659
        %v1964 = vand.u32 %v1838, 4294967040
        %v1965 = vand.u32 %v1841, 4294967040
        %v1966 = vand.u32 %v1844, 4294967040
        %v1967 = vand.u32 %v1847, 4294967040
        %v1968 = vand.u32 %v1850, 4294967040
        %v1969 = vand.u32 %v1853, 4294967040
        %v1970 = vand.u32 %v1856, 4294967040
        %v1971 = vand.u32 %v1859, 4294967040
        %v1972 = vand.u32 %v1862, 4294967040
        %v1973 = vand.u32 %v1865, 4294967040
        %v1974 = vand.u32 %v1868, 4294967040
        %v1975 = vand.u32 %v1871, 4294967040
        %v1976 = vand.u32 %v1874, 4294967040
        %v1977 = vand.u32 %v1877, 4294967040
        %v1978 = vand.u32 %v1880, 4294967040
        %v1979 = vand.u32 %v1883, 4294967040
        %v1996 = vrsqrt.pop %v1964
        %v1997 = vmul.f32 %v1964, %v1996
        %vm1998 = vcmp.eq.f32.partialorder %v1964, inf
        %v1999 = vsel %vm1998, %v1964, %v1997
        %vm2000 = vcmp.eq.f32.partialorder %v1964, 0.0
        %v2001 = vand.u32 %v1964, 2147483648
        %v2002 = vsel %vm2000, %v2001, %v1999
        %v2003 = vrsqrt.pop %v1965
        %v2004 = vmul.f32 %v1965, %v2003
        %vm2005 = vcmp.eq.f32.partialorder %v1965, inf
        %v2006 = vsel %vm2005, %v1965, %v2004
        %vm2007 = vcmp.eq.f32.partialorder %v1965, 0.0
        %v2008 = vand.u32 %v1965, 2147483648
        %v2009 = vsel %vm2007, %v2008, %v2006
        %v2010 = vrsqrt.pop %v1966
        %v2011 = vmul.f32 %v1966, %v2010
        %vm2012 = vcmp.eq.f32.partialorder %v1966, inf
        %v2013 = vsel %vm2012, %v1966, %v2011
        %vm2014 = vcmp.eq.f32.partialorder %v1966, 0.0
        %v2015 = vand.u32 %v1966, 2147483648
        %v2016 = vsel %vm2014, %v2015, %v2013
        %v2017 = vrsqrt.pop %v1967
        %v2018 = vmul.f32 %v1967, %v2017
        %vm2019 = vcmp.eq.f32.partialorder %v1967, inf
        %v2020 = vsel %vm2019, %v1967, %v2018
        %vm2021 = vcmp.eq.f32.partialorder %v1967, 0.0
        %v2022 = vand.u32 %v1967, 2147483648
        %v2023 = vsel %vm2021, %v2022, %v2020
        %v2024 = vrsqrt.pop %v1968
        %v2025 = vmul.f32 %v1968, %v2024
        %vm2026 = vcmp.eq.f32.partialorder %v1968, inf
        %v2027 = vsel %vm2026, %v1968, %v2025
        %vm2028 = vcmp.eq.f32.partialorder %v1968, 0.0
        %v2029 = vand.u32 %v1968, 2147483648
        %v2030 = vsel %vm2028, %v2029, %v2027
        %v2031 = vrsqrt.pop %v1969
        %v2032 = vmul.f32 %v1969, %v2031
        %vm2033 = vcmp.eq.f32.partialorder %v1969, inf
        %v2034 = vsel %vm2033, %v1969, %v2032
        %vm2035 = vcmp.eq.f32.partialorder %v1969, 0.0
        %v2036 = vand.u32 %v1969, 2147483648
        %v2037 = vsel %vm2035, %v2036, %v2034
        %v2038 = vrsqrt.pop %v1970
        %v2039 = vmul.f32 %v1970, %v2038
        %vm2040 = vcmp.eq.f32.partialorder %v1970, inf
        %v2041 = vsel %vm2040, %v1970, %v2039
        %vm2042 = vcmp.eq.f32.partialorder %v1970, 0.0
        %v2043 = vand.u32 %v1970, 2147483648
        %v2044 = vsel %vm2042, %v2043, %v2041
        %v2045 = vrsqrt.pop %v1971
        %v2046 = vmul.f32 %v1971, %v2045
        %vm2047 = vcmp.eq.f32.partialorder %v1971, inf
        %v2048 = vsel %vm2047, %v1971, %v2046
        %vm2049 = vcmp.eq.f32.partialorder %v1971, 0.0
        %v2050 = vand.u32 %v1971, 2147483648
        %v2051 = vsel %vm2049, %v2050, %v2048
        %v2052 = vrsqrt.pop %v1972
        %v2053 = vmul.f32 %v1972, %v2052
        %vm2054 = vcmp.eq.f32.partialorder %v1972, inf
        %v2055 = vsel %vm2054, %v1972, %v2053
        %vm2056 = vcmp.eq.f32.partialorder %v1972, 0.0
        %v2057 = vand.u32 %v1972, 2147483648
        %v2058 = vsel %vm2056, %v2057, %v2055
        %v2059 = vrsqrt.pop %v1973
        %v2060 = vmul.f32 %v1973, %v2059
        %vm2061 = vcmp.eq.f32.partialorder %v1973, inf
        %v2062 = vsel %vm2061, %v1973, %v2060
        %vm2063 = vcmp.eq.f32.partialorder %v1973, 0.0
        %v2064 = vand.u32 %v1973, 2147483648
        %v2065 = vsel %vm2063, %v2064, %v2062
        %v2066 = vrsqrt.pop %v1974
        %v2067 = vmul.f32 %v1974, %v2066
        %vm2068 = vcmp.eq.f32.partialorder %v1974, inf
        %v2069 = vsel %vm2068, %v1974, %v2067
        %vm2070 = vcmp.eq.f32.partialorder %v1974, 0.0
        %v2071 = vand.u32 %v1974, 2147483648
        %v2072 = vsel %vm2070, %v2071, %v2069
        %v2073 = vrsqrt.pop %v1975
        %v2074 = vmul.f32 %v1975, %v2073
        %vm2075 = vcmp.eq.f32.partialorder %v1975, inf
        %v2076 = vsel %vm2075, %v1975, %v2074
        %vm2077 = vcmp.eq.f32.partialorder %v1975, 0.0
        %v2078 = vand.u32 %v1975, 2147483648
        %v2079 = vsel %vm2077, %v2078, %v2076
        %v2080 = vrsqrt.pop %v1976
        %v2081 = vmul.f32 %v1976, %v2080
        %vm2082 = vcmp.eq.f32.partialorder %v1976, inf
        %v2083 = vsel %vm2082, %v1976, %v2081
        %vm2084 = vcmp.eq.f32.partialorder %v1976, 0.0
        %v2085 = vand.u32 %v1976, 2147483648
        %v2086 = vsel %vm2084, %v2085, %v2083
        %v2087 = vrsqrt.pop %v1977
        %v2088 = vmul.f32 %v1977, %v2087
        %vm2089 = vcmp.eq.f32.partialorder %v1977, inf
        %v2090 = vsel %vm2089, %v1977, %v2088
        %vm2091 = vcmp.eq.f32.partialorder %v1977, 0.0
        %v2092 = vand.u32 %v1977, 2147483648
        %v2093 = vsel %vm2091, %v2092, %v2090
        %v2094 = vrsqrt.pop %v1978
        %v2095 = vmul.f32 %v1978, %v2094
        %vm2096 = vcmp.eq.f32.partialorder %v1978, inf
        %v2097 = vsel %vm2096, %v1978, %v2095
        %vm2098 = vcmp.eq.f32.partialorder %v1978, 0.0
        %v2099 = vand.u32 %v1978, 2147483648
        %v2100 = vsel %vm2098, %v2099, %v2097
        %v2101 = vrsqrt.pop %v1979
        %v2102 = vmul.f32 %v1979, %v2101
        %vm2103 = vcmp.eq.f32.partialorder %v1979, inf
        %v2104 = vsel %vm2103, %v1979, %v2102
        %vm2105 = vcmp.eq.f32.partialorder %v1979, 0.0
        %v2106 = vand.u32 %v1979, 2147483648
        %v2107 = vsel %vm2105, %v2106, %v2104
        %v2108 = vadd.f32 %v1820, %v2002
        %v2109 = vadd.f32 %v1821, %v2009
        %v2110 = vadd.f32 %v1822, %v2016
        %v2111 = vadd.f32 %v1823, %v2023
        %v2112 = vadd.f32 %v1824, %v2030
        %v2113 = vadd.f32 %v1825, %v2037
        %v2114 = vadd.f32 %v1826, %v2044
        %v2115 = vadd.f32 %v1827, %v2051
        %v2116 = vadd.f32 %v1828, %v2058
        %v2117 = vadd.f32 %v1829, %v2065
        %v2118 = vadd.f32 %v1830, %v2072
        %v2119 = vadd.f32 %v1831, %v2079
        %v2120 = vadd.f32 %v1832, %v2086
        %v2121 = vadd.f32 %v1833, %v2093
        %v2122 = vadd.f32 %v1834, %v2100
        %v2123 = vadd.f32 %v1835, %v2107
        %v2124 = vmin.f32 %v1916, %v1917
        %2125 = vmin.xlane.f32.xlu0 %v2124
        %v2126 = vpop.xlane.xlu0 %2125
        %v2127 = vmin.f32 %v1918, %v1919
        %2128 = vmin.xlane.f32.xlu0 %v2127
        %v2129 = vpop.xlane.xlu0 %2128
        %v2130 = vmin.f32 %v1920, %v1921
        %2131 = vmin.xlane.f32.xlu0 %v2130
        %v2132 = vpop.xlane.xlu0 %2131
        %v2133 = vmin.f32 %v1922, %v1923
        %2134 = vmin.xlane.f32.xlu0 %v2133
        %v2135 = vpop.xlane.xlu0 %2134
        %v2136 = vmin.f32 %v1924, %v1925
        %2137 = vmin.xlane.f32.xlu0 %v2136
        %v2138 = vpop.xlane.xlu0 %2137
        %v2139 = vmin.f32 %v1926, %v1927
        %2140 = vmin.xlane.f32.xlu0 %v2139
        %v2141 = vpop.xlane.xlu0 %2140
        %v2142 = vmin.f32 %v1928, %v1929
        %2143 = vmin.xlane.f32.xlu0 %v2142
        %v2144 = vpop.xlane.xlu0 %2143
        %v2145 = vmin.f32 %v1930, %v1931
        %2146 = vmin.xlane.f32.xlu0 %v2145
        %v2147 = vpop.xlane.xlu0 %2146
        %v2148 = vmin.f32 %v1932, %v1933
        %2149 = vmin.xlane.f32.xlu0 %v2148
        %v2150 = vpop.xlane.xlu0 %2149
        %v2151 = vmin.f32 %v1934, %v1935
        %2152 = vmin.xlane.f32.xlu0 %v2151
        %v2153 = vpop.xlane.xlu0 %2152
        %v2154 = vmin.f32 %v1936, %v1937
        %2155 = vmin.xlane.f32.xlu0 %v2154
        %v2156 = vpop.xlane.xlu0 %2155
        %v2157 = vmin.f32 %v1938, %v1939
        %2158 = vmin.xlane.f32.xlu0 %v2157
        %v2159 = vpop.xlane.xlu0 %2158
        %v2160 = vmin.f32 %v1940, %v1941
        %2161 = vmin.xlane.f32.xlu0 %v2160
        %v2162 = vpop.xlane.xlu0 %2161
        %v2163 = vmin.f32 %v1942, %v1943
        %2164 = vmin.xlane.f32.xlu0 %v2163
        %v2165 = vpop.xlane.xlu0 %2164
        %v2166 = vmin.f32 %v1944, %v1945
        %2167 = vmin.xlane.f32.xlu0 %v2166
        %v2168 = vpop.xlane.xlu0 %2167
        %v2169 = vmin.f32 %v1946, %v1947
        %2170 = vmin.xlane.f32.xlu0 %v2169
        %v2171 = vpop.xlane.xlu0 %2170
        %vm2172 = vcmp.eq.f32.partialorder %v1916, %v2126
        %vm2173 = vcmp.eq.f32.partialorder %v1917, %v2126
        %vm2174 = vcmp.eq.f32.partialorder %v1918, %v2129
        %vm2175 = vcmp.eq.f32.partialorder %v1919, %v2129
        %vm2176 = vcmp.eq.f32.partialorder %v1920, %v2132
        %vm2177 = vcmp.eq.f32.partialorder %v1921, %v2132
        %vm2178 = vcmp.eq.f32.partialorder %v1922, %v2135
        %vm2179 = vcmp.eq.f32.partialorder %v1923, %v2135
        %vm2180 = vcmp.eq.f32.partialorder %v1924, %v2138
        %vm2181 = vcmp.eq.f32.partialorder %v1925, %v2138
        %vm2182 = vcmp.eq.f32.partialorder %v1926, %v2141
        %vm2183 = vcmp.eq.f32.partialorder %v1927, %v2141
        %vm2184 = vcmp.eq.f32.partialorder %v1928, %v2144
        %vm2185 = vcmp.eq.f32.partialorder %v1929, %v2144
        %vm2186 = vcmp.eq.f32.partialorder %v1930, %v2147
        %vm2187 = vcmp.eq.f32.partialorder %v1931, %v2147
        %vm2188 = vcmp.eq.f32.partialorder %v1932, %v2150
        %vm2189 = vcmp.eq.f32.partialorder %v1933, %v2150
        %vm2190 = vcmp.eq.f32.partialorder %v1934, %v2153
        %vm2191 = vcmp.eq.f32.partialorder %v1935, %v2153
        %vm2192 = vcmp.eq.f32.partialorder %v1936, %v2156
        %vm2193 = vcmp.eq.f32.partialorder %v1937, %v2156
        %vm2194 = vcmp.eq.f32.partialorder %v1938, %v2159
        %vm2195 = vcmp.eq.f32.partialorder %v1939, %v2159
        %vm2196 = vcmp.eq.f32.partialorder %v1940, %v2162
        %vm2197 = vcmp.eq.f32.partialorder %v1941, %v2162
        %vm2198 = vcmp.eq.f32.partialorder %v1942, %v2165
        %vm2199 = vcmp.eq.f32.partialorder %v1943, %v2165
        %vm2200 = vcmp.eq.f32.partialorder %v1944, %v2168
        %vm2201 = vcmp.eq.f32.partialorder %v1945, %v2168
        %vm2202 = vcmp.eq.f32.partialorder %v1946, %v2171
        %vm2203 = vcmp.eq.f32.partialorder %v1947, %v2171
        %v2204 = vsel %vm2172, 3.4028235e+38, %v1916
        %v2205 = vsel %vm2173, 3.4028235e+38, %v1917
        %v2206 = vsel %vm2174, 3.4028235e+38, %v1918
        %v2207 = vsel %vm2175, 3.4028235e+38, %v1919
        %v2208 = vsel %vm2176, 3.4028235e+38, %v1920
        %v2209 = vsel %vm2177, 3.4028235e+38, %v1921
        %v2210 = vsel %vm2178, 3.4028235e+38, %v1922
        %v2211 = vsel %vm2179, 3.4028235e+38, %v1923
        %v2212 = vsel %vm2180, 3.4028235e+38, %v1924
        %v2213 = vsel %vm2181, 3.4028235e+38, %v1925
        %v2214 = vsel %vm2182, 3.4028235e+38, %v1926
        %v2215 = vsel %vm2183, 3.4028235e+38, %v1927
        %v2216 = vsel %vm2184, 3.4028235e+38, %v1928
        %v2217 = vsel %vm2185, 3.4028235e+38, %v1929
        %v2218 = vsel %vm2186, 3.4028235e+38, %v1930
        %v2219 = vsel %vm2187, 3.4028235e+38, %v1931
        %v2220 = vsel %vm2188, 3.4028235e+38, %v1932
        %v2221 = vsel %vm2189, 3.4028235e+38, %v1933
        %v2222 = vsel %vm2190, 3.4028235e+38, %v1934
        %v2223 = vsel %vm2191, 3.4028235e+38, %v1935
        %v2224 = vsel %vm2192, 3.4028235e+38, %v1936
        %v2225 = vsel %vm2193, 3.4028235e+38, %v1937
        %v2226 = vsel %vm2194, 3.4028235e+38, %v1938
        %v2227 = vsel %vm2195, 3.4028235e+38, %v1939
        %v2228 = vsel %vm2196, 3.4028235e+38, %v1940
        %v2229 = vsel %vm2197, 3.4028235e+38, %v1941
        %v2230 = vsel %vm2198, 3.4028235e+38, %v1942
        %v2231 = vsel %vm2199, 3.4028235e+38, %v1943
        %v2232 = vsel %vm2200, 3.4028235e+38, %v1944
        %v2233 = vsel %vm2201, 3.4028235e+38, %v1945
        %v2234 = vsel %vm2202, 3.4028235e+38, %v1946
        %v2235 = vsel %vm2203, 3.4028235e+38, %v1947
        %v2252 = vand.u32 %v2126, 4294967040
        %v2253 = vand.u32 %v2129, 4294967040
        %v2254 = vand.u32 %v2132, 4294967040
        %v2255 = vand.u32 %v2135, 4294967040
        %v2256 = vand.u32 %v2138, 4294967040
        %v2257 = vand.u32 %v2141, 4294967040
        %v2258 = vand.u32 %v2144, 4294967040
        %v2259 = vand.u32 %v2147, 4294967040
        %v2260 = vand.u32 %v2150, 4294967040
        %v2261 = vand.u32 %v2153, 4294967040
        %v2262 = vand.u32 %v2156, 4294967040
        %v2263 = vand.u32 %v2159, 4294967040
        %v2264 = vand.u32 %v2162, 4294967040
        %v2265 = vand.u32 %v2165, 4294967040
        %v2266 = vand.u32 %v2168, 4294967040
        %v2267 = vand.u32 %v2171, 4294967040
        %v2284 = vrsqrt.pop %v2252
        %v2285 = vmul.f32 %v2252, %v2284
        %vm2286 = vcmp.eq.f32.partialorder %v2252, inf
        %v2287 = vsel %vm2286, %v2252, %v2285
        %vm2288 = vcmp.eq.f32.partialorder %v2252, 0.0
        %v2289 = vand.u32 %v2252, 2147483648
        %v2290 = vsel %vm2288, %v2289, %v2287
        %v2291 = vrsqrt.pop %v2253
        %v2292 = vmul.f32 %v2253, %v2291
        %vm2293 = vcmp.eq.f32.partialorder %v2253, inf
        %v2294 = vsel %vm2293, %v2253, %v2292
        %vm2295 = vcmp.eq.f32.partialorder %v2253, 0.0
        %v2296 = vand.u32 %v2253, 2147483648
        %v2297 = vsel %vm2295, %v2296, %v2294
        %v2298 = vrsqrt.pop %v2254
        %v2299 = vmul.f32 %v2254, %v2298
        %vm2300 = vcmp.eq.f32.partialorder %v2254, inf
        %v2301 = vsel %vm2300, %v2254, %v2299
        %vm2302 = vcmp.eq.f32.partialorder %v2254, 0.0
        %v2303 = vand.u32 %v2254, 2147483648
        %v2304 = vsel %vm2302, %v2303, %v2301
        %v2305 = vrsqrt.pop %v2255
        %v2306 = vmul.f32 %v2255, %v2305
        %vm2307 = vcmp.eq.f32.partialorder %v2255, inf
        %v2308 = vsel %vm2307, %v2255, %v2306
        %vm2309 = vcmp.eq.f32.partialorder %v2255, 0.0
        %v2310 = vand.u32 %v2255, 2147483648
        %v2311 = vsel %vm2309, %v2310, %v2308
        %v2312 = vrsqrt.pop %v2256
        %v2313 = vmul.f32 %v2256, %v2312
        %vm2314 = vcmp.eq.f32.partialorder %v2256, inf
        %v2315 = vsel %vm2314, %v2256, %v2313
        %vm2316 = vcmp.eq.f32.partialorder %v2256, 0.0
        %v2317 = vand.u32 %v2256, 2147483648
        %v2318 = vsel %vm2316, %v2317, %v2315
        %v2319 = vrsqrt.pop %v2257
        %v2320 = vmul.f32 %v2257, %v2319
        %vm2321 = vcmp.eq.f32.partialorder %v2257, inf
        %v2322 = vsel %vm2321, %v2257, %v2320
        %vm2323 = vcmp.eq.f32.partialorder %v2257, 0.0
        %v2324 = vand.u32 %v2257, 2147483648
        %v2325 = vsel %vm2323, %v2324, %v2322
        %v2326 = vrsqrt.pop %v2258
        %v2327 = vmul.f32 %v2258, %v2326
        %vm2328 = vcmp.eq.f32.partialorder %v2258, inf
        %v2329 = vsel %vm2328, %v2258, %v2327
        %vm2330 = vcmp.eq.f32.partialorder %v2258, 0.0
        %v2331 = vand.u32 %v2258, 2147483648
        %v2332 = vsel %vm2330, %v2331, %v2329
        %v2333 = vrsqrt.pop %v2259
        %v2334 = vmul.f32 %v2259, %v2333
        %vm2335 = vcmp.eq.f32.partialorder %v2259, inf
        %v2336 = vsel %vm2335, %v2259, %v2334
        %vm2337 = vcmp.eq.f32.partialorder %v2259, 0.0
        %v2338 = vand.u32 %v2259, 2147483648
        %v2339 = vsel %vm2337, %v2338, %v2336
        %v2340 = vrsqrt.pop %v2260
        %v2341 = vmul.f32 %v2260, %v2340
        %vm2342 = vcmp.eq.f32.partialorder %v2260, inf
        %v2343 = vsel %vm2342, %v2260, %v2341
        %vm2344 = vcmp.eq.f32.partialorder %v2260, 0.0
        %v2345 = vand.u32 %v2260, 2147483648
        %v2346 = vsel %vm2344, %v2345, %v2343
        %v2347 = vrsqrt.pop %v2261
        %v2348 = vmul.f32 %v2261, %v2347
        %vm2349 = vcmp.eq.f32.partialorder %v2261, inf
        %v2350 = vsel %vm2349, %v2261, %v2348
        %vm2351 = vcmp.eq.f32.partialorder %v2261, 0.0
        %v2352 = vand.u32 %v2261, 2147483648
        %v2353 = vsel %vm2351, %v2352, %v2350
        %v2354 = vrsqrt.pop %v2262
        %v2355 = vmul.f32 %v2262, %v2354
        %vm2356 = vcmp.eq.f32.partialorder %v2262, inf
        %v2357 = vsel %vm2356, %v2262, %v2355
        %vm2358 = vcmp.eq.f32.partialorder %v2262, 0.0
        %v2359 = vand.u32 %v2262, 2147483648
        %v2360 = vsel %vm2358, %v2359, %v2357
        %v2361 = vrsqrt.pop %v2263
        %v2362 = vmul.f32 %v2263, %v2361
        %vm2363 = vcmp.eq.f32.partialorder %v2263, inf
        %v2364 = vsel %vm2363, %v2263, %v2362
        %vm2365 = vcmp.eq.f32.partialorder %v2263, 0.0
        %v2366 = vand.u32 %v2263, 2147483648
        %v2367 = vsel %vm2365, %v2366, %v2364
        %v2368 = vrsqrt.pop %v2264
        %v2369 = vmul.f32 %v2264, %v2368
        %vm2370 = vcmp.eq.f32.partialorder %v2264, inf
        %v2371 = vsel %vm2370, %v2264, %v2369
        %vm2372 = vcmp.eq.f32.partialorder %v2264, 0.0
        %v2373 = vand.u32 %v2264, 2147483648
        %v2374 = vsel %vm2372, %v2373, %v2371
        %v2375 = vrsqrt.pop %v2265
        %v2376 = vmul.f32 %v2265, %v2375
        %vm2377 = vcmp.eq.f32.partialorder %v2265, inf
        %v2378 = vsel %vm2377, %v2265, %v2376
        %vm2379 = vcmp.eq.f32.partialorder %v2265, 0.0
        %v2380 = vand.u32 %v2265, 2147483648
        %v2381 = vsel %vm2379, %v2380, %v2378
        %v2382 = vrsqrt.pop %v2266
        %v2383 = vmul.f32 %v2266, %v2382
        %vm2384 = vcmp.eq.f32.partialorder %v2266, inf
        %v2385 = vsel %vm2384, %v2266, %v2383
        %vm2386 = vcmp.eq.f32.partialorder %v2266, 0.0
        %v2387 = vand.u32 %v2266, 2147483648
        %v2388 = vsel %vm2386, %v2387, %v2385
        %v2389 = vrsqrt.pop %v2267
        %v2390 = vmul.f32 %v2267, %v2389
        %vm2391 = vcmp.eq.f32.partialorder %v2267, inf
        %v2392 = vsel %vm2391, %v2267, %v2390
        %vm2393 = vcmp.eq.f32.partialorder %v2267, 0.0
        %v2394 = vand.u32 %v2267, 2147483648
        %v2395 = vsel %vm2393, %v2394, %v2392
        %v2396 = vadd.f32 %v2108, %v2290
        %v2397 = vadd.f32 %v2109, %v2297
        %v2398 = vadd.f32 %v2110, %v2304
        %v2399 = vadd.f32 %v2111, %v2311
        %v2400 = vadd.f32 %v2112, %v2318
        %v2401 = vadd.f32 %v2113, %v2325
        %v2402 = vadd.f32 %v2114, %v2332
        %v2403 = vadd.f32 %v2115, %v2339
        %v2404 = vadd.f32 %v2116, %v2346
        %v2405 = vadd.f32 %v2117, %v2353
        %v2406 = vadd.f32 %v2118, %v2360
        %v2407 = vadd.f32 %v2119, %v2367
        %v2408 = vadd.f32 %v2120, %v2374
        %v2409 = vadd.f32 %v2121, %v2381
        %v2410 = vadd.f32 %v2122, %v2388
        %v2411 = vadd.f32 %v2123, %v2395
        %v2412 = vmin.f32 %v2204, %v2205
        %2413 = vmin.xlane.f32.xlu0 %v2412
        %v2414 = vpop.xlane.xlu0 %2413
        %v2415 = vmin.f32 %v2206, %v2207
        %2416 = vmin.xlane.f32.xlu0 %v2415
        %v2417 = vpop.xlane.xlu0 %2416
        %v2418 = vmin.f32 %v2208, %v2209
        %2419 = vmin.xlane.f32.xlu0 %v2418
        %v2420 = vpop.xlane.xlu0 %2419
        %v2421 = vmin.f32 %v2210, %v2211
        %2422 = vmin.xlane.f32.xlu0 %v2421
        %v2423 = vpop.xlane.xlu0 %2422
        %v2424 = vmin.f32 %v2212, %v2213
        %2425 = vmin.xlane.f32.xlu0 %v2424
        %v2426 = vpop.xlane.xlu0 %2425
        %v2427 = vmin.f32 %v2214, %v2215
        %2428 = vmin.xlane.f32.xlu0 %v2427
        %v2429 = vpop.xlane.xlu0 %2428
        %v2430 = vmin.f32 %v2216, %v2217
        %2431 = vmin.xlane.f32.xlu0 %v2430
        %v2432 = vpop.xlane.xlu0 %2431
        %v2433 = vmin.f32 %v2218, %v2219
        %2434 = vmin.xlane.f32.xlu0 %v2433
        %v2435 = vpop.xlane.xlu0 %2434
        %v2436 = vmin.f32 %v2220, %v2221
        %2437 = vmin.xlane.f32.xlu0 %v2436
        %v2438 = vpop.xlane.xlu0 %2437
        %v2439 = vmin.f32 %v2222, %v2223
        %2440 = vmin.xlane.f32.xlu0 %v2439
        %v2441 = vpop.xlane.xlu0 %2440
        %v2442 = vmin.f32 %v2224, %v2225
        %2443 = vmin.xlane.f32.xlu0 %v2442
        %v2444 = vpop.xlane.xlu0 %2443
        %v2445 = vmin.f32 %v2226, %v2227
        %2446 = vmin.xlane.f32.xlu0 %v2445
        %v2447 = vpop.xlane.xlu0 %2446
        %v2448 = vmin.f32 %v2228, %v2229
        %2449 = vmin.xlane.f32.xlu0 %v2448
        %v2450 = vpop.xlane.xlu0 %2449
        %v2451 = vmin.f32 %v2230, %v2231
        %2452 = vmin.xlane.f32.xlu0 %v2451
        %v2453 = vpop.xlane.xlu0 %2452
        %v2454 = vmin.f32 %v2232, %v2233
        %2455 = vmin.xlane.f32.xlu0 %v2454
        %v2456 = vpop.xlane.xlu0 %2455
        %v2457 = vmin.f32 %v2234, %v2235
        %2458 = vmin.xlane.f32.xlu0 %v2457
        %v2459 = vpop.xlane.xlu0 %2458
        %vm2460 = vcmp.eq.f32.partialorder %v2204, %v2414
        %vm2461 = vcmp.eq.f32.partialorder %v2205, %v2414
        %vm2462 = vcmp.eq.f32.partialorder %v2206, %v2417
        %vm2463 = vcmp.eq.f32.partialorder %v2207, %v2417
        %vm2464 = vcmp.eq.f32.partialorder %v2208, %v2420
        %vm2465 = vcmp.eq.f32.partialorder %v2209, %v2420
        %vm2466 = vcmp.eq.f32.partialorder %v2210, %v2423
        %vm2467 = vcmp.eq.f32.partialorder %v2211, %v2423
        %vm2468 = vcmp.eq.f32.partialorder %v2212, %v2426
        %vm2469 = vcmp.eq.f32.partialorder %v2213, %v2426
        %vm2470 = vcmp.eq.f32.partialorder %v2214, %v2429
        %vm2471 = vcmp.eq.f32.partialorder %v2215, %v2429
        %vm2472 = vcmp.eq.f32.partialorder %v2216, %v2432
        %vm2473 = vcmp.eq.f32.partialorder %v2217, %v2432
        %vm2474 = vcmp.eq.f32.partialorder %v2218, %v2435
        %vm2475 = vcmp.eq.f32.partialorder %v2219, %v2435
        %vm2476 = vcmp.eq.f32.partialorder %v2220, %v2438
        %vm2477 = vcmp.eq.f32.partialorder %v2221, %v2438
        %vm2478 = vcmp.eq.f32.partialorder %v2222, %v2441
        %vm2479 = vcmp.eq.f32.partialorder %v2223, %v2441
        %vm2480 = vcmp.eq.f32.partialorder %v2224, %v2444
        %vm2481 = vcmp.eq.f32.partialorder %v2225, %v2444
        %vm2482 = vcmp.eq.f32.partialorder %v2226, %v2447
        %vm2483 = vcmp.eq.f32.partialorder %v2227, %v2447
        %vm2484 = vcmp.eq.f32.partialorder %v2228, %v2450
        %vm2485 = vcmp.eq.f32.partialorder %v2229, %v2450
        %vm2486 = vcmp.eq.f32.partialorder %v2230, %v2453
        %vm2487 = vcmp.eq.f32.partialorder %v2231, %v2453
        %vm2488 = vcmp.eq.f32.partialorder %v2232, %v2456
        %vm2489 = vcmp.eq.f32.partialorder %v2233, %v2456
        %vm2490 = vcmp.eq.f32.partialorder %v2234, %v2459
        %vm2491 = vcmp.eq.f32.partialorder %v2235, %v2459
        %v2492 = vsel %vm2460, 3.4028235e+38, %v2204
        %v2493 = vsel %vm2461, 3.4028235e+38, %v2205
        %v2494 = vsel %vm2462, 3.4028235e+38, %v2206
        %v2495 = vsel %vm2463, 3.4028235e+38, %v2207
        %v2496 = vsel %vm2464, 3.4028235e+38, %v2208
        %v2497 = vsel %vm2465, 3.4028235e+38, %v2209
        %v2498 = vsel %vm2466, 3.4028235e+38, %v2210
        %v2499 = vsel %vm2467, 3.4028235e+38, %v2211
        %v2500 = vsel %vm2468, 3.4028235e+38, %v2212
        %v2501 = vsel %vm2469, 3.4028235e+38, %v2213
        %v2502 = vsel %vm2470, 3.4028235e+38, %v2214
        %v2503 = vsel %vm2471, 3.4028235e+38, %v2215
        %v2504 = vsel %vm2472, 3.4028235e+38, %v2216
        %v2505 = vsel %vm2473, 3.4028235e+38, %v2217
        %v2506 = vsel %vm2474, 3.4028235e+38, %v2218
        %v2507 = vsel %vm2475, 3.4028235e+38, %v2219
        %v2508 = vsel %vm2476, 3.4028235e+38, %v2220
        %v2509 = vsel %vm2477, 3.4028235e+38, %v2221
        %v2510 = vsel %vm2478, 3.4028235e+38, %v2222
        %v2511 = vsel %vm2479, 3.4028235e+38, %v2223
        %v2512 = vsel %vm2480, 3.4028235e+38, %v2224
        %v2513 = vsel %vm2481, 3.4028235e+38, %v2225
        %v2514 = vsel %vm2482, 3.4028235e+38, %v2226
        %v2515 = vsel %vm2483, 3.4028235e+38, %v2227
        %v2516 = vsel %vm2484, 3.4028235e+38, %v2228
        %v2517 = vsel %vm2485, 3.4028235e+38, %v2229
        %v2518 = vsel %vm2486, 3.4028235e+38, %v2230
        %v2519 = vsel %vm2487, 3.4028235e+38, %v2231
        %v2520 = vsel %vm2488, 3.4028235e+38, %v2232
        %v2521 = vsel %vm2489, 3.4028235e+38, %v2233
        %v2522 = vsel %vm2490, 3.4028235e+38, %v2234
        %v2523 = vsel %vm2491, 3.4028235e+38, %v2235
        %v2540 = vand.u32 %v2414, 4294967040
        %v2541 = vand.u32 %v2417, 4294967040
        %v2542 = vand.u32 %v2420, 4294967040
        %v2543 = vand.u32 %v2423, 4294967040
        %v2544 = vand.u32 %v2426, 4294967040
        %v2545 = vand.u32 %v2429, 4294967040
        %v2546 = vand.u32 %v2432, 4294967040
        %v2547 = vand.u32 %v2435, 4294967040
        %v2548 = vand.u32 %v2438, 4294967040
        %v2549 = vand.u32 %v2441, 4294967040
        %v2550 = vand.u32 %v2444, 4294967040
        %v2551 = vand.u32 %v2447, 4294967040
        %v2552 = vand.u32 %v2450, 4294967040
        %v2553 = vand.u32 %v2453, 4294967040
        %v2554 = vand.u32 %v2456, 4294967040
        %v2555 = vand.u32 %v2459, 4294967040
        %v2572 = vrsqrt.pop %v2540
        %v2573 = vmul.f32 %v2540, %v2572
        %vm2574 = vcmp.eq.f32.partialorder %v2540, inf
        %v2575 = vsel %vm2574, %v2540, %v2573
        %vm2576 = vcmp.eq.f32.partialorder %v2540, 0.0
        %v2577 = vand.u32 %v2540, 2147483648
        %v2578 = vsel %vm2576, %v2577, %v2575
        %v2579 = vrsqrt.pop %v2541
        %v2580 = vmul.f32 %v2541, %v2579
        %vm2581 = vcmp.eq.f32.partialorder %v2541, inf
        %v2582 = vsel %vm2581, %v2541, %v2580
        %vm2583 = vcmp.eq.f32.partialorder %v2541, 0.0
        %v2584 = vand.u32 %v2541, 2147483648
        %v2585 = vsel %vm2583, %v2584, %v2582
        %v2586 = vrsqrt.pop %v2542
        %v2587 = vmul.f32 %v2542, %v2586
        %vm2588 = vcmp.eq.f32.partialorder %v2542, inf
        %v2589 = vsel %vm2588, %v2542, %v2587
        %vm2590 = vcmp.eq.f32.partialorder %v2542, 0.0
        %v2591 = vand.u32 %v2542, 2147483648
        %v2592 = vsel %vm2590, %v2591, %v2589
        %v2593 = vrsqrt.pop %v2543
        %v2594 = vmul.f32 %v2543, %v2593
        %vm2595 = vcmp.eq.f32.partialorder %v2543, inf
        %v2596 = vsel %vm2595, %v2543, %v2594
        %vm2597 = vcmp.eq.f32.partialorder %v2543, 0.0
        %v2598 = vand.u32 %v2543, 2147483648
        %v2599 = vsel %vm2597, %v2598, %v2596
        %v2600 = vrsqrt.pop %v2544
        %v2601 = vmul.f32 %v2544, %v2600
        %vm2602 = vcmp.eq.f32.partialorder %v2544, inf
        %v2603 = vsel %vm2602, %v2544, %v2601
        %vm2604 = vcmp.eq.f32.partialorder %v2544, 0.0
        %v2605 = vand.u32 %v2544, 2147483648
        %v2606 = vsel %vm2604, %v2605, %v2603
        %v2607 = vrsqrt.pop %v2545
        %v2608 = vmul.f32 %v2545, %v2607
        %vm2609 = vcmp.eq.f32.partialorder %v2545, inf
        %v2610 = vsel %vm2609, %v2545, %v2608
        %vm2611 = vcmp.eq.f32.partialorder %v2545, 0.0
        %v2612 = vand.u32 %v2545, 2147483648
        %v2613 = vsel %vm2611, %v2612, %v2610
        %v2614 = vrsqrt.pop %v2546
        %v2615 = vmul.f32 %v2546, %v2614
        %vm2616 = vcmp.eq.f32.partialorder %v2546, inf
        %v2617 = vsel %vm2616, %v2546, %v2615
        %vm2618 = vcmp.eq.f32.partialorder %v2546, 0.0
        %v2619 = vand.u32 %v2546, 2147483648
        %v2620 = vsel %vm2618, %v2619, %v2617
        %v2621 = vrsqrt.pop %v2547
        %v2622 = vmul.f32 %v2547, %v2621
        %vm2623 = vcmp.eq.f32.partialorder %v2547, inf
        %v2624 = vsel %vm2623, %v2547, %v2622
        %vm2625 = vcmp.eq.f32.partialorder %v2547, 0.0
        %v2626 = vand.u32 %v2547, 2147483648
        %v2627 = vsel %vm2625, %v2626, %v2624
        %v2628 = vrsqrt.pop %v2548
        %v2629 = vmul.f32 %v2548, %v2628
        %vm2630 = vcmp.eq.f32.partialorder %v2548, inf
        %v2631 = vsel %vm2630, %v2548, %v2629
        %vm2632 = vcmp.eq.f32.partialorder %v2548, 0.0
        %v2633 = vand.u32 %v2548, 2147483648
        %v2634 = vsel %vm2632, %v2633, %v2631
        %v2635 = vrsqrt.pop %v2549
        %v2636 = vmul.f32 %v2549, %v2635
        %vm2637 = vcmp.eq.f32.partialorder %v2549, inf
        %v2638 = vsel %vm2637, %v2549, %v2636
        %vm2639 = vcmp.eq.f32.partialorder %v2549, 0.0
        %v2640 = vand.u32 %v2549, 2147483648
        %v2641 = vsel %vm2639, %v2640, %v2638
        %v2642 = vrsqrt.pop %v2550
        %v2643 = vmul.f32 %v2550, %v2642
        %vm2644 = vcmp.eq.f32.partialorder %v2550, inf
        %v2645 = vsel %vm2644, %v2550, %v2643
        %vm2646 = vcmp.eq.f32.partialorder %v2550, 0.0
        %v2647 = vand.u32 %v2550, 2147483648
        %v2648 = vsel %vm2646, %v2647, %v2645
        %v2649 = vrsqrt.pop %v2551
        %v2650 = vmul.f32 %v2551, %v2649
        %vm2651 = vcmp.eq.f32.partialorder %v2551, inf
        %v2652 = vsel %vm2651, %v2551, %v2650
        %vm2653 = vcmp.eq.f32.partialorder %v2551, 0.0
        %v2654 = vand.u32 %v2551, 2147483648
        %v2655 = vsel %vm2653, %v2654, %v2652
        %v2656 = vrsqrt.pop %v2552
        %v2657 = vmul.f32 %v2552, %v2656
        %vm2658 = vcmp.eq.f32.partialorder %v2552, inf
        %v2659 = vsel %vm2658, %v2552, %v2657
        %vm2660 = vcmp.eq.f32.partialorder %v2552, 0.0
        %v2661 = vand.u32 %v2552, 2147483648
        %v2662 = vsel %vm2660, %v2661, %v2659
        %v2663 = vrsqrt.pop %v2553
        %v2664 = vmul.f32 %v2553, %v2663
        %vm2665 = vcmp.eq.f32.partialorder %v2553, inf
        %v2666 = vsel %vm2665, %v2553, %v2664
        %vm2667 = vcmp.eq.f32.partialorder %v2553, 0.0
        %v2668 = vand.u32 %v2553, 2147483648
        %v2669 = vsel %vm2667, %v2668, %v2666
        %v2670 = vrsqrt.pop %v2554
        %v2671 = vmul.f32 %v2554, %v2670
        %vm2672 = vcmp.eq.f32.partialorder %v2554, inf
        %v2673 = vsel %vm2672, %v2554, %v2671
        %vm2674 = vcmp.eq.f32.partialorder %v2554, 0.0
        %v2675 = vand.u32 %v2554, 2147483648
        %v2676 = vsel %vm2674, %v2675, %v2673
        %v2677 = vrsqrt.pop %v2555
        %v2678 = vmul.f32 %v2555, %v2677
        %vm2679 = vcmp.eq.f32.partialorder %v2555, inf
        %v2680 = vsel %vm2679, %v2555, %v2678
        %vm2681 = vcmp.eq.f32.partialorder %v2555, 0.0
        %v2682 = vand.u32 %v2555, 2147483648
        %v2683 = vsel %vm2681, %v2682, %v2680
        %v2684 = vadd.f32 %v2396, %v2578
        %v2685 = vadd.f32 %v2397, %v2585
        %v2686 = vadd.f32 %v2398, %v2592
        %v2687 = vadd.f32 %v2399, %v2599
        %v2688 = vadd.f32 %v2400, %v2606
        %v2689 = vadd.f32 %v2401, %v2613
        %v2690 = vadd.f32 %v2402, %v2620
        %v2691 = vadd.f32 %v2403, %v2627
        %v2692 = vadd.f32 %v2404, %v2634
        %v2693 = vadd.f32 %v2405, %v2641
        %v2694 = vadd.f32 %v2406, %v2648
        %v2695 = vadd.f32 %v2407, %v2655
        %v2696 = vadd.f32 %v2408, %v2662
        %v2697 = vadd.f32 %v2409, %v2669
        %v2698 = vadd.f32 %v2410, %v2676
        %v2699 = vadd.f32 %v2411, %v2683
        %v2700 = vmin.f32 %v2492, %v2493
        %2701 = vmin.xlane.f32.xlu0 %v2700
        %v2702 = vpop.xlane.xlu0 %2701
        %v2703 = vmin.f32 %v2494, %v2495
        %2704 = vmin.xlane.f32.xlu0 %v2703
        %v2705 = vpop.xlane.xlu0 %2704
        %v2706 = vmin.f32 %v2496, %v2497
        %2707 = vmin.xlane.f32.xlu0 %v2706
        %v2708 = vpop.xlane.xlu0 %2707
        %v2709 = vmin.f32 %v2498, %v2499
        %2710 = vmin.xlane.f32.xlu0 %v2709
        %v2711 = vpop.xlane.xlu0 %2710
        %v2712 = vmin.f32 %v2500, %v2501
        %2713 = vmin.xlane.f32.xlu0 %v2712
        %v2714 = vpop.xlane.xlu0 %2713
        %v2715 = vmin.f32 %v2502, %v2503
        %2716 = vmin.xlane.f32.xlu0 %v2715
        %v2717 = vpop.xlane.xlu0 %2716
        %v2718 = vmin.f32 %v2504, %v2505
        %2719 = vmin.xlane.f32.xlu0 %v2718
        %v2720 = vpop.xlane.xlu0 %2719
        %v2721 = vmin.f32 %v2506, %v2507
        %2722 = vmin.xlane.f32.xlu0 %v2721
        %v2723 = vpop.xlane.xlu0 %2722
        %v2724 = vmin.f32 %v2508, %v2509
        %2725 = vmin.xlane.f32.xlu0 %v2724
        %v2726 = vpop.xlane.xlu0 %2725
        %v2727 = vmin.f32 %v2510, %v2511
        %2728 = vmin.xlane.f32.xlu0 %v2727
        %v2729 = vpop.xlane.xlu0 %2728
        %v2730 = vmin.f32 %v2512, %v2513
        %2731 = vmin.xlane.f32.xlu0 %v2730
        %v2732 = vpop.xlane.xlu0 %2731
        %v2733 = vmin.f32 %v2514, %v2515
        %2734 = vmin.xlane.f32.xlu0 %v2733
        %v2735 = vpop.xlane.xlu0 %2734
        %v2736 = vmin.f32 %v2516, %v2517
        %2737 = vmin.xlane.f32.xlu0 %v2736
        %v2738 = vpop.xlane.xlu0 %2737
        %v2739 = vmin.f32 %v2518, %v2519
        %2740 = vmin.xlane.f32.xlu0 %v2739
        %v2741 = vpop.xlane.xlu0 %2740
        %v2742 = vmin.f32 %v2520, %v2521
        %2743 = vmin.xlane.f32.xlu0 %v2742
        %v2744 = vpop.xlane.xlu0 %2743
        %v2745 = vmin.f32 %v2522, %v2523
        %2746 = vmin.xlane.f32.xlu0 %v2745
        %v2747 = vpop.xlane.xlu0 %2746
        %vm2748 = vcmp.eq.f32.partialorder %v2492, %v2702
        %vm2749 = vcmp.eq.f32.partialorder %v2493, %v2702
        %vm2750 = vcmp.eq.f32.partialorder %v2494, %v2705
        %vm2751 = vcmp.eq.f32.partialorder %v2495, %v2705
        %vm2752 = vcmp.eq.f32.partialorder %v2496, %v2708
        %vm2753 = vcmp.eq.f32.partialorder %v2497, %v2708
        %vm2754 = vcmp.eq.f32.partialorder %v2498, %v2711
        %vm2755 = vcmp.eq.f32.partialorder %v2499, %v2711
        %vm2756 = vcmp.eq.f32.partialorder %v2500, %v2714
        %vm2757 = vcmp.eq.f32.partialorder %v2501, %v2714
        %vm2758 = vcmp.eq.f32.partialorder %v2502, %v2717
        %vm2759 = vcmp.eq.f32.partialorder %v2503, %v2717
        %vm2760 = vcmp.eq.f32.partialorder %v2504, %v2720
        %vm2761 = vcmp.eq.f32.partialorder %v2505, %v2720
        %vm2762 = vcmp.eq.f32.partialorder %v2506, %v2723
        %vm2763 = vcmp.eq.f32.partialorder %v2507, %v2723
        %vm2764 = vcmp.eq.f32.partialorder %v2508, %v2726
        %vm2765 = vcmp.eq.f32.partialorder %v2509, %v2726
        %vm2766 = vcmp.eq.f32.partialorder %v2510, %v2729
        %vm2767 = vcmp.eq.f32.partialorder %v2511, %v2729
        %vm2768 = vcmp.eq.f32.partialorder %v2512, %v2732
        %vm2769 = vcmp.eq.f32.partialorder %v2513, %v2732
        %vm2770 = vcmp.eq.f32.partialorder %v2514, %v2735
        %vm2771 = vcmp.eq.f32.partialorder %v2515, %v2735
        %vm2772 = vcmp.eq.f32.partialorder %v2516, %v2738
        %vm2773 = vcmp.eq.f32.partialorder %v2517, %v2738
        %vm2774 = vcmp.eq.f32.partialorder %v2518, %v2741
        %vm2775 = vcmp.eq.f32.partialorder %v2519, %v2741
        %vm2776 = vcmp.eq.f32.partialorder %v2520, %v2744
        %vm2777 = vcmp.eq.f32.partialorder %v2521, %v2744
        %vm2778 = vcmp.eq.f32.partialorder %v2522, %v2747
        %vm2779 = vcmp.eq.f32.partialorder %v2523, %v2747
        %v2780 = vsel %vm2748, 3.4028235e+38, %v2492
        %v2781 = vsel %vm2749, 3.4028235e+38, %v2493
        %v2782 = vsel %vm2750, 3.4028235e+38, %v2494
        %v2783 = vsel %vm2751, 3.4028235e+38, %v2495
        %v2784 = vsel %vm2752, 3.4028235e+38, %v2496
        %v2785 = vsel %vm2753, 3.4028235e+38, %v2497
        %v2786 = vsel %vm2754, 3.4028235e+38, %v2498
        %v2787 = vsel %vm2755, 3.4028235e+38, %v2499
        %v2788 = vsel %vm2756, 3.4028235e+38, %v2500
        %v2789 = vsel %vm2757, 3.4028235e+38, %v2501
        %v2790 = vsel %vm2758, 3.4028235e+38, %v2502
        %v2791 = vsel %vm2759, 3.4028235e+38, %v2503
        %v2792 = vsel %vm2760, 3.4028235e+38, %v2504
        %v2793 = vsel %vm2761, 3.4028235e+38, %v2505
        %v2794 = vsel %vm2762, 3.4028235e+38, %v2506
        %v2795 = vsel %vm2763, 3.4028235e+38, %v2507
        %v2796 = vsel %vm2764, 3.4028235e+38, %v2508
        %v2797 = vsel %vm2765, 3.4028235e+38, %v2509
        %v2798 = vsel %vm2766, 3.4028235e+38, %v2510
        %v2799 = vsel %vm2767, 3.4028235e+38, %v2511
        %v2800 = vsel %vm2768, 3.4028235e+38, %v2512
        %v2801 = vsel %vm2769, 3.4028235e+38, %v2513
        %v2802 = vsel %vm2770, 3.4028235e+38, %v2514
        %v2803 = vsel %vm2771, 3.4028235e+38, %v2515
        %v2804 = vsel %vm2772, 3.4028235e+38, %v2516
        %v2805 = vsel %vm2773, 3.4028235e+38, %v2517
        %v2806 = vsel %vm2774, 3.4028235e+38, %v2518
        %v2807 = vsel %vm2775, 3.4028235e+38, %v2519
        %v2808 = vsel %vm2776, 3.4028235e+38, %v2520
        %v2809 = vsel %vm2777, 3.4028235e+38, %v2521
        %v2810 = vsel %vm2778, 3.4028235e+38, %v2522
        %v2811 = vsel %vm2779, 3.4028235e+38, %v2523
        %v2828 = vand.u32 %v2702, 4294967040
        %v2829 = vand.u32 %v2705, 4294967040
        %v2830 = vand.u32 %v2708, 4294967040
        %v2831 = vand.u32 %v2711, 4294967040
        %v2832 = vand.u32 %v2714, 4294967040
        %v2833 = vand.u32 %v2717, 4294967040
        %v2834 = vand.u32 %v2720, 4294967040
        %v2835 = vand.u32 %v2723, 4294967040
        %v2836 = vand.u32 %v2726, 4294967040
        %v2837 = vand.u32 %v2729, 4294967040
        %v2838 = vand.u32 %v2732, 4294967040
        %v2839 = vand.u32 %v2735, 4294967040
        %v2840 = vand.u32 %v2738, 4294967040
        %v2841 = vand.u32 %v2741, 4294967040
        %v2842 = vand.u32 %v2744, 4294967040
        %v2843 = vand.u32 %v2747, 4294967040
        %v2860 = vrsqrt.pop %v2828
        %v2861 = vmul.f32 %v2828, %v2860
        %vm2862 = vcmp.eq.f32.partialorder %v2828, inf
        %v2863 = vsel %vm2862, %v2828, %v2861
        %vm2864 = vcmp.eq.f32.partialorder %v2828, 0.0
        %v2865 = vand.u32 %v2828, 2147483648
        %v2866 = vsel %vm2864, %v2865, %v2863
        %v2867 = vrsqrt.pop %v2829
        %v2868 = vmul.f32 %v2829, %v2867
        %vm2869 = vcmp.eq.f32.partialorder %v2829, inf
        %v2870 = vsel %vm2869, %v2829, %v2868
        %vm2871 = vcmp.eq.f32.partialorder %v2829, 0.0
        %v2872 = vand.u32 %v2829, 2147483648
        %v2873 = vsel %vm2871, %v2872, %v2870
        %v2874 = vrsqrt.pop %v2830
        %v2875 = vmul.f32 %v2830, %v2874
        %vm2876 = vcmp.eq.f32.partialorder %v2830, inf
        %v2877 = vsel %vm2876, %v2830, %v2875
        %vm2878 = vcmp.eq.f32.partialorder %v2830, 0.0
        %v2879 = vand.u32 %v2830, 2147483648
        %v2880 = vsel %vm2878, %v2879, %v2877
        %v2881 = vrsqrt.pop %v2831
        %v2882 = vmul.f32 %v2831, %v2881
        %vm2883 = vcmp.eq.f32.partialorder %v2831, inf
        %v2884 = vsel %vm2883, %v2831, %v2882
        %vm2885 = vcmp.eq.f32.partialorder %v2831, 0.0
        %v2886 = vand.u32 %v2831, 2147483648
        %v2887 = vsel %vm2885, %v2886, %v2884
        %v2888 = vrsqrt.pop %v2832
        %v2889 = vmul.f32 %v2832, %v2888
        %vm2890 = vcmp.eq.f32.partialorder %v2832, inf
        %v2891 = vsel %vm2890, %v2832, %v2889
        %vm2892 = vcmp.eq.f32.partialorder %v2832, 0.0
        %v2893 = vand.u32 %v2832, 2147483648
        %v2894 = vsel %vm2892, %v2893, %v2891
        %v2895 = vrsqrt.pop %v2833
        %v2896 = vmul.f32 %v2833, %v2895
        %vm2897 = vcmp.eq.f32.partialorder %v2833, inf
        %v2898 = vsel %vm2897, %v2833, %v2896
        %vm2899 = vcmp.eq.f32.partialorder %v2833, 0.0
        %v2900 = vand.u32 %v2833, 2147483648
        %v2901 = vsel %vm2899, %v2900, %v2898
        %v2902 = vrsqrt.pop %v2834
        %v2903 = vmul.f32 %v2834, %v2902
        %vm2904 = vcmp.eq.f32.partialorder %v2834, inf
        %v2905 = vsel %vm2904, %v2834, %v2903
        %vm2906 = vcmp.eq.f32.partialorder %v2834, 0.0
        %v2907 = vand.u32 %v2834, 2147483648
        %v2908 = vsel %vm2906, %v2907, %v2905
        %v2909 = vrsqrt.pop %v2835
        %v2910 = vmul.f32 %v2835, %v2909
        %vm2911 = vcmp.eq.f32.partialorder %v2835, inf
        %v2912 = vsel %vm2911, %v2835, %v2910
        %vm2913 = vcmp.eq.f32.partialorder %v2835, 0.0
        %v2914 = vand.u32 %v2835, 2147483648
        %v2915 = vsel %vm2913, %v2914, %v2912
        %v2916 = vrsqrt.pop %v2836
        %v2917 = vmul.f32 %v2836, %v2916
        %vm2918 = vcmp.eq.f32.partialorder %v2836, inf
        %v2919 = vsel %vm2918, %v2836, %v2917
        %vm2920 = vcmp.eq.f32.partialorder %v2836, 0.0
        %v2921 = vand.u32 %v2836, 2147483648
        %v2922 = vsel %vm2920, %v2921, %v2919
        %v2923 = vrsqrt.pop %v2837
        %v2924 = vmul.f32 %v2837, %v2923
        %vm2925 = vcmp.eq.f32.partialorder %v2837, inf
        %v2926 = vsel %vm2925, %v2837, %v2924
        %vm2927 = vcmp.eq.f32.partialorder %v2837, 0.0
        %v2928 = vand.u32 %v2837, 2147483648
        %v2929 = vsel %vm2927, %v2928, %v2926
        %v2930 = vrsqrt.pop %v2838
        %v2931 = vmul.f32 %v2838, %v2930
        %vm2932 = vcmp.eq.f32.partialorder %v2838, inf
        %v2933 = vsel %vm2932, %v2838, %v2931
        %vm2934 = vcmp.eq.f32.partialorder %v2838, 0.0
        %v2935 = vand.u32 %v2838, 2147483648
        %v2936 = vsel %vm2934, %v2935, %v2933
        %v2937 = vrsqrt.pop %v2839
        %v2938 = vmul.f32 %v2839, %v2937
        %vm2939 = vcmp.eq.f32.partialorder %v2839, inf
        %v2940 = vsel %vm2939, %v2839, %v2938
        %vm2941 = vcmp.eq.f32.partialorder %v2839, 0.0
        %v2942 = vand.u32 %v2839, 2147483648
        %v2943 = vsel %vm2941, %v2942, %v2940
        %v2944 = vrsqrt.pop %v2840
        %v2945 = vmul.f32 %v2840, %v2944
        %vm2946 = vcmp.eq.f32.partialorder %v2840, inf
        %v2947 = vsel %vm2946, %v2840, %v2945
        %vm2948 = vcmp.eq.f32.partialorder %v2840, 0.0
        %v2949 = vand.u32 %v2840, 2147483648
        %v2950 = vsel %vm2948, %v2949, %v2947
        %v2951 = vrsqrt.pop %v2841
        %v2952 = vmul.f32 %v2841, %v2951
        %vm2953 = vcmp.eq.f32.partialorder %v2841, inf
        %v2954 = vsel %vm2953, %v2841, %v2952
        %vm2955 = vcmp.eq.f32.partialorder %v2841, 0.0
        %v2956 = vand.u32 %v2841, 2147483648
        %v2957 = vsel %vm2955, %v2956, %v2954
        %v2958 = vrsqrt.pop %v2842
        %v2959 = vmul.f32 %v2842, %v2958
        %vm2960 = vcmp.eq.f32.partialorder %v2842, inf
        %v2961 = vsel %vm2960, %v2842, %v2959
        %vm2962 = vcmp.eq.f32.partialorder %v2842, 0.0
        %v2963 = vand.u32 %v2842, 2147483648
        %v2964 = vsel %vm2962, %v2963, %v2961
        %v2965 = vrsqrt.pop %v2843
        %v2966 = vmul.f32 %v2843, %v2965
        %vm2967 = vcmp.eq.f32.partialorder %v2843, inf
        %v2968 = vsel %vm2967, %v2843, %v2966
        %vm2969 = vcmp.eq.f32.partialorder %v2843, 0.0
        %v2970 = vand.u32 %v2843, 2147483648
        %v2971 = vsel %vm2969, %v2970, %v2968
        %v2972 = vadd.f32 %v2684, %v2866
        %v2973 = vadd.f32 %v2685, %v2873
        %v2974 = vadd.f32 %v2686, %v2880
        %v2975 = vadd.f32 %v2687, %v2887
        %v2976 = vadd.f32 %v2688, %v2894
        %v2977 = vadd.f32 %v2689, %v2901
        %v2978 = vadd.f32 %v2690, %v2908
        %v2979 = vadd.f32 %v2691, %v2915
        %v2980 = vadd.f32 %v2692, %v2922
        %v2981 = vadd.f32 %v2693, %v2929
        %v2982 = vadd.f32 %v2694, %v2936
        %v2983 = vadd.f32 %v2695, %v2943
        %v2984 = vadd.f32 %v2696, %v2950
        %v2985 = vadd.f32 %v2697, %v2957
        %v2986 = vadd.f32 %v2698, %v2964
        %v2987 = vadd.f32 %v2699, %v2971
        %v2988 = vmin.f32 %v2780, %v2781
        %2989 = vmin.xlane.f32.xlu0 %v2988
        %v2990 = vpop.xlane.xlu0 %2989
        %v2991 = vmin.f32 %v2782, %v2783
        %2992 = vmin.xlane.f32.xlu0 %v2991
        %v2993 = vpop.xlane.xlu0 %2992
        %v2994 = vmin.f32 %v2784, %v2785
        %2995 = vmin.xlane.f32.xlu0 %v2994
        %v2996 = vpop.xlane.xlu0 %2995
        %v2997 = vmin.f32 %v2786, %v2787
        %2998 = vmin.xlane.f32.xlu0 %v2997
        %v2999 = vpop.xlane.xlu0 %2998
        %v3000 = vmin.f32 %v2788, %v2789
        %3001 = vmin.xlane.f32.xlu0 %v3000
        %v3002 = vpop.xlane.xlu0 %3001
        %v3003 = vmin.f32 %v2790, %v2791
        %3004 = vmin.xlane.f32.xlu0 %v3003
        %v3005 = vpop.xlane.xlu0 %3004
        %v3006 = vmin.f32 %v2792, %v2793
        %3007 = vmin.xlane.f32.xlu0 %v3006
        %v3008 = vpop.xlane.xlu0 %3007
        %v3009 = vmin.f32 %v2794, %v2795
        %3010 = vmin.xlane.f32.xlu0 %v3009
        %v3011 = vpop.xlane.xlu0 %3010
        %v3012 = vmin.f32 %v2796, %v2797
        %3013 = vmin.xlane.f32.xlu0 %v3012
        %v3014 = vpop.xlane.xlu0 %3013
        %v3015 = vmin.f32 %v2798, %v2799
        %3016 = vmin.xlane.f32.xlu0 %v3015
        %v3017 = vpop.xlane.xlu0 %3016
        %v3018 = vmin.f32 %v2800, %v2801
        %3019 = vmin.xlane.f32.xlu0 %v3018
        %v3020 = vpop.xlane.xlu0 %3019
        %v3021 = vmin.f32 %v2802, %v2803
        %3022 = vmin.xlane.f32.xlu0 %v3021
        %v3023 = vpop.xlane.xlu0 %3022
        %v3024 = vmin.f32 %v2804, %v2805
        %3025 = vmin.xlane.f32.xlu0 %v3024
        %v3026 = vpop.xlane.xlu0 %3025
        %v3027 = vmin.f32 %v2806, %v2807
        %3028 = vmin.xlane.f32.xlu0 %v3027
        %v3029 = vpop.xlane.xlu0 %3028
        %v3030 = vmin.f32 %v2808, %v2809
        %3031 = vmin.xlane.f32.xlu0 %v3030
        %v3032 = vpop.xlane.xlu0 %3031
        %v3033 = vmin.f32 %v2810, %v2811
        %3034 = vmin.xlane.f32.xlu0 %v3033
        %v3035 = vpop.xlane.xlu0 %3034
        %vm3036 = vcmp.eq.f32.partialorder %v2780, %v2990
        %vm3037 = vcmp.eq.f32.partialorder %v2781, %v2990
        %vm3038 = vcmp.eq.f32.partialorder %v2782, %v2993
        %vm3039 = vcmp.eq.f32.partialorder %v2783, %v2993
        %vm3040 = vcmp.eq.f32.partialorder %v2784, %v2996
        %vm3041 = vcmp.eq.f32.partialorder %v2785, %v2996
        %vm3042 = vcmp.eq.f32.partialorder %v2786, %v2999
        %vm3043 = vcmp.eq.f32.partialorder %v2787, %v2999
        %vm3044 = vcmp.eq.f32.partialorder %v2788, %v3002
        %vm3045 = vcmp.eq.f32.partialorder %v2789, %v3002
        %vm3046 = vcmp.eq.f32.partialorder %v2790, %v3005
        %vm3047 = vcmp.eq.f32.partialorder %v2791, %v3005
        %vm3048 = vcmp.eq.f32.partialorder %v2792, %v3008
        %vm3049 = vcmp.eq.f32.partialorder %v2793, %v3008
        %vm3050 = vcmp.eq.f32.partialorder %v2794, %v3011
        %vm3051 = vcmp.eq.f32.partialorder %v2795, %v3011
        %vm3052 = vcmp.eq.f32.partialorder %v2796, %v3014
        %vm3053 = vcmp.eq.f32.partialorder %v2797, %v3014
        %vm3054 = vcmp.eq.f32.partialorder %v2798, %v3017
        %vm3055 = vcmp.eq.f32.partialorder %v2799, %v3017
        %vm3056 = vcmp.eq.f32.partialorder %v2800, %v3020
        %vm3057 = vcmp.eq.f32.partialorder %v2801, %v3020
        %vm3058 = vcmp.eq.f32.partialorder %v2802, %v3023
        %vm3059 = vcmp.eq.f32.partialorder %v2803, %v3023
        %vm3060 = vcmp.eq.f32.partialorder %v2804, %v3026
        %vm3061 = vcmp.eq.f32.partialorder %v2805, %v3026
        %vm3062 = vcmp.eq.f32.partialorder %v2806, %v3029
        %vm3063 = vcmp.eq.f32.partialorder %v2807, %v3029
        %vm3064 = vcmp.eq.f32.partialorder %v2808, %v3032
        %vm3065 = vcmp.eq.f32.partialorder %v2809, %v3032
        %vm3066 = vcmp.eq.f32.partialorder %v2810, %v3035
        %vm3067 = vcmp.eq.f32.partialorder %v2811, %v3035
        %v3068 = vsel %vm3036, 3.4028235e+38, %v2780
        %v3069 = vsel %vm3037, 3.4028235e+38, %v2781
        %v3070 = vsel %vm3038, 3.4028235e+38, %v2782
        %v3071 = vsel %vm3039, 3.4028235e+38, %v2783
        %v3072 = vsel %vm3040, 3.4028235e+38, %v2784
        %v3073 = vsel %vm3041, 3.4028235e+38, %v2785
        %v3074 = vsel %vm3042, 3.4028235e+38, %v2786
        %v3075 = vsel %vm3043, 3.4028235e+38, %v2787
        %v3076 = vsel %vm3044, 3.4028235e+38, %v2788
        %v3077 = vsel %vm3045, 3.4028235e+38, %v2789
        %v3078 = vsel %vm3046, 3.4028235e+38, %v2790
        %v3079 = vsel %vm3047, 3.4028235e+38, %v2791
        %v3080 = vsel %vm3048, 3.4028235e+38, %v2792
        %v3081 = vsel %vm3049, 3.4028235e+38, %v2793
        %v3082 = vsel %vm3050, 3.4028235e+38, %v2794
        %v3083 = vsel %vm3051, 3.4028235e+38, %v2795
        %v3084 = vsel %vm3052, 3.4028235e+38, %v2796
        %v3085 = vsel %vm3053, 3.4028235e+38, %v2797
        %v3086 = vsel %vm3054, 3.4028235e+38, %v2798
        %v3087 = vsel %vm3055, 3.4028235e+38, %v2799
        %v3088 = vsel %vm3056, 3.4028235e+38, %v2800
        %v3089 = vsel %vm3057, 3.4028235e+38, %v2801
        %v3090 = vsel %vm3058, 3.4028235e+38, %v2802
        %v3091 = vsel %vm3059, 3.4028235e+38, %v2803
        %v3092 = vsel %vm3060, 3.4028235e+38, %v2804
        %v3093 = vsel %vm3061, 3.4028235e+38, %v2805
        %v3094 = vsel %vm3062, 3.4028235e+38, %v2806
        %v3095 = vsel %vm3063, 3.4028235e+38, %v2807
        %v3096 = vsel %vm3064, 3.4028235e+38, %v2808
        %v3097 = vsel %vm3065, 3.4028235e+38, %v2809
        %v3098 = vsel %vm3066, 3.4028235e+38, %v2810
        %v3099 = vsel %vm3067, 3.4028235e+38, %v2811
        %v3116 = vand.u32 %v2990, 4294967040
        %v3117 = vand.u32 %v2993, 4294967040
        %v3118 = vand.u32 %v2996, 4294967040
        %v3119 = vand.u32 %v2999, 4294967040
        %v3120 = vand.u32 %v3002, 4294967040
        %v3121 = vand.u32 %v3005, 4294967040
        %v3122 = vand.u32 %v3008, 4294967040
        %v3123 = vand.u32 %v3011, 4294967040
        %v3124 = vand.u32 %v3014, 4294967040
        %v3125 = vand.u32 %v3017, 4294967040
        %v3126 = vand.u32 %v3020, 4294967040
        %v3127 = vand.u32 %v3023, 4294967040
        %v3128 = vand.u32 %v3026, 4294967040
        %v3129 = vand.u32 %v3029, 4294967040
        %v3130 = vand.u32 %v3032, 4294967040
        %v3131 = vand.u32 %v3035, 4294967040
        %v3148 = vrsqrt.pop %v3116
        %v3149 = vmul.f32 %v3116, %v3148
        %vm3150 = vcmp.eq.f32.partialorder %v3116, inf
        %v3151 = vsel %vm3150, %v3116, %v3149
        %vm3152 = vcmp.eq.f32.partialorder %v3116, 0.0
        %v3153 = vand.u32 %v3116, 2147483648
        %v3154 = vsel %vm3152, %v3153, %v3151
        %v3155 = vrsqrt.pop %v3117
        %v3156 = vmul.f32 %v3117, %v3155
        %vm3157 = vcmp.eq.f32.partialorder %v3117, inf
        %v3158 = vsel %vm3157, %v3117, %v3156
        %vm3159 = vcmp.eq.f32.partialorder %v3117, 0.0
        %v3160 = vand.u32 %v3117, 2147483648
        %v3161 = vsel %vm3159, %v3160, %v3158
        %v3162 = vrsqrt.pop %v3118
        %v3163 = vmul.f32 %v3118, %v3162
        %vm3164 = vcmp.eq.f32.partialorder %v3118, inf
        %v3165 = vsel %vm3164, %v3118, %v3163
        %vm3166 = vcmp.eq.f32.partialorder %v3118, 0.0
        %v3167 = vand.u32 %v3118, 2147483648
        %v3168 = vsel %vm3166, %v3167, %v3165
        %v3169 = vrsqrt.pop %v3119
        %v3170 = vmul.f32 %v3119, %v3169
        %vm3171 = vcmp.eq.f32.partialorder %v3119, inf
        %v3172 = vsel %vm3171, %v3119, %v3170
        %vm3173 = vcmp.eq.f32.partialorder %v3119, 0.0
        %v3174 = vand.u32 %v3119, 2147483648
        %v3175 = vsel %vm3173, %v3174, %v3172
        %v3176 = vrsqrt.pop %v3120
        %v3177 = vmul.f32 %v3120, %v3176
        %vm3178 = vcmp.eq.f32.partialorder %v3120, inf
        %v3179 = vsel %vm3178, %v3120, %v3177
        %vm3180 = vcmp.eq.f32.partialorder %v3120, 0.0
        %v3181 = vand.u32 %v3120, 2147483648
        %v3182 = vsel %vm3180, %v3181, %v3179
        %v3183 = vrsqrt.pop %v3121
        %v3184 = vmul.f32 %v3121, %v3183
        %vm3185 = vcmp.eq.f32.partialorder %v3121, inf
        %v3186 = vsel %vm3185, %v3121, %v3184
        %vm3187 = vcmp.eq.f32.partialorder %v3121, 0.0
        %v3188 = vand.u32 %v3121, 2147483648
        %v3189 = vsel %vm3187, %v3188, %v3186
        %v3190 = vrsqrt.pop %v3122
        %v3191 = vmul.f32 %v3122, %v3190
        %vm3192 = vcmp.eq.f32.partialorder %v3122, inf
        %v3193 = vsel %vm3192, %v3122, %v3191
        %vm3194 = vcmp.eq.f32.partialorder %v3122, 0.0
        %v3195 = vand.u32 %v3122, 2147483648
        %v3196 = vsel %vm3194, %v3195, %v3193
        %v3197 = vrsqrt.pop %v3123
        %v3198 = vmul.f32 %v3123, %v3197
        %vm3199 = vcmp.eq.f32.partialorder %v3123, inf
        %v3200 = vsel %vm3199, %v3123, %v3198
        %vm3201 = vcmp.eq.f32.partialorder %v3123, 0.0
        %v3202 = vand.u32 %v3123, 2147483648
        %v3203 = vsel %vm3201, %v3202, %v3200
        %v3204 = vrsqrt.pop %v3124
        %v3205 = vmul.f32 %v3124, %v3204
        %vm3206 = vcmp.eq.f32.partialorder %v3124, inf
        %v3207 = vsel %vm3206, %v3124, %v3205
        %vm3208 = vcmp.eq.f32.partialorder %v3124, 0.0
        %v3209 = vand.u32 %v3124, 2147483648
        %v3210 = vsel %vm3208, %v3209, %v3207
        %v3211 = vrsqrt.pop %v3125
        %v3212 = vmul.f32 %v3125, %v3211
        %vm3213 = vcmp.eq.f32.partialorder %v3125, inf
        %v3214 = vsel %vm3213, %v3125, %v3212
        %vm3215 = vcmp.eq.f32.partialorder %v3125, 0.0
        %v3216 = vand.u32 %v3125, 2147483648
        %v3217 = vsel %vm3215, %v3216, %v3214
        %v3218 = vrsqrt.pop %v3126
        %v3219 = vmul.f32 %v3126, %v3218
        %vm3220 = vcmp.eq.f32.partialorder %v3126, inf
        %v3221 = vsel %vm3220, %v3126, %v3219
        %vm3222 = vcmp.eq.f32.partialorder %v3126, 0.0
        %v3223 = vand.u32 %v3126, 2147483648
        %v3224 = vsel %vm3222, %v3223, %v3221
        %v3225 = vrsqrt.pop %v3127
        %v3226 = vmul.f32 %v3127, %v3225
        %vm3227 = vcmp.eq.f32.partialorder %v3127, inf
        %v3228 = vsel %vm3227, %v3127, %v3226
        %vm3229 = vcmp.eq.f32.partialorder %v3127, 0.0
        %v3230 = vand.u32 %v3127, 2147483648
        %v3231 = vsel %vm3229, %v3230, %v3228
        %v3232 = vrsqrt.pop %v3128
        %v3233 = vmul.f32 %v3128, %v3232
        %vm3234 = vcmp.eq.f32.partialorder %v3128, inf
        %v3235 = vsel %vm3234, %v3128, %v3233
        %vm3236 = vcmp.eq.f32.partialorder %v3128, 0.0
        %v3237 = vand.u32 %v3128, 2147483648
        %v3238 = vsel %vm3236, %v3237, %v3235
        %v3239 = vrsqrt.pop %v3129
        %v3240 = vmul.f32 %v3129, %v3239
        %vm3241 = vcmp.eq.f32.partialorder %v3129, inf
        %v3242 = vsel %vm3241, %v3129, %v3240
        %vm3243 = vcmp.eq.f32.partialorder %v3129, 0.0
        %v3244 = vand.u32 %v3129, 2147483648
        %v3245 = vsel %vm3243, %v3244, %v3242
        %v3246 = vrsqrt.pop %v3130
        %v3247 = vmul.f32 %v3130, %v3246
        %vm3248 = vcmp.eq.f32.partialorder %v3130, inf
        %v3249 = vsel %vm3248, %v3130, %v3247
        %vm3250 = vcmp.eq.f32.partialorder %v3130, 0.0
        %v3251 = vand.u32 %v3130, 2147483648
        %v3252 = vsel %vm3250, %v3251, %v3249
        %v3253 = vrsqrt.pop %v3131
        %v3254 = vmul.f32 %v3131, %v3253
        %vm3255 = vcmp.eq.f32.partialorder %v3131, inf
        %v3256 = vsel %vm3255, %v3131, %v3254
        %vm3257 = vcmp.eq.f32.partialorder %v3131, 0.0
        %v3258 = vand.u32 %v3131, 2147483648
        %v3259 = vsel %vm3257, %v3258, %v3256
        %v3260 = vadd.f32 %v2972, %v3154
        %v3261 = vadd.f32 %v2973, %v3161
        %v3262 = vadd.f32 %v2974, %v3168
        %v3263 = vadd.f32 %v2975, %v3175
        %v3264 = vadd.f32 %v2976, %v3182
        %v3265 = vadd.f32 %v2977, %v3189
        %v3266 = vadd.f32 %v2978, %v3196
        %v3267 = vadd.f32 %v2979, %v3203
        %v3268 = vadd.f32 %v2980, %v3210
        %v3269 = vadd.f32 %v2981, %v3217
        %v3270 = vadd.f32 %v2982, %v3224
        %v3271 = vadd.f32 %v2983, %v3231
        %v3272 = vadd.f32 %v2984, %v3238
        %v3273 = vadd.f32 %v2985, %v3245
        %v3274 = vadd.f32 %v2986, %v3252
        %v3275 = vadd.f32 %v2987, %v3259
        %v3276 = vmin.f32 %v3068, %v3069
        %3277 = vmin.xlane.f32.xlu0 %v3276
        %v3278 = vpop.xlane.xlu0 %3277
        %v3279 = vmin.f32 %v3070, %v3071
        %3280 = vmin.xlane.f32.xlu0 %v3279
        %v3281 = vpop.xlane.xlu0 %3280
        %v3282 = vmin.f32 %v3072, %v3073
        %3283 = vmin.xlane.f32.xlu0 %v3282
        %v3284 = vpop.xlane.xlu0 %3283
        %v3285 = vmin.f32 %v3074, %v3075
        %3286 = vmin.xlane.f32.xlu0 %v3285
        %v3287 = vpop.xlane.xlu0 %3286
        %v3288 = vmin.f32 %v3076, %v3077
        %3289 = vmin.xlane.f32.xlu0 %v3288
        %v3290 = vpop.xlane.xlu0 %3289
        %v3291 = vmin.f32 %v3078, %v3079
        %3292 = vmin.xlane.f32.xlu0 %v3291
        %v3293 = vpop.xlane.xlu0 %3292
        %v3294 = vmin.f32 %v3080, %v3081
        %3295 = vmin.xlane.f32.xlu0 %v3294
        %v3296 = vpop.xlane.xlu0 %3295
        %v3297 = vmin.f32 %v3082, %v3083
        %3298 = vmin.xlane.f32.xlu0 %v3297
        %v3299 = vpop.xlane.xlu0 %3298
        %v3300 = vmin.f32 %v3084, %v3085
        %3301 = vmin.xlane.f32.xlu0 %v3300
        %v3302 = vpop.xlane.xlu0 %3301
        %v3303 = vmin.f32 %v3086, %v3087
        %3304 = vmin.xlane.f32.xlu0 %v3303
        %v3305 = vpop.xlane.xlu0 %3304
        %v3306 = vmin.f32 %v3088, %v3089
        %3307 = vmin.xlane.f32.xlu0 %v3306
        %v3308 = vpop.xlane.xlu0 %3307
        %v3309 = vmin.f32 %v3090, %v3091
        %3310 = vmin.xlane.f32.xlu0 %v3309
        %v3311 = vpop.xlane.xlu0 %3310
        %v3312 = vmin.f32 %v3092, %v3093
        %3313 = vmin.xlane.f32.xlu0 %v3312
        %v3314 = vpop.xlane.xlu0 %3313
        %v3315 = vmin.f32 %v3094, %v3095
        %3316 = vmin.xlane.f32.xlu0 %v3315
        %v3317 = vpop.xlane.xlu0 %3316
        %v3318 = vmin.f32 %v3096, %v3097
        %3319 = vmin.xlane.f32.xlu0 %v3318
        %v3320 = vpop.xlane.xlu0 %3319
        %v3321 = vmin.f32 %v3098, %v3099
        %3322 = vmin.xlane.f32.xlu0 %v3321
        %v3323 = vpop.xlane.xlu0 %3322
        %vm3324 = vcmp.eq.f32.partialorder %v3068, %v3278
        %vm3325 = vcmp.eq.f32.partialorder %v3069, %v3278
        %vm3326 = vcmp.eq.f32.partialorder %v3070, %v3281
        %vm3327 = vcmp.eq.f32.partialorder %v3071, %v3281
        %vm3328 = vcmp.eq.f32.partialorder %v3072, %v3284
        %vm3329 = vcmp.eq.f32.partialorder %v3073, %v3284
        %vm3330 = vcmp.eq.f32.partialorder %v3074, %v3287
        %vm3331 = vcmp.eq.f32.partialorder %v3075, %v3287
        %vm3332 = vcmp.eq.f32.partialorder %v3076, %v3290
        %vm3333 = vcmp.eq.f32.partialorder %v3077, %v3290
        %vm3334 = vcmp.eq.f32.partialorder %v3078, %v3293
        %vm3335 = vcmp.eq.f32.partialorder %v3079, %v3293
        %vm3336 = vcmp.eq.f32.partialorder %v3080, %v3296
        %vm3337 = vcmp.eq.f32.partialorder %v3081, %v3296
        %vm3338 = vcmp.eq.f32.partialorder %v3082, %v3299
        %vm3339 = vcmp.eq.f32.partialorder %v3083, %v3299
        %vm3340 = vcmp.eq.f32.partialorder %v3084, %v3302
        %vm3341 = vcmp.eq.f32.partialorder %v3085, %v3302
        %vm3342 = vcmp.eq.f32.partialorder %v3086, %v3305
        %vm3343 = vcmp.eq.f32.partialorder %v3087, %v3305
        %vm3344 = vcmp.eq.f32.partialorder %v3088, %v3308
        %vm3345 = vcmp.eq.f32.partialorder %v3089, %v3308
        %vm3346 = vcmp.eq.f32.partialorder %v3090, %v3311
        %vm3347 = vcmp.eq.f32.partialorder %v3091, %v3311
        %vm3348 = vcmp.eq.f32.partialorder %v3092, %v3314
        %vm3349 = vcmp.eq.f32.partialorder %v3093, %v3314
        %vm3350 = vcmp.eq.f32.partialorder %v3094, %v3317
        %vm3351 = vcmp.eq.f32.partialorder %v3095, %v3317
        %vm3352 = vcmp.eq.f32.partialorder %v3096, %v3320
        %vm3353 = vcmp.eq.f32.partialorder %v3097, %v3320
        %vm3354 = vcmp.eq.f32.partialorder %v3098, %v3323
        %vm3355 = vcmp.eq.f32.partialorder %v3099, %v3323
        %v3356 = vsel %vm3324, 3.4028235e+38, %v3068
        %v3357 = vsel %vm3325, 3.4028235e+38, %v3069
        %v3358 = vsel %vm3326, 3.4028235e+38, %v3070
        %v3359 = vsel %vm3327, 3.4028235e+38, %v3071
        %v3360 = vsel %vm3328, 3.4028235e+38, %v3072
        %v3361 = vsel %vm3329, 3.4028235e+38, %v3073
        %v3362 = vsel %vm3330, 3.4028235e+38, %v3074
        %v3363 = vsel %vm3331, 3.4028235e+38, %v3075
        %v3364 = vsel %vm3332, 3.4028235e+38, %v3076
        %v3365 = vsel %vm3333, 3.4028235e+38, %v3077
        %v3366 = vsel %vm3334, 3.4028235e+38, %v3078
        %v3367 = vsel %vm3335, 3.4028235e+38, %v3079
        %v3368 = vsel %vm3336, 3.4028235e+38, %v3080
        %v3369 = vsel %vm3337, 3.4028235e+38, %v3081
        %v3370 = vsel %vm3338, 3.4028235e+38, %v3082
        %v3371 = vsel %vm3339, 3.4028235e+38, %v3083
        %v3372 = vsel %vm3340, 3.4028235e+38, %v3084
        %v3373 = vsel %vm3341, 3.4028235e+38, %v3085
        %v3374 = vsel %vm3342, 3.4028235e+38, %v3086
        %v3375 = vsel %vm3343, 3.4028235e+38, %v3087
        %v3376 = vsel %vm3344, 3.4028235e+38, %v3088
        %v3377 = vsel %vm3345, 3.4028235e+38, %v3089
        %v3378 = vsel %vm3346, 3.4028235e+38, %v3090
        %v3379 = vsel %vm3347, 3.4028235e+38, %v3091
        %v3380 = vsel %vm3348, 3.4028235e+38, %v3092
        %v3381 = vsel %vm3349, 3.4028235e+38, %v3093
        %v3382 = vsel %vm3350, 3.4028235e+38, %v3094
        %v3383 = vsel %vm3351, 3.4028235e+38, %v3095
        %v3384 = vsel %vm3352, 3.4028235e+38, %v3096
        %v3385 = vsel %vm3353, 3.4028235e+38, %v3097
        %v3386 = vsel %vm3354, 3.4028235e+38, %v3098
        %v3387 = vsel %vm3355, 3.4028235e+38, %v3099
        %v3404 = vand.u32 %v3278, 4294967040
        %v3405 = vand.u32 %v3281, 4294967040
        %v3406 = vand.u32 %v3284, 4294967040
        %v3407 = vand.u32 %v3287, 4294967040
        %v3408 = vand.u32 %v3290, 4294967040
        %v3409 = vand.u32 %v3293, 4294967040
        %v3410 = vand.u32 %v3296, 4294967040
        %v3411 = vand.u32 %v3299, 4294967040
        %v3412 = vand.u32 %v3302, 4294967040
        %v3413 = vand.u32 %v3305, 4294967040
        %v3414 = vand.u32 %v3308, 4294967040
        %v3415 = vand.u32 %v3311, 4294967040
        %v3416 = vand.u32 %v3314, 4294967040
        %v3417 = vand.u32 %v3317, 4294967040
        %v3418 = vand.u32 %v3320, 4294967040
        %v3419 = vand.u32 %v3323, 4294967040
        %v3436 = vrsqrt.pop %v3404
        %v3437 = vmul.f32 %v3404, %v3436
        %vm3438 = vcmp.eq.f32.partialorder %v3404, inf
        %v3439 = vsel %vm3438, %v3404, %v3437
        %vm3440 = vcmp.eq.f32.partialorder %v3404, 0.0
        %v3441 = vand.u32 %v3404, 2147483648
        %v3442 = vsel %vm3440, %v3441, %v3439
        %v3443 = vrsqrt.pop %v3405
        %v3444 = vmul.f32 %v3405, %v3443
        %vm3445 = vcmp.eq.f32.partialorder %v3405, inf
        %v3446 = vsel %vm3445, %v3405, %v3444
        %vm3447 = vcmp.eq.f32.partialorder %v3405, 0.0
        %v3448 = vand.u32 %v3405, 2147483648
        %v3449 = vsel %vm3447, %v3448, %v3446
        %v3450 = vrsqrt.pop %v3406
        %v3451 = vmul.f32 %v3406, %v3450
        %vm3452 = vcmp.eq.f32.partialorder %v3406, inf
        %v3453 = vsel %vm3452, %v3406, %v3451
        %vm3454 = vcmp.eq.f32.partialorder %v3406, 0.0
        %v3455 = vand.u32 %v3406, 2147483648
        %v3456 = vsel %vm3454, %v3455, %v3453
        %v3457 = vrsqrt.pop %v3407
        %v3458 = vmul.f32 %v3407, %v3457
        %vm3459 = vcmp.eq.f32.partialorder %v3407, inf
        %v3460 = vsel %vm3459, %v3407, %v3458
        %vm3461 = vcmp.eq.f32.partialorder %v3407, 0.0
        %v3462 = vand.u32 %v3407, 2147483648
        %v3463 = vsel %vm3461, %v3462, %v3460
        %v3464 = vrsqrt.pop %v3408
        %v3465 = vmul.f32 %v3408, %v3464
        %vm3466 = vcmp.eq.f32.partialorder %v3408, inf
        %v3467 = vsel %vm3466, %v3408, %v3465
        %vm3468 = vcmp.eq.f32.partialorder %v3408, 0.0
        %v3469 = vand.u32 %v3408, 2147483648
        %v3470 = vsel %vm3468, %v3469, %v3467
        %v3471 = vrsqrt.pop %v3409
        %v3472 = vmul.f32 %v3409, %v3471
        %vm3473 = vcmp.eq.f32.partialorder %v3409, inf
        %v3474 = vsel %vm3473, %v3409, %v3472
        %vm3475 = vcmp.eq.f32.partialorder %v3409, 0.0
        %v3476 = vand.u32 %v3409, 2147483648
        %v3477 = vsel %vm3475, %v3476, %v3474
        %v3478 = vrsqrt.pop %v3410
        %v3479 = vmul.f32 %v3410, %v3478
        %vm3480 = vcmp.eq.f32.partialorder %v3410, inf
        %v3481 = vsel %vm3480, %v3410, %v3479
        %vm3482 = vcmp.eq.f32.partialorder %v3410, 0.0
        %v3483 = vand.u32 %v3410, 2147483648
        %v3484 = vsel %vm3482, %v3483, %v3481
        %v3485 = vrsqrt.pop %v3411
        %v3486 = vmul.f32 %v3411, %v3485
        %vm3487 = vcmp.eq.f32.partialorder %v3411, inf
        %v3488 = vsel %vm3487, %v3411, %v3486
        %vm3489 = vcmp.eq.f32.partialorder %v3411, 0.0
        %v3490 = vand.u32 %v3411, 2147483648
        %v3491 = vsel %vm3489, %v3490, %v3488
        %v3492 = vrsqrt.pop %v3412
        %v3493 = vmul.f32 %v3412, %v3492
        %vm3494 = vcmp.eq.f32.partialorder %v3412, inf
        %v3495 = vsel %vm3494, %v3412, %v3493
        %vm3496 = vcmp.eq.f32.partialorder %v3412, 0.0
        %v3497 = vand.u32 %v3412, 2147483648
        %v3498 = vsel %vm3496, %v3497, %v3495
        %v3499 = vrsqrt.pop %v3413
        %v3500 = vmul.f32 %v3413, %v3499
        %vm3501 = vcmp.eq.f32.partialorder %v3413, inf
        %v3502 = vsel %vm3501, %v3413, %v3500
        %vm3503 = vcmp.eq.f32.partialorder %v3413, 0.0
        %v3504 = vand.u32 %v3413, 2147483648
        %v3505 = vsel %vm3503, %v3504, %v3502
        %v3506 = vrsqrt.pop %v3414
        %v3507 = vmul.f32 %v3414, %v3506
        %vm3508 = vcmp.eq.f32.partialorder %v3414, inf
        %v3509 = vsel %vm3508, %v3414, %v3507
        %vm3510 = vcmp.eq.f32.partialorder %v3414, 0.0
        %v3511 = vand.u32 %v3414, 2147483648
        %v3512 = vsel %vm3510, %v3511, %v3509
        %v3513 = vrsqrt.pop %v3415
        %v3514 = vmul.f32 %v3415, %v3513
        %vm3515 = vcmp.eq.f32.partialorder %v3415, inf
        %v3516 = vsel %vm3515, %v3415, %v3514
        %vm3517 = vcmp.eq.f32.partialorder %v3415, 0.0
        %v3518 = vand.u32 %v3415, 2147483648
        %v3519 = vsel %vm3517, %v3518, %v3516
        %v3520 = vrsqrt.pop %v3416
        %v3521 = vmul.f32 %v3416, %v3520
        %vm3522 = vcmp.eq.f32.partialorder %v3416, inf
        %v3523 = vsel %vm3522, %v3416, %v3521
        %vm3524 = vcmp.eq.f32.partialorder %v3416, 0.0
        %v3525 = vand.u32 %v3416, 2147483648
        %v3526 = vsel %vm3524, %v3525, %v3523
        %v3527 = vrsqrt.pop %v3417
        %v3528 = vmul.f32 %v3417, %v3527
        %vm3529 = vcmp.eq.f32.partialorder %v3417, inf
        %v3530 = vsel %vm3529, %v3417, %v3528
        %vm3531 = vcmp.eq.f32.partialorder %v3417, 0.0
        %v3532 = vand.u32 %v3417, 2147483648
        %v3533 = vsel %vm3531, %v3532, %v3530
        %v3534 = vrsqrt.pop %v3418
        %v3535 = vmul.f32 %v3418, %v3534
        %vm3536 = vcmp.eq.f32.partialorder %v3418, inf
        %v3537 = vsel %vm3536, %v3418, %v3535
        %vm3538 = vcmp.eq.f32.partialorder %v3418, 0.0
        %v3539 = vand.u32 %v3418, 2147483648
        %v3540 = vsel %vm3538, %v3539, %v3537
        %v3541 = vrsqrt.pop %v3419
        %v3542 = vmul.f32 %v3419, %v3541
        %vm3543 = vcmp.eq.f32.partialorder %v3419, inf
        %v3544 = vsel %vm3543, %v3419, %v3542
        %vm3545 = vcmp.eq.f32.partialorder %v3419, 0.0
        %v3546 = vand.u32 %v3419, 2147483648
        %v3547 = vsel %vm3545, %v3546, %v3544
        %v3548 = vadd.f32 %v3260, %v3442
        %v3549 = vadd.f32 %v3261, %v3449
        %v3550 = vadd.f32 %v3262, %v3456
        %v3551 = vadd.f32 %v3263, %v3463
        %v3552 = vadd.f32 %v3264, %v3470
        %v3553 = vadd.f32 %v3265, %v3477
        %v3554 = vadd.f32 %v3266, %v3484
        %v3555 = vadd.f32 %v3267, %v3491
        %v3556 = vadd.f32 %v3268, %v3498
        %v3557 = vadd.f32 %v3269, %v3505
        %v3558 = vadd.f32 %v3270, %v3512
        %v3559 = vadd.f32 %v3271, %v3519
        %v3560 = vadd.f32 %v3272, %v3526
        %v3561 = vadd.f32 %v3273, %v3533
        %v3562 = vadd.f32 %v3274, %v3540
        %v3563 = vadd.f32 %v3275, %v3547
        %v3564 = vmin.f32 %v3356, %v3357
        %3565 = vmin.xlane.f32.xlu0 %v3564
        %v3566 = vpop.xlane.xlu0 %3565
        %v3567 = vmin.f32 %v3358, %v3359
        %3568 = vmin.xlane.f32.xlu0 %v3567
        %v3569 = vpop.xlane.xlu0 %3568
        %v3570 = vmin.f32 %v3360, %v3361
        %3571 = vmin.xlane.f32.xlu0 %v3570
        %v3572 = vpop.xlane.xlu0 %3571
        %v3573 = vmin.f32 %v3362, %v3363
        %3574 = vmin.xlane.f32.xlu0 %v3573
        %v3575 = vpop.xlane.xlu0 %3574
        %v3576 = vmin.f32 %v3364, %v3365
        %3577 = vmin.xlane.f32.xlu0 %v3576
        %v3578 = vpop.xlane.xlu0 %3577
        %v3579 = vmin.f32 %v3366, %v3367
        %3580 = vmin.xlane.f32.xlu0 %v3579
        %v3581 = vpop.xlane.xlu0 %3580
        %v3582 = vmin.f32 %v3368, %v3369
        %3583 = vmin.xlane.f32.xlu0 %v3582
        %v3584 = vpop.xlane.xlu0 %3583
        %v3585 = vmin.f32 %v3370, %v3371
        %3586 = vmin.xlane.f32.xlu0 %v3585
        %v3587 = vpop.xlane.xlu0 %3586
        %v3588 = vmin.f32 %v3372, %v3373
        %3589 = vmin.xlane.f32.xlu0 %v3588
        %v3590 = vpop.xlane.xlu0 %3589
        %v3591 = vmin.f32 %v3374, %v3375
        %3592 = vmin.xlane.f32.xlu0 %v3591
        %v3593 = vpop.xlane.xlu0 %3592
        %v3594 = vmin.f32 %v3376, %v3377
        %3595 = vmin.xlane.f32.xlu0 %v3594
        %v3596 = vpop.xlane.xlu0 %3595
        %v3597 = vmin.f32 %v3378, %v3379
        %3598 = vmin.xlane.f32.xlu0 %v3597
        %v3599 = vpop.xlane.xlu0 %3598
        %v3600 = vmin.f32 %v3380, %v3381
        %3601 = vmin.xlane.f32.xlu0 %v3600
        %v3602 = vpop.xlane.xlu0 %3601
        %v3603 = vmin.f32 %v3382, %v3383
        %3604 = vmin.xlane.f32.xlu0 %v3603
        %v3605 = vpop.xlane.xlu0 %3604
        %v3606 = vmin.f32 %v3384, %v3385
        %3607 = vmin.xlane.f32.xlu0 %v3606
        %v3608 = vpop.xlane.xlu0 %3607
        %v3609 = vmin.f32 %v3386, %v3387
        %3610 = vmin.xlane.f32.xlu0 %v3609
        %v3611 = vpop.xlane.xlu0 %3610
        %v3628 = vand.u32 %v3566, 4294967040
        %v3629 = vand.u32 %v3569, 4294967040
        %v3630 = vand.u32 %v3572, 4294967040
        %v3631 = vand.u32 %v3575, 4294967040
        %v3632 = vand.u32 %v3578, 4294967040
        %v3633 = vand.u32 %v3581, 4294967040
        %v3634 = vand.u32 %v3584, 4294967040
        %v3635 = vand.u32 %v3587, 4294967040
        %v3636 = vand.u32 %v3590, 4294967040
        %v3637 = vand.u32 %v3593, 4294967040
        %v3638 = vand.u32 %v3596, 4294967040
        %v3639 = vand.u32 %v3599, 4294967040
        %v3640 = vand.u32 %v3602, 4294967040
        %v3641 = vand.u32 %v3605, 4294967040
        %v3642 = vand.u32 %v3608, 4294967040
        %v3643 = vand.u32 %v3611, 4294967040
        %v3660 = vrsqrt.pop %v3628
        %v3661 = vmul.f32 %v3628, %v3660
        %vm3662 = vcmp.eq.f32.partialorder %v3628, inf
        %v3663 = vsel %vm3662, %v3628, %v3661
        %vm3664 = vcmp.eq.f32.partialorder %v3628, 0.0
        %v3665 = vand.u32 %v3628, 2147483648
        %v3666 = vsel %vm3664, %v3665, %v3663
        %v3667 = vrsqrt.pop %v3629
        %v3668 = vmul.f32 %v3629, %v3667
        %vm3669 = vcmp.eq.f32.partialorder %v3629, inf
        %v3670 = vsel %vm3669, %v3629, %v3668
        %vm3671 = vcmp.eq.f32.partialorder %v3629, 0.0
        %v3672 = vand.u32 %v3629, 2147483648
        %v3673 = vsel %vm3671, %v3672, %v3670
        %v3674 = vrsqrt.pop %v3630
        %v3675 = vmul.f32 %v3630, %v3674
        %vm3676 = vcmp.eq.f32.partialorder %v3630, inf
        %v3677 = vsel %vm3676, %v3630, %v3675
        %vm3678 = vcmp.eq.f32.partialorder %v3630, 0.0
        %v3679 = vand.u32 %v3630, 2147483648
        %v3680 = vsel %vm3678, %v3679, %v3677
        %v3681 = vrsqrt.pop %v3631
        %v3682 = vmul.f32 %v3631, %v3681
        %vm3683 = vcmp.eq.f32.partialorder %v3631, inf
        %v3684 = vsel %vm3683, %v3631, %v3682
        %vm3685 = vcmp.eq.f32.partialorder %v3631, 0.0
        %v3686 = vand.u32 %v3631, 2147483648
        %v3687 = vsel %vm3685, %v3686, %v3684
        %v3688 = vrsqrt.pop %v3632
        %v3689 = vmul.f32 %v3632, %v3688
        %vm3690 = vcmp.eq.f32.partialorder %v3632, inf
        %v3691 = vsel %vm3690, %v3632, %v3689
        %vm3692 = vcmp.eq.f32.partialorder %v3632, 0.0
        %v3693 = vand.u32 %v3632, 2147483648
        %v3694 = vsel %vm3692, %v3693, %v3691
        %v3695 = vrsqrt.pop %v3633
        %v3696 = vmul.f32 %v3633, %v3695
        %vm3697 = vcmp.eq.f32.partialorder %v3633, inf
        %v3698 = vsel %vm3697, %v3633, %v3696
        %vm3699 = vcmp.eq.f32.partialorder %v3633, 0.0
        %v3700 = vand.u32 %v3633, 2147483648
        %v3701 = vsel %vm3699, %v3700, %v3698
        %v3702 = vrsqrt.pop %v3634
        %v3703 = vmul.f32 %v3634, %v3702
        %vm3704 = vcmp.eq.f32.partialorder %v3634, inf
        %v3705 = vsel %vm3704, %v3634, %v3703
        %vm3706 = vcmp.eq.f32.partialorder %v3634, 0.0
        %v3707 = vand.u32 %v3634, 2147483648
        %v3708 = vsel %vm3706, %v3707, %v3705
        %v3709 = vrsqrt.pop %v3635
        %v3710 = vmul.f32 %v3635, %v3709
        %vm3711 = vcmp.eq.f32.partialorder %v3635, inf
        %v3712 = vsel %vm3711, %v3635, %v3710
        %vm3713 = vcmp.eq.f32.partialorder %v3635, 0.0
        %v3714 = vand.u32 %v3635, 2147483648
        %v3715 = vsel %vm3713, %v3714, %v3712
        %v3716 = vrsqrt.pop %v3636
        %v3717 = vmul.f32 %v3636, %v3716
        %vm3718 = vcmp.eq.f32.partialorder %v3636, inf
        %v3719 = vsel %vm3718, %v3636, %v3717
        %vm3720 = vcmp.eq.f32.partialorder %v3636, 0.0
        %v3721 = vand.u32 %v3636, 2147483648
        %v3722 = vsel %vm3720, %v3721, %v3719
        %v3723 = vrsqrt.pop %v3637
        %v3724 = vmul.f32 %v3637, %v3723
        %vm3725 = vcmp.eq.f32.partialorder %v3637, inf
        %v3726 = vsel %vm3725, %v3637, %v3724
        %vm3727 = vcmp.eq.f32.partialorder %v3637, 0.0
        %v3728 = vand.u32 %v3637, 2147483648
        %v3729 = vsel %vm3727, %v3728, %v3726
        %v3730 = vrsqrt.pop %v3638
        %v3731 = vmul.f32 %v3638, %v3730
        %vm3732 = vcmp.eq.f32.partialorder %v3638, inf
        %v3733 = vsel %vm3732, %v3638, %v3731
        %vm3734 = vcmp.eq.f32.partialorder %v3638, 0.0
        %v3735 = vand.u32 %v3638, 2147483648
        %v3736 = vsel %vm3734, %v3735, %v3733
        %v3737 = vrsqrt.pop %v3639
        %v3738 = vmul.f32 %v3639, %v3737
        %vm3739 = vcmp.eq.f32.partialorder %v3639, inf
        %v3740 = vsel %vm3739, %v3639, %v3738
        %vm3741 = vcmp.eq.f32.partialorder %v3639, 0.0
        %v3742 = vand.u32 %v3639, 2147483648
        %v3743 = vsel %vm3741, %v3742, %v3740
        %v3744 = vrsqrt.pop %v3640
        %v3745 = vmul.f32 %v3640, %v3744
        %vm3746 = vcmp.eq.f32.partialorder %v3640, inf
        %v3747 = vsel %vm3746, %v3640, %v3745
        %vm3748 = vcmp.eq.f32.partialorder %v3640, 0.0
        %v3749 = vand.u32 %v3640, 2147483648
        %v3750 = vsel %vm3748, %v3749, %v3747
        %v3751 = vrsqrt.pop %v3641
        %v3752 = vmul.f32 %v3641, %v3751
        %vm3753 = vcmp.eq.f32.partialorder %v3641, inf
        %v3754 = vsel %vm3753, %v3641, %v3752
        %vm3755 = vcmp.eq.f32.partialorder %v3641, 0.0
        %v3756 = vand.u32 %v3641, 2147483648
        %v3757 = vsel %vm3755, %v3756, %v3754
        %v3758 = vrsqrt.pop %v3642
        %v3759 = vmul.f32 %v3642, %v3758
        %vm3760 = vcmp.eq.f32.partialorder %v3642, inf
        %v3761 = vsel %vm3760, %v3642, %v3759
        %vm3762 = vcmp.eq.f32.partialorder %v3642, 0.0
        %v3763 = vand.u32 %v3642, 2147483648
        %v3764 = vsel %vm3762, %v3763, %v3761
        %v3765 = vrsqrt.pop %v3643
        %v3766 = vmul.f32 %v3643, %v3765
        %vm3767 = vcmp.eq.f32.partialorder %v3643, inf
        %v3768 = vsel %vm3767, %v3643, %v3766
        %vm3769 = vcmp.eq.f32.partialorder %v3643, 0.0
        %v3770 = vand.u32 %v3643, 2147483648
        %v3771 = vsel %vm3769, %v3770, %v3768
        %v3772 = vadd.f32 %v3548, %v3666
        %v3773 = vadd.f32 %v3549, %v3673
        %v3774 = vadd.f32 %v3550, %v3680
        %v3775 = vadd.f32 %v3551, %v3687
        %v3776 = vadd.f32 %v3552, %v3694
        %v3777 = vadd.f32 %v3553, %v3701
        %v3778 = vadd.f32 %v3554, %v3708
        %v3779 = vadd.f32 %v3555, %v3715
        %v3780 = vadd.f32 %v3556, %v3722
        %v3781 = vadd.f32 %v3557, %v3729
        %v3782 = vadd.f32 %v3558, %v3736
        %v3783 = vadd.f32 %v3559, %v3743
        %v3784 = vadd.f32 %v3560, %v3750
        %v3785 = vadd.f32 %v3561, %v3757
        %v3786 = vadd.f32 %v3562, %v3764
        %v3787 = vadd.f32 %v3563, %v3771
        %v3788 = vmul.f32 %v3772, 0.1
        %v3789 = vmul.f32 %v3773, 0.1
        %v3790 = vmul.f32 %v3774, 0.1
        %v3791 = vmul.f32 %v3775, 0.1
        %v3792 = vmul.f32 %v3776, 0.1
        %v3793 = vmul.f32 %v3777, 0.1
        %v3794 = vmul.f32 %v3778, 0.1
        %v3795 = vmul.f32 %v3779, 0.1
        %v3796 = vmul.f32 %v3780, 0.1
        %v3797 = vmul.f32 %v3781, 0.1
        %v3798 = vmul.f32 %v3782, 0.1
        %v3799 = vmul.f32 %v3783, 0.1
        %v3800 = vmul.f32 %v3784, 0.1
        %v3801 = vmul.f32 %v3785, 0.1
        %v3802 = vmul.f32 %v3786, 0.1
        %v3803 = vmul.f32 %v3787, 0.1
        %v3804 = vadd.f32 %v3788, 1.0
        %v3805 = vadd.f32 %v3789, 1.0
        %v3806 = vadd.f32 %v3790, 1.0
        %v3807 = vadd.f32 %v3791, 1.0
        %v3808 = vadd.f32 %v3792, 1.0
        %v3809 = vadd.f32 %v3793, 1.0
        %v3810 = vadd.f32 %v3794, 1.0
        %v3811 = vadd.f32 %v3795, 1.0
        %v3812 = vadd.f32 %v3796, 1.0
        %v3813 = vadd.f32 %v3797, 1.0
        %v3814 = vadd.f32 %v3798, 1.0
        %v3815 = vadd.f32 %v3799, 1.0
        %v3816 = vadd.f32 %v3800, 1.0
        %v3817 = vadd.f32 %v3801, 1.0
        %v3818 = vadd.f32 %v3802, 1.0
        %v3819 = vadd.f32 %v3803, 1.0
        %v3820 = vlog2.pop %v3804
        %v3821 = vmul.f32 %v3820, 0.6931472
        %v3822 = vlog2.pop %v3805
        %v3823 = vmul.f32 %v3822, 0.6931472
        %v3824 = vlog2.pop %v3806
        %v3825 = vmul.f32 %v3824, 0.6931472
        %v3826 = vlog2.pop %v3807
        %v3827 = vmul.f32 %v3826, 0.6931472
        %v3828 = vlog2.pop %v3808
        %v3829 = vmul.f32 %v3828, 0.6931472
        %v3830 = vlog2.pop %v3809
        %v3831 = vmul.f32 %v3830, 0.6931472
        %v3832 = vlog2.pop %v3810
        %v3833 = vmul.f32 %v3832, 0.6931472
        %v3834 = vlog2.pop %v3811
        %v3835 = vmul.f32 %v3834, 0.6931472
        %v3836 = vlog2.pop %v3812
        %v3837 = vmul.f32 %v3836, 0.6931472
        %v3838 = vlog2.pop %v3813
        %v3839 = vmul.f32 %v3838, 0.6931472
        %v3840 = vlog2.pop %v3814
        %v3841 = vmul.f32 %v3840, 0.6931472
        %v3842 = vlog2.pop %v3815
        %v3843 = vmul.f32 %v3842, 0.6931472
        %v3844 = vlog2.pop %v3816
        %v3845 = vmul.f32 %v3844, 0.6931472
        %v3846 = vlog2.pop %v3817
        %v3847 = vmul.f32 %v3846, 0.6931472
        %v3848 = vlog2.pop %v3818
        %v3849 = vmul.f32 %v3848, 0.6931472
        %v3850 = vlog2.pop %v3819
        %v3851 = vmul.f32 %v3850, 0.6931472
        %vm3852 = vcmask 7168
        %3853 = vst.msk [vmem:[%s149] sm:$0xff] %vm3852, %v3821
        %3854 = vst.msk [vmem:[%s149 + $0x8] sm:$0xff] %vm3852, %v3823
        %3855 = vst.msk [vmem:[%s149 + $0x10] sm:$0xff] %vm3852, %v3825
        %3856 = vst.msk [vmem:[%s149 + $0x18] sm:$0xff] %vm3852, %v3827
        %3857 = vst.msk [vmem:[%s149 + $0x20] sm:$0xff] %vm3852, %v3829
        %3858 = vst.msk [vmem:[%s149 + $0x28] sm:$0xff] %vm3852, %v3831
        %3859 = vst.msk [vmem:[%s149 + $0x30] sm:$0xff] %vm3852, %v3833
        %3860 = vst.msk [vmem:[%s149 + $0x38] sm:$0xff] %vm3852, %v3835
        %3861 = vst.msk [vmem:[%s149 + $0x40] sm:$0xff] %vm3852, %v3837
        %3862 = vst.msk [vmem:[%s149 + $0x48] sm:$0xff] %vm3852, %v3839
        %3863 = vst.msk [vmem:[%s149 + $0x50] sm:$0xff] %vm3852, %v3841
        %3864 = vst.msk [vmem:[%s149 + $0x58] sm:$0xff] %vm3852, %v3843
        %3865 = vst.msk [vmem:[%s149 + $0x60] sm:$0xff] %vm3852, %v3845
        %3866 = vst.msk [vmem:[%s149 + $0x68] sm:$0xff] %vm3852, %v3847
        %3867 = vst.msk [vmem:[%s149 + $0x70] sm:$0xff] %vm3852, %v3849
        %3868 = vst.msk [vmem:[%s149 + $0x78] sm:$0xff] %vm3852, %v3851
        %s3869 = sand.u32 %s68, 1
        %s3870 = scalar_lea.sflag [#allocation4], %s3869
        %s3871 = sand.u32 %s68, 1
        %s3872 = smul.addr %s3871, 128
        %s3873 = scalar_lea.vmem [#allocation7], %s3872
        // Predicated region
        $region37: #{tpu_custom_call.1} parent=27 // pred_check
          %p3874 = pneg %p78
        $region38: #{tpu_custom_call.1} parent=27 // pred_check_branch
          %3876 = sbr.rel (%p3874) target = $region40
        $region39: #{tpu_custom_call.1} parent=27 // pred_region
          %s3877 = smul.u32 16, %s18
          %s3879 = ssub.s32 2048, 2048
          %3880 = vsyncadd %s3870, %s3879
          %s3881 = smul.addr %s3877, 128
          %s3882 = scalar_lea.hbm %s2, %s3881
          %s3883 = sshll.u32 %s3873, 4
          %s3884 = int_to_ptr.vmem [resolvable:$true] %s3883
          %3889 = dma.vmem_to_hbm [thread:$0]  %s3884, 2048, %s3882, %s3870, 128, 128, 8
        $region40: #{tpu_custom_call.1} parent=27 // pred_fallthru
          _
      $region28: #{tpu_custom_call.1} parent=5 // pred_fallthru
        _
      %p3890 = scmp.le.s32.totalorder 2, %s13
      // Predicated region
      $region41: #{tpu_custom_call.1} parent=5 // pred_check
        %p3891 = pneg %p3890
      $region42: #{tpu_custom_call.1} parent=5 // pred_check_branch
        %3893 = sbr.rel (%p3891) target = $region44
      $region43: #{tpu_custom_call.1} parent=5 // pred_region
        %s3894 = ssub.s32 %s13, 2
        // Predicated region
        $region45: #{tpu_custom_call.1} parent=43 // pred_check
          %p3895 = pneg %p84
        $region46: #{tpu_custom_call.1} parent=43 // pred_check_branch
          %3897 = sbr.rel (%p3895) target = $region48
        $region47: #{tpu_custom_call.1} parent=43 // pred_region
          %s3898 = sand.u32 %s69, 1
          %s3899 = scalar_lea.sflag [#allocation4], %s3898
          %s3900 = sand.u32 %s69, 1
          %s3901 = smul.addr %s3900, 128
          %s3902 = scalar_lea.vmem [#allocation7], %s3901
          %3903 = dma.done %s3899, 2048
        $region48: #{tpu_custom_call.1} parent=43 // pred_fallthru
          _
      $region44: #{tpu_custom_call.1} parent=5 // pred_fallthru
        _
    $region6: #{tpu_custom_call.1} parent=1 // loop_footer
      %s17 = sadd.s32 1, %s13
    $region7: #{tpu_custom_call.1} parent=1 // loop_footer_branch
      %12 = sbr.rel target = $region3
    $region8: #{tpu_custom_call.1} parent=1 // loop_exit
      _
    %3904 = vsyncpa [#allocation3], 1
    %s3905 = scalar_lea.sflag [#allocation3], 1
    %3906 = vsyncpa %s3905, 1
    %3907 = vsyncpa [#allocation6], 1
    %3908 = vsyncpa [#allocation4], 1
    %s3909 = scalar_lea.sflag [#allocation4], 1
    %3910 = vsyncpa %s3909, 1

</llo_original>
